<compile_context>
chip_gen: v6e
topology: v6e:2x2x1
jax: 0.10.0
libtpu: 0.0.40
codegen_flags: <defaults>
</compile_context>

<pallas_src>
import functools
import numpy as np

import jax
import jax.numpy as jnp
from jax.experimental import pallas as pl
from jax.experimental.pallas import tpu as pltpu


# Leave headroom below v7x's 64 MiB physical VMEM; well under v5e/v6e's 128 MiB.
_VMEM_LIMIT_BYTES = 48 * 1024 * 1024


def _cparams(dimension_semantics):
    return pltpu.CompilerParams(dimension_semantics=dimension_semantics,
                                vmem_limit_bytes=_VMEM_LIMIT_BYTES)


def _pick_tile(dim, target, align):
    """Largest multiple-of-`align` divisor of `dim` that is <= target, else `dim`.

    Tiles either divide the dimension exactly (keeping (8,128) alignment) or
    fall back to the full extent, which is always a legal BlockSpec block.
    """
    if dim <= target:
        return dim
    t = (target // align) * align
    while t >= align:
        if dim % t == 0:
            return t
        t -= align
    return dim


# ----------------------------------------------------------------------------
# Tiled matmul kernels (with / without bias)
# ----------------------------------------------------------------------------

def _matmul_bias_kernel(x_ref, w_ref, b_ref, o_ref, acc_ref):
    @pl.when(pl.program_id(2) == 0)
    def _init():
        acc_ref[...] = jnp.zeros_like(acc_ref)

    acc_ref[...] += jnp.dot(x_ref[...].astype(jnp.bfloat16),
                            w_ref[...].astype(jnp.bfloat16),
                            preferred_element_type=jnp.float32)

    @pl.when(pl.program_id(2) == pl.num_programs(2) - 1)
    def _done():
        o_ref[...] = acc_ref[...] + b_ref[...]


def _matmul_kernel(x_ref, w_ref, o_ref, acc_ref):
    @pl.when(pl.program_id(2) == 0)
    def _init():
        acc_ref[...] = jnp.zeros_like(acc_ref)

    acc_ref[...] += jnp.dot(x_ref[...].astype(jnp.bfloat16),
                            w_ref[...].astype(jnp.bfloat16),
                            preferred_element_type=jnp.float32)

    @pl.when(pl.program_id(2) == pl.num_programs(2) - 1)
    def _done():
        o_ref[...] = acc_ref[...]


def linear_pallas(x2d, w, b=None, *, tm_target=256, tn_target=512, tk_target=512):
    """y = x @ w (+ b), tiled over (M, N, K) with a VMEM f32 accumulator."""
    M, K = x2d.shape
    N = w.shape[1]
    tm = _pick_tile(M, tm_target, 8)
    tn = _pick_tile(N, tn_target, 128)
    tk = _pick_tile(K, tk_target, 128)
    grid = (M // tm, N // tn, K // tk)
    x_spec = pl.BlockSpec((tm, tk), lambda i, j, k: (i, k))
    w_spec = pl.BlockSpec((tk, tn), lambda i, j, k: (k, j))
    o_spec = pl.BlockSpec((tm, tn), lambda i, j, k: (i, j))
    scratch = [pltpu.VMEM((tm, tn), jnp.float32)]
    cp = _cparams(("parallel", "parallel", "arbitrary"))
    if b is None:
        return pl.pallas_call(
            _matmul_kernel,
            out_shape=jax.ShapeDtypeStruct((M, N), jnp.float32),
            grid=grid,
            in_specs=[x_spec, w_spec],
            out_specs=o_spec,
            scratch_shapes=scratch,
            compiler_params=cp,
        )(x2d, w)
    b_spec = pl.BlockSpec((1, tn), lambda i, j, k: (0, j))
    return pl.pallas_call(
        _matmul_bias_kernel,
        out_shape=jax.ShapeDtypeStruct((M, N), jnp.float32),
        grid=grid,
        in_specs=[x_spec, w_spec, b_spec],
        out_specs=o_spec,
        scratch_shapes=scratch,
        compiler_params=cp,
    )(x2d, w, b.reshape(1, N))


# ----------------------------------------------------------------------------
# Fused output-projection + residual add + LayerNorm
# ----------------------------------------------------------------------------

def _proj_add_ln_kernel(x_ref, w_ref, b_ref, r_ref, g_ref, bb_ref, o_ref, *, eps):
    y = jnp.dot(x_ref[...].astype(jnp.bfloat16), w_ref[...].astype(jnp.bfloat16),
                preferred_element_type=jnp.float32)
    y = y + b_ref[...] + r_ref[...]
    mu = jnp.mean(y, axis=-1, keepdims=True)
    var = jnp.mean(jnp.square(y - mu), axis=-1, keepdims=True)
    o_ref[...] = (y - mu) * jax.lax.rsqrt(var + eps) * g_ref[...] + bb_ref[...]


def proj_add_ln_pallas(x2d, w, b, res2d, gamma, beta, *, tm_target=256, eps=1e-5):
    M, K = x2d.shape
    D = w.shape[1]
    tm = _pick_tile(M, tm_target, 8)
    grid = (M // tm,)
    return pl.pallas_call(
        functools.partial(_proj_add_ln_kernel, eps=eps),
        out_shape=jax.ShapeDtypeStruct((M, D), jnp.float32),
        grid=grid,
        in_specs=[pl.BlockSpec((tm, K), lambda i: (i, 0)),
                  pl.BlockSpec((K, D), lambda i: (0, 0)),   # weight resident across M tiles
                  pl.BlockSpec((1, D), lambda i: (0, 0)),
                  pl.BlockSpec((tm, D), lambda i: (i, 0)),
                  pl.BlockSpec((1, D), lambda i: (0, 0)),
                  pl.BlockSpec((1, D), lambda i: (0, 0))],
        out_specs=pl.BlockSpec((tm, D), lambda i: (i, 0)),
        compiler_params=_cparams(("parallel",)),
    )(x2d, w, b.reshape(1, D), res2d, gamma.reshape(1, D), beta.reshape(1, D))


# ----------------------------------------------------------------------------
# Fused position-wise FFN + residual add + LayerNorm
# ----------------------------------------------------------------------------

def _ffn_add_ln_kernel(x_ref, w1_ref, b1_ref, w2_ref, b2_ref, g_ref, bb_ref, o_ref, *, eps):
    x = x_ref[...]
    h = jnp.dot(x.astype(jnp.bfloat16), w1_ref[...].astype(jnp.bfloat16),
                preferred_element_type=jnp.float32) + b1_ref[...]
    h = jnp.maximum(h, 0.0)
    y = jnp.dot(h.astype(jnp.bfloat16), w2_ref[...].astype(jnp.bfloat16),
                preferred_element_type=jnp.float32) + b2_ref[...] + x
    mu = jnp.mean(y, axis=-1, keepdims=True)
    var = jnp.mean(jnp.square(y - mu), axis=-1, keepdims=True)
    o_ref[...] = (y - mu) * jax.lax.rsqrt(var + eps) * g_ref[...] + bb_ref[...]


def ffn_add_ln_pallas(x2d, w1, b1, w2, b2, gamma, beta, *, tm_target=256, eps=1e-5):
    M, D = x2d.shape
    H = w1.shape[1]
    tm = _pick_tile(M, tm_target, 8)
    grid = (M // tm,)
    return pl.pallas_call(
        functools.partial(_ffn_add_ln_kernel, eps=eps),
        out_shape=jax.ShapeDtypeStruct((M, D), jnp.float32),
        grid=grid,
        in_specs=[pl.BlockSpec((tm, D), lambda i: (i, 0)),
                  pl.BlockSpec((D, H), lambda i: (0, 0)),   # weights resident across M tiles
                  pl.BlockSpec((1, H), lambda i: (0, 0)),
                  pl.BlockSpec((H, D), lambda i: (0, 0)),
                  pl.BlockSpec((1, D), lambda i: (0, 0)),
                  pl.BlockSpec((1, D), lambda i: (0, 0)),
                  pl.BlockSpec((1, D), lambda i: (0, 0))],
        out_specs=pl.BlockSpec((tm, D), lambda i: (i, 0)),
        compiler_params=_cparams(("parallel",)),
    )(x2d, w1, b1.reshape(1, H), w2, b2.reshape(1, D),
      gamma.reshape(1, D), beta.reshape(1, D))


# ----------------------------------------------------------------------------
# Fused multi-head scaled-dot-product attention (all heads per grid step)
# ----------------------------------------------------------------------------

def _attn_heads(q, k, v, mask, *, n_heads, d_k, d_v, scale):
    """q:(Lq,H*d_k) k:(Lk,H*d_k) v:(Lk,H*d_v) mask:(Lq,Lk) int32 -> (Lq,H*d_v)."""
    masked = mask > 0
    neg = jnp.float32(-1e9)
    outs = []
    for h in range(n_heads):               # static unroll over heads
        qh = q[:, h * d_k:(h + 1) * d_k].astype(jnp.bfloat16)
        kh = k[:, h * d_k:(h + 1) * d_k].astype(jnp.bfloat16)
        vh = v[:, h * d_v:(h + 1) * d_v].astype(jnp.bfloat16)
        # contract over d_k without an explicit transpose
        s = jax.lax.dot_general(qh, kh, (((1,), (1,)), ((), ())),
                                preferred_element_type=jnp.float32) * scale
        s = jnp.where(masked, neg, s)
        m = jnp.max(s, axis=-1, keepdims=True)
        p = jnp.exp(s - m)
        denom = jnp.sum(p, axis=-1, keepdims=True)
        attn = p * pl.reciprocal(denom, approx=True)
        outs.append(jnp.dot(attn.astype(jnp.bfloat16), vh,
                            preferred_element_type=jnp.float32))
    return jnp.concatenate(outs, axis=-1)   # single lane-dense store by the caller


def _self_attn_kernel(qkv_ref, m_ref, o_ref, *, n_heads, d_k, d_v, scale):
    qkv = qkv_ref[0]
    hk = n_heads * d_k
    q = qkv[:, :hk]
    k = qkv[:, hk:2 * hk]
    v = qkv[:, 2 * hk:]
    o_ref[0] = _attn_heads(q, k, v, m_ref[0],
                           n_heads=n_heads, d_k=d_k, d_v=d_v, scale=scale)


def _cross_attn_kernel(q_ref, kv_ref, m_ref, o_ref, *, n_heads, d_k, d_v, scale):
    kv = kv_ref[0]
    hk = n_heads * d_k
    k = kv[:, :hk]
    v = kv[:, hk:]
    o_ref[0] = _attn_heads(q_ref[0], k, v, m_ref[0],
                           n_heads=n_heads, d_k=d_k, d_v=d_v, scale=scale)


def self_attention_pallas(qkv, mask, *, n_heads, d_k, d_v):
    B, Lq, W = qkv.shape
    Lk = mask.shape[2]
    return pl.pallas_call(
        functools.partial(_self_attn_kernel, n_heads=n_heads, d_k=d_k, d_v=d_v,
                          scale=1.0 / float(np.sqrt(d_k))),
        out_shape=jax.ShapeDtypeStruct((B, Lq, n_heads * d_v), jnp.float32),
        grid=(B,),
        in_specs=[pl.BlockSpec((1, Lq, W), lambda b: (b, 0, 0)),
                  pl.BlockSpec((1, Lq, Lk), lambda b: (b, 0, 0))],
        out_specs=pl.BlockSpec((1, Lq, n_heads * d_v), lambda b: (b, 0, 0)),
        compiler_params=_cparams(("parallel",)),
    )(qkv, mask)


def cross_attention_pallas(q, kv, mask, *, n_heads, d_k, d_v):
    B, Lq, _ = q.shape
    Lk = kv.shape[1]
    return pl.pallas_call(
        functools.partial(_cross_attn_kernel, n_heads=n_heads, d_k=d_k, d_v=d_v,
                          scale=1.0 / float(np.sqrt(d_k))),
        out_shape=jax.ShapeDtypeStruct((B, Lq, n_heads * d_v), jnp.float32),
        grid=(B,),
        in_specs=[pl.BlockSpec((1, Lq, n_heads * d_k), lambda b: (b, 0, 0)),
                  pl.BlockSpec((1, Lk, n_heads * (d_k + d_v)), lambda b: (b, 0, 0)),
                  pl.BlockSpec((1, Lq, Lk), lambda b: (b, 0, 0))],
        out_specs=pl.BlockSpec((1, Lq, n_heads * d_v), lambda b: (b, 0, 0)),
        compiler_params=_cparams(("parallel",)),
    )(q, kv, mask)


# ----------------------------------------------------------------------------
# Model building blocks (glue in plain JAX, compute in Pallas kernels)
# ----------------------------------------------------------------------------

def sinusoid_table(n_pos, d_emb, padding_idx=0):
    pos = np.arange(n_pos)[:, None].astype(np.float64)
    i = np.arange(d_emb)[None, :]
    angle = pos / np.power(10000.0, 2.0 * (i // 2) / d_emb)
    table = np.zeros((n_pos, d_emb), np.float32)
    table[:, 0::2] = np.sin(angle[:, 0::2])
    table[:, 1::2] = np.cos(angle[:, 1::2])
    table[padding_idx] = 0.0
    return jnp.asarray(table)


def padding_mask(seq_q, seq_k, pad_id=0):
    B, Lq = seq_q.shape
    Lk = seq_k.shape[1]
    return jnp.broadcast_to((seq_k == pad_id)[:, None, :], (B, Lq, Lk))


def subsequent_mask(seq):
    B, L = seq.shape
    m = jnp.triu(jnp.ones((L, L), jnp.int32), k=1)
    return jnp.broadcast_to(m[None], (B, L, L))


def multi_head_attention(p, x_q, x_kv, mask, cfg, *, self_attn):
    n_heads, d_k, d_v, d_model = cfg["n_heads"], cfg["d_k"], cfg["d_v"], cfg["d_model"]
    B, Lq, _ = x_q.shape
    Lk = x_kv.shape[1]
    xq2 = x_q.reshape(B * Lq, d_model)
    # mask is (B, Lq, Lk), passed once per batch (no n_heads expansion).
    # (Could be narrowed to int8 to further cut HBM traffic.)
    mask_i = mask.astype(jnp.int32)

    if self_attn:
        # One fused QKV projection (shared input load, concatenated weight).
        qkv = linear_pallas(xq2, p["w_qkv"], p["b_qkv"])
        ctx = self_attention_pallas(qkv.reshape(B, Lq, -1), mask_i,
                                    n_heads=n_heads, d_k=d_k, d_v=d_v)
    else:
        xkv2 = x_kv.reshape(B * Lk, d_model)
        q = linear_pallas(xq2, p["w_q"], p["b_q"])
        kv = linear_pallas(xkv2, p["w_kv"], p["b_kv"])   # fused K+V projection
        ctx = cross_attention_pallas(q.reshape(B, Lq, -1), kv.reshape(B, Lk, -1),
                                     mask_i, n_heads=n_heads, d_k=d_k, d_v=d_v)

    # Fused: output projection + residual add + LayerNorm.
    out = proj_add_ln_pallas(ctx.reshape(B * Lq, n_heads * d_v),
                             p["wo"], p["bo"], xq2, p["ln_g"], p["ln_b"])
    return out.reshape(B, Lq, d_model)


def pos_ffn(p, x, cfg):
    B, L, d_model = x.shape
    x2 = x.reshape(B * L, d_model)
    out = ffn_add_ln_pallas(x2, p["w1"], p["b1"], p["w2"], p["b2"],
                            p["ln_g"], p["ln_b"])
    return out.reshape(B, L, d_model)


def encoder_layer(p, x, slf_mask, cfg):
    out = multi_head_attention(p["slf_attn"], x, x, slf_mask, cfg, self_attn=True)
    return pos_ffn(p["ffn"], out, cfg)


def decoder_layer(p, x, enc_out, slf_mask, inter_mask, cfg):
    out = multi_head_attention(p["slf_attn"], x, x, slf_mask, cfg, self_attn=True)
    out = multi_head_attention(p["inter_attn"], out, enc_out, inter_mask, cfg,
                               self_attn=False)
    return pos_ffn(p["ffn"], out, cfg)


def transformer_forward(params, src, tgt_in, tgt_out, src_pos, tgt_pos, cfg):
    del tgt_out  # unused in the reference forward as well
    pad_id = cfg["pad_id"]

    # ---- encoder ----
    enc_mask = padding_mask(src, src, pad_id)
    enc_x = params["enc_emb"][src] + params["enc_pos"][src_pos]
    enc_outputs = []
    out = enc_x
    for lp in params["enc_layers"]:
        out = encoder_layer(lp, out, enc_mask, cfg)
        enc_outputs.append(out)

    # ---- decoder ----
    slf_mask = (padding_mask(tgt_in, tgt_in, pad_id).astype(jnp.int32)
                + subsequent_mask(tgt_in)) > 0
    inter_mask = padding_mask(tgt_in, src, pad_id)
    dec_x = params["dec_emb"][tgt_in] + params["dec_pos"][tgt_pos]
    out = dec_x
    for lp, enc_out in zip(params["dec_layers"], enc_outputs):
        out = decoder_layer(lp, out, enc_out, slf_mask, inter_mask, cfg)

    # ---- output projection (bias-free, lane-padded weight) ----
    B, Lt, d_model = out.shape
    logits_padded = linear_pallas(out.reshape(B * Lt, d_model), params["proj_w_pad"])
    return logits_padded[:, :cfg["tgt_vocab"]]   # (B*Lt, tgt_vocab)


# ----------------------------------------------------------------------------
# Deterministic parameter init
# ----------------------------------------------------------------------------

def init_linear(key, d_in, d_out):
    k1, k2 = jax.random.split(key)
    bound = 1.0 / np.sqrt(d_in)
    w = jax.random.uniform(k1, (d_in, d_out), jnp.float32, -bound, bound)
    b = jax.random.uniform(k2, (d_out,), jnp.float32, -bound, bound)
    return w, b


def init_mha(key, cfg):
    d_model, n_heads, d_k, d_v = cfg["d_model"], cfg["n_heads"], cfg["d_k"], cfg["d_v"]
    ks = jax.random.split(key, 4)
    wq, bq = init_linear(ks[0], d_model, n_heads * d_k)
    wk, bk = init_linear(ks[1], d_model, n_heads * d_k)
    wv, bv = init_linear(ks[2], d_model, n_heads * d_v)
    wo, bo = init_linear(ks[3], n_heads * d_v, d_model)
    # Concatenate projection weights once at init (no per-call concat cost).
    return dict(w_qkv=jnp.concatenate([wq, wk, wv], axis=1),
                b_qkv=jnp.concatenate([bq, bk, bv], axis=0),
                w_q=wq, b_q=bq,
                w_kv=jnp.concatenate([wk, wv], axis=1),
                b_kv=jnp.concatenate([bk, bv], axis=0),
                wo=wo, bo=bo,
                ln_g=jnp.ones((d_model,), jnp.float32),
                ln_b=jnp.zeros((d_model,), jnp.float32))


def init_ffn(key, cfg):
    d_model, d_hidden = cfg["d_model"], cfg["d_hidden"]
    k1, k2 = jax.random.split(key)
    w1, b1 = init_linear(k1, d_model, d_hidden)
    w2, b2 = init_linear(k2, d_hidden, d_model)
    return dict(w1=w1, b1=b1, w2=w2, b2=b2,
                ln_g=jnp.ones((d_model,), jnp.float32),
                ln_b=jnp.zeros((d_model,), jnp.float32))


def init_params(key, cfg):
    src_vocab, tgt_vocab = cfg["src_vocab"], cfg["tgt_vocab"]
    d_emb, d_model, max_len, pad_id = cfg["d_emb"], cfg["d_model"], cfg["max_len"], cfg["pad_id"]
    keys = jax.random.split(key, 5)

    enc_emb = 0.02 * jax.random.normal(keys[0], (src_vocab, d_emb), jnp.float32)
    enc_emb = enc_emb.at[pad_id].set(0.0)
    dec_emb = 0.02 * jax.random.normal(keys[1], (tgt_vocab, d_emb), jnp.float32)
    dec_emb = dec_emb.at[pad_id].set(0.0)

    enc_layers, dec_layers = [], []
    ek = jax.random.split(keys[2], cfg["n_layers"] * 2)
    dk_ = jax.random.split(keys[3], cfg["n_layers"] * 3)
    for l in range(cfg["n_layers"]):
        enc_layers.append(dict(slf_attn=init_mha(ek[2 * l], cfg),
                               ffn=init_ffn(ek[2 * l + 1], cfg)))
        dec_layers.append(dict(slf_attn=init_mha(dk_[3 * l], cfg),
                               inter_attn=init_mha(dk_[3 * l + 1], cfg),
                               ffn=init_ffn(dk_[3 * l + 2], cfg)))

    proj_w, _ = init_linear(keys[4], d_model, tgt_vocab)
    # Pad the vocab axis to a multiple of 128 lanes for lane-dense stores;
    # logits are sliced back to tgt_vocab after the kernel.
    n_pad = ((tgt_vocab + 127) // 128) * 128
    proj_w_pad = jnp.zeros((d_model, n_pad), jnp.float32).at[:, :tgt_vocab].set(proj_w)

    return dict(enc_emb=enc_emb, dec_emb=dec_emb,
                enc_pos=sinusoid_table(max_len + 1, d_emb, pad_id),
                dec_pos=sinusoid_table(max_len + 1, d_emb, pad_id),
                enc_layers=enc_layers, dec_layers=dec_layers,
                proj_w_pad=proj_w_pad)


# ----------------------------------------------------------------------------
# Main
# ----------------------------------------------------------------------------

if __name__ == "__main__":
    cfg = dict(src_vocab=24, tgt_vocab=24, max_len=8, n_layers=2,
               d_model=32, d_emb=32, d_hidden=64, n_heads=4, d_k=8, d_v=8,
               pad_id=0)
    B, L = 2, 8

    key = jax.random.PRNGKey(0)
    kp, ks, kt = jax.random.split(key, 3)
    params = init_params(kp, cfg)

    # token ids in [1, vocab), positions 1..L (0 reserved for pad)
    src = jax.random.randint(ks, (B, L), 1, cfg["src_vocab"], dtype=jnp.int32)
    tgt_in = jax.random.randint(kt, (B, L), 1, cfg["tgt_vocab"], dtype=jnp.int32)
    tgt_out = tgt_in  # unused by forward, passed for signature parity
    src_pos = jnp.broadcast_to(jnp.arange(1, L + 1, dtype=jnp.int32)[None], (B, L))
    tgt_pos = jnp.broadcast_to(jnp.arange(1, L + 1, dtype=jnp.int32)[None], (B, L))

    fwd = jax.jit(functools.partial(transformer_forward, cfg=cfg))
    logits = fwd(params, src, tgt_in, tgt_out, src_pos, tgt_pos)
    logits = jax.block_until_ready(logits)

    assert logits.shape == (B * L, cfg["tgt_vocab"])
    assert bool(jnp.all(jnp.isfinite(logits)))
    print("KERNEL_OK")
</pallas_src>

<mosaic_0001>
module attributes {stable_mosaic.version = 11 : i64} {
  func.func @_matmul_bias_kernel(%arg0: i32, %arg1: i32, %arg2: i32, %arg3: memref<16x32xf32, #tpu.memory_space<vmem>>, %arg4: memref<32x96xf32, #tpu.memory_space<vmem>>, %arg5: memref<1x96xf32, #tpu.memory_space<vmem>>, %arg6: memref<16x96xf32, #tpu.memory_space<vmem>>, %arg7: memref<16x96xf32, #tpu.memory_space<vmem>>) attributes {dimension_semantics = [#tpu.dimension_semantics<parallel>, #tpu.dimension_semantics<parallel>, #tpu.dimension_semantics<arbitrary>], iteration_bounds = array<i64: 1, 1, 1>, scalar_prefetch = 0 : i64, scratch_operands = 1 : i64, tpu.core_type = #tpu.core_type<tc>, window_params = [{transform_indices = @transform_0, window_bounds = array<i64: 16, 32>}, {transform_indices = @transform_1, window_bounds = array<i64: 32, 96>}, {transform_indices = @transform_2, window_bounds = array<i64: 1, 96>}, {transform_indices = @transform_3, window_bounds = array<i64: 16, 96>}]} {
    %c0_i32 = arith.constant 0 : i32
    %0 = arith.cmpi eq, %arg2, %c0_i32 : i32
    %1 = arith.extui %0 : i1 to i32
    %c0_i32_0 = arith.constant 0 : i32
    %2 = arith.cmpi ne, %1, %c0_i32_0 : i32
    scf.if %2 {
      %cst_10 = arith.constant 0.000000e+00 : f32
      %14 = vector.broadcast %cst_10 : f32 to vector<16x96xf32>
      %c0_11 = arith.constant 0 : index
      %c0_12 = arith.constant 0 : index
      %15 = vector.load %arg7[%c0_11, %c0_12] : memref<16x96xf32, #tpu.memory_space<vmem>>, vector<16x96xf32>
      tpu.vector_store %arg7[%c0_11, %c0_12], %14 {strides = array<i32>} : memref<16x96xf32, #tpu.memory_space<vmem>>, vector<16x96xf32>,
    } else {
    }
    %c0 = arith.constant 0 : index
    %c0_1 = arith.constant 0 : index
    %3 = vector.load %arg7[%c0, %c0_1] : memref<16x96xf32, #tpu.memory_space<vmem>>, vector<16x96xf32>
    %c0_2 = arith.constant 0 : index
    %c0_3 = arith.constant 0 : index
    %4 = vector.load %arg3[%c0_2, %c0_3] : memref<16x32xf32, #tpu.memory_space<vmem>>, vector<16x32xf32>
    %5 = arith.truncf %4 : vector<16x32xf32> to vector<16x32xbf16>
    %c0_4 = arith.constant 0 : index
    %c0_5 = arith.constant 0 : index
    %6 = vector.load %arg4[%c0_4, %c0_5] : memref<32x96xf32, #tpu.memory_space<vmem>>, vector<32x96xf32>
    %7 = arith.truncf %6 : vector<32x96xf32> to vector<32x96xbf16>
    %cst = arith.constant dense<0.000000e+00> : vector<16x96xf32>
    %8 = tpu.matmul %5, %7, %cst {dimension_numbers = #tpu.dot_dimension_numbers<[1], [0], [0], [1], [0, 0, 1, 1], [], []>} : vector<16x32xbf16>, vector<32x96xbf16>, vector<16x96xf32> -> vector<16x96xf32>
    %9 = arith.addf %3, %8 : vector<16x96xf32>
    %c0_6 = arith.constant 0 : index
    %c0_7 = arith.constant 0 : index
    %10 = vector.load %arg7[%c0_6, %c0_7] : memref<16x96xf32, #tpu.memory_space<vmem>>, vector<16x96xf32>
    tpu.vector_store %arg7[%c0_6, %c0_7], %9 {strides = array<i32>} : memref<16x96xf32, #tpu.memory_space<vmem>>, vector<16x96xf32>,
    %c0_i32_8 = arith.constant 0 : i32
    %11 = arith.cmpi eq, %arg2, %c0_i32_8 : i32
    %12 = arith.extui %11 : i1 to i32
    %c0_i32_9 = arith.constant 0 : i32
    %13 = arith.cmpi ne, %12, %c0_i32_9 : i32
    scf.if %13 {
      %c0_10 = arith.constant 0 : index
      %c0_11 = arith.constant 0 : index
      %14 = vector.load %arg7[%c0_10, %c0_11] : memref<16x96xf32, #tpu.memory_space<vmem>>, vector<16x96xf32>
      %c0_12 = arith.constant 0 : index
      %c0_13 = arith.constant 0 : index
      %15 = vector.load %arg5[%c0_12, %c0_13] : memref<1x96xf32, #tpu.memory_space<vmem>>, vector<1x96xf32>
      %16 = vector.broadcast %15 : vector<1x96xf32> to vector<16x96xf32>
      %17 = arith.addf %14, %16 : vector<16x96xf32>
      %c0_14 = arith.constant 0 : index
      %c0_15 = arith.constant 0 : index
      %18 = vector.load %arg6[%c0_14, %c0_15] : memref<16x96xf32, #tpu.memory_space<vmem>>, vector<16x96xf32>
      tpu.vector_store %arg6[%c0_14, %c0_15], %17 {strides = array<i32>} : memref<16x96xf32, #tpu.memory_space<vmem>>, vector<16x96xf32>,
    } else {
    }
    return
  }
  func.func @transform_0(%arg0: i32, %arg1: i32, %arg2: i32) -> (i32, i32) {
    %c0_i32 = arith.constant 0 : i32
    return %arg0, %arg2 : i32, i32
  }
  func.func @transform_1(%arg0: i32, %arg1: i32, %arg2: i32) -> (i32, i32) {
    %c0_i32 = arith.constant 0 : i32
    return %arg2, %arg1 : i32, i32
  }
  func.func @transform_2(%arg0: i32, %arg1: i32, %arg2: i32) -> (i32, i32) {
    %c0_i32 = arith.constant 0 : i32
    %c0_i32_0 = arith.constant 0 : i32
    return %c0_i32, %arg1 : i32, i32
  }
  func.func @transform_3(%arg0: i32, %arg1: i32, %arg2: i32) -> (i32, i32) {
    %c0_i32 = arith.constant 0 : i32
    return %arg0, %arg1 : i32, i32
  }
}

module attributes {stable_mosaic.version = 11 : i64} {
  func.func @_proj_add_ln_kernel(%arg0: i32, %arg1: memref<16x32xf32, #tpu.memory_space<vmem>>, %arg2: memref<32x32xf32, #tpu.memory_space<vmem>>, %arg3: memref<1x32xf32, #tpu.memory_space<vmem>>, %arg4: memref<16x32xf32, #tpu.memory_space<vmem>>, %arg5: memref<1x32xf32, #tpu.memory_space<vmem>>, %arg6: memref<1x32xf32, #tpu.memory_space<vmem>>, %arg7: memref<16x32xf32, #tpu.memory_space<vmem>>) attributes {dimension_semantics = [#tpu.dimension_semantics<parallel>], iteration_bounds = array<i64: 1>, scalar_prefetch = 0 : i64, scratch_operands = 0 : i64, tpu.core_type = #tpu.core_type<tc>, window_params = [{transform_indices = @transform_0, window_bounds = array<i64: 16, 32>}, {pipeline_mode = #tpu.pipeline_mode<synchronous>, transform_indices = @transform_1, window_bounds = array<i64: 32, 32>}, {pipeline_mode = #tpu.pipeline_mode<synchronous>, transform_indices = @transform_2, window_bounds = array<i64: 1, 32>}, {transform_indices = @transform_3, window_bounds = array<i64: 16, 32>}, {pipeline_mode = #tpu.pipeline_mode<synchronous>, transform_indices = @transform_4, window_bounds = array<i64: 1, 32>}, {pipeline_mode = #tpu.pipeline_mode<synchronous>, transform_indices = @transform_5, window_bounds = array<i64: 1, 32>}, {transform_indices = @transform_6, window_bounds = array<i64: 16, 32>}]} {
    %c0 = arith.constant 0 : index
    %c0_0 = arith.constant 0 : index
    %0 = vector.load %arg1[%c0, %c0_0] : memref<16x32xf32, #tpu.memory_space<vmem>>, vector<16x32xf32>
    %1 = arith.truncf %0 : vector<16x32xf32> to vector<16x32xbf16>
    %c0_1 = arith.constant 0 : index
    %c0_2 = arith.constant 0 : index
    %2 = vector.load %arg2[%c0_1, %c0_2] : memref<32x32xf32, #tpu.memory_space<vmem>>, vector<32x32xf32>
    %3 = arith.truncf %2 : vector<32x32xf32> to vector<32x32xbf16>
    %cst = arith.constant dense<0.000000e+00> : vector<16x32xf32>
    %4 = tpu.matmul %1, %3, %cst {dimension_numbers = #tpu.dot_dimension_numbers<[1], [0], [0], [1], [0, 0, 1, 1], [], []>} : vector<16x32xbf16>, vector<32x32xbf16>, vector<16x32xf32> -> vector<16x32xf32>
    %c0_3 = arith.constant 0 : index
    %c0_4 = arith.constant 0 : index
    %5 = vector.load %arg3[%c0_3, %c0_4] : memref<1x32xf32, #tpu.memory_space<vmem>>, vector<1x32xf32>
    %6 = vector.broadcast %5 : vector<1x32xf32> to vector<16x32xf32>
    %7 = arith.addf %4, %6 : vector<16x32xf32>
    %c0_5 = arith.constant 0 : index
    %c0_6 = arith.constant 0 : index
    %8 = vector.load %arg4[%c0_5, %c0_6] : memref<16x32xf32, #tpu.memory_space<vmem>>, vector<16x32xf32>
    %9 = arith.addf %7, %8 : vector<16x32xf32>
    %cst_7 = arith.constant dense<0.000000e+00> : vector<16xf32>
    %10 = vector.multi_reduction <add>, %9, %cst_7 [1] : vector<16x32xf32> to vector<16xf32>
    %11 = vector.shape_cast %10 : vector<16xf32> to vector<16x1xf32>
    %cst_8 = arith.constant 3.200000e+01 : f32
    %12 = vector.broadcast %cst_8 : f32 to vector<16x1xf32>
    %13 = arith.divf %11, %12 : vector<16x1xf32>
    %14 = vector.broadcast %13 : vector<16x1xf32> to vector<16x32xf32>
    %15 = arith.subf %9, %14 : vector<16x32xf32>
    %16 = arith.mulf %15, %15 : vector<16x32xf32>
    %cst_9 = arith.constant dense<0.000000e+00> : vector<16xf32>
    %17 = vector.multi_reduction <add>, %16, %cst_9 [1] : vector<16x32xf32> to vector<16xf32>
    %18 = vector.shape_cast %17 : vector<16xf32> to vector<16x1xf32>
    %cst_10 = arith.constant 3.200000e+01 : f32
    %19 = vector.broadcast %cst_10 : f32 to vector<16x1xf32>
    %20 = arith.divf %18, %19 : vector<16x1xf32>
    %21 = vector.broadcast %13 : vector<16x1xf32> to vector<16x32xf32>
    %22 = arith.subf %9, %21 : vector<16x32xf32>
    %cst_11 = arith.constant 9.99999974E-6 : f32
    %23 = vector.broadcast %cst_11 : f32 to vector<16x1xf32>
    %24 = arith.addf %20, %23 : vector<16x1xf32>
    %25 = math.rsqrt %24 : vector<16x1xf32>
    %26 = vector.broadcast %25 : vector<16x1xf32> to vector<16x32xf32>
    %27 = arith.mulf %22, %26 : vector<16x32xf32>
    %c0_12 = arith.constant 0 : index
    %c0_13 = arith.constant 0 : index
    %28 = vector.load %arg5[%c0_12, %c0_13] : memref<1x32xf32, #tpu.memory_space<vmem>>, vector<1x32xf32>
    %29 = vector.broadcast %28 : vector<1x32xf32> to vector<16x32xf32>
    %30 = arith.mulf %27, %29 : vector<16x32xf32>
    %c0_14 = arith.constant 0 : index
    %c0_15 = arith.constant 0 : index
    %31 = vector.load %arg6[%c0_14, %c0_15] : memref<1x32xf32, #tpu.memory_space<vmem>>, vector<1x32xf32>
    %32 = vector.broadcast %31 : vector<1x32xf32> to vector<16x32xf32>
    %33 = arith.addf %30, %32 : vector<16x32xf32>
    %c0_16 = arith.constant 0 : index
    %c0_17 = arith.constant 0 : index
    %34 = vector.load %arg7[%c0_16, %c0_17] : memref<16x32xf32, #tpu.memory_space<vmem>>, vector<16x32xf32>
    tpu.vector_store %arg7[%c0_16, %c0_17], %33 {strides = array<i32>} : memref<16x32xf32, #tpu.memory_space<vmem>>, vector<16x32xf32>,
    return
  }
  func.func @transform_0(%arg0: i32) -> (i32, i32) {
    %c0_i32 = arith.constant 0 : i32
    %c0_i32_0 = arith.constant 0 : i32
    return %arg0, %c0_i32 : i32, i32
  }
  func.func @transform_1(%arg0: i32) -> (i32, i32) {
    %c0_i32 = arith.constant 0 : i32
    %c0_i32_0 = arith.constant 0 : i32
    %c0_i32_1 = arith.constant 0 : i32
    return %c0_i32, %c0_i32_0 : i32, i32
  }
  func.func @transform_2(%arg0: i32) -> (i32, i32) {
    %c0_i32 = arith.constant 0 : i32
    %c0_i32_0 = arith.constant 0 : i32
    %c0_i32_1 = arith.constant 0 : i32
    return %c0_i32, %c0_i32_0 : i32, i32
  }
  func.func @transform_3(%arg0: i32) -> (i32, i32) {
    %c0_i32 = arith.constant 0 : i32
    %c0_i32_0 = arith.constant 0 : i32
    return %arg0, %c0_i32 : i32, i32
  }
  func.func @transform_4(%arg0: i32) -> (i32, i32) {
    %c0_i32 = arith.constant 0 : i32
    %c0_i32_0 = arith.constant 0 : i32
    %c0_i32_1 = arith.constant 0 : i32
    return %c0_i32, %c0_i32_0 : i32, i32
  }
  func.func @transform_5(%arg0: i32) -> (i32, i32) {
    %c0_i32 = arith.constant 0 : i32
    %c0_i32_0 = arith.constant 0 : i32
    %c0_i32_1 = arith.constant 0 : i32
    return %c0_i32, %c0_i32_0 : i32, i32
  }
  func.func @transform_6(%arg0: i32) -> (i32, i32) {
    %c0_i32 = arith.constant 0 : i32
    %c0_i32_0 = arith.constant 0 : i32
    return %arg0, %c0_i32 : i32, i32
  }
}

module attributes {stable_mosaic.version = 11 : i64} {
  func.func @_ffn_add_ln_kernel(%arg0: i32, %arg1: memref<16x32xf32, #tpu.memory_space<vmem>>, %arg2: memref<32x64xf32, #tpu.memory_space<vmem>>, %arg3: memref<1x64xf32, #tpu.memory_space<vmem>>, %arg4: memref<64x32xf32, #tpu.memory_space<vmem>>, %arg5: memref<1x32xf32, #tpu.memory_space<vmem>>, %arg6: memref<1x32xf32, #tpu.memory_space<vmem>>, %arg7: memref<1x32xf32, #tpu.memory_space<vmem>>, %arg8: memref<16x32xf32, #tpu.memory_space<vmem>>) attributes {dimension_semantics = [#tpu.dimension_semantics<parallel>], iteration_bounds = array<i64: 1>, scalar_prefetch = 0 : i64, scratch_operands = 0 : i64, tpu.core_type = #tpu.core_type<tc>, window_params = [{transform_indices = @transform_0, window_bounds = array<i64: 16, 32>}, {pipeline_mode = #tpu.pipeline_mode<synchronous>, transform_indices = @transform_1, window_bounds = array<i64: 32, 64>}, {pipeline_mode = #tpu.pipeline_mode<synchronous>, transform_indices = @transform_2, window_bounds = array<i64: 1, 64>}, {pipeline_mode = #tpu.pipeline_mode<synchronous>, transform_indices = @transform_3, window_bounds = array<i64: 64, 32>}, {pipeline_mode = #tpu.pipeline_mode<synchronous>, transform_indices = @transform_4, window_bounds = array<i64: 1, 32>}, {pipeline_mode = #tpu.pipeline_mode<synchronous>, transform_indices = @transform_5, window_bounds = array<i64: 1, 32>}, {pipeline_mode = #tpu.pipeline_mode<synchronous>, transform_indices = @transform_6, window_bounds = array<i64: 1, 32>}, {transform_indices = @transform_7, window_bounds = array<i64: 16, 32>}]} {
    %c0 = arith.constant 0 : index
    %c0_0 = arith.constant 0 : index
    %0 = vector.load %arg1[%c0, %c0_0] : memref<16x32xf32, #tpu.memory_space<vmem>>, vector<16x32xf32>
    %1 = arith.truncf %0 : vector<16x32xf32> to vector<16x32xbf16>
    %c0_1 = arith.constant 0 : index
    %c0_2 = arith.constant 0 : index
    %2 = vector.load %arg2[%c0_1, %c0_2] : memref<32x64xf32, #tpu.memory_space<vmem>>, vector<32x64xf32>
    %3 = arith.truncf %2 : vector<32x64xf32> to vector<32x64xbf16>
    %cst = arith.constant dense<0.000000e+00> : vector<16x64xf32>
    %4 = tpu.matmul %1, %3, %cst {dimension_numbers = #tpu.dot_dimension_numbers<[1], [0], [0], [1], [0, 0, 1, 1], [], []>} : vector<16x32xbf16>, vector<32x64xbf16>, vector<16x64xf32> -> vector<16x64xf32>
    %c0_3 = arith.constant 0 : index
    %c0_4 = arith.constant 0 : index
    %5 = vector.load %arg3[%c0_3, %c0_4] : memref<1x64xf32, #tpu.memory_space<vmem>>, vector<1x64xf32>
    %6 = vector.broadcast %5 : vector<1x64xf32> to vector<16x64xf32>
    %7 = arith.addf %4, %6 : vector<16x64xf32>
    %cst_5 = arith.constant 0.000000e+00 : f32
    %8 = vector.broadcast %cst_5 : f32 to vector<16x64xf32>
    %9 = arith.maximumf %7, %8 : vector<16x64xf32>
    %10 = arith.truncf %9 : vector<16x64xf32> to vector<16x64xbf16>
    %c0_6 = arith.constant 0 : index
    %c0_7 = arith.constant 0 : index
    %11 = vector.load %arg4[%c0_6, %c0_7] : memref<64x32xf32, #tpu.memory_space<vmem>>, vector<64x32xf32>
    %12 = arith.truncf %11 : vector<64x32xf32> to vector<64x32xbf16>
    %cst_8 = arith.constant dense<0.000000e+00> : vector<16x32xf32>
    %13 = tpu.matmul %10, %12, %cst_8 {dimension_numbers = #tpu.dot_dimension_numbers<[1], [0], [0], [1], [0, 0, 1, 1], [], []>} : vector<16x64xbf16>, vector<64x32xbf16>, vector<16x32xf32> -> vector<16x32xf32>
    %c0_9 = arith.constant 0 : index
    %c0_10 = arith.constant 0 : index
    %14 = vector.load %arg5[%c0_9, %c0_10] : memref<1x32xf32, #tpu.memory_space<vmem>>, vector<1x32xf32>
    %15 = vector.broadcast %14 : vector<1x32xf32> to vector<16x32xf32>
    %16 = arith.addf %13, %15 : vector<16x32xf32>
    %17 = arith.addf %16, %0 : vector<16x32xf32>
    %cst_11 = arith.constant dense<0.000000e+00> : vector<16xf32>
    %18 = vector.multi_reduction <add>, %17, %cst_11 [1] : vector<16x32xf32> to vector<16xf32>
    %19 = vector.shape_cast %18 : vector<16xf32> to vector<16x1xf32>
    %cst_12 = arith.constant 3.200000e+01 : f32
    %20 = vector.broadcast %cst_12 : f32 to vector<16x1xf32>
    %21 = arith.divf %19, %20 : vector<16x1xf32>
    %22 = vector.broadcast %21 : vector<16x1xf32> to vector<16x32xf32>
    %23 = arith.subf %17, %22 : vector<16x32xf32>
    %24 = arith.mulf %23, %23 : vector<16x32xf32>
    %cst_13 = arith.constant dense<0.000000e+00> : vector<16xf32>
    %25 = vector.multi_reduction <add>, %24, %cst_13 [1] : vector<16x32xf32> to vector<16xf32>
    %26 = vector.shape_cast %25 : vector<16xf32> to vector<16x1xf32>
    %cst_14 = arith.constant 3.200000e+01 : f32
    %27 = vector.broadcast %cst_14 : f32 to vector<16x1xf32>
    %28 = arith.divf %26, %27 : vector<16x1xf32>
    %29 = vector.broadcast %21 : vector<16x1xf32> to vector<16x32xf32>
    %30 = arith.subf %17, %29 : vector<16x32xf32>
    %cst_15 = arith.constant 9.99999974E-6 : f32
    %31 = vector.broadcast %cst_15 : f32 to vector<16x1xf32>
    %32 = arith.addf %28, %31 : vector<16x1xf32>
    %33 = math.rsqrt %32 : vector<16x1xf32>
    %34 = vector.broadcast %33 : vector<16x1xf32> to vector<16x32xf32>
    %35 = arith.mulf %30, %34 : vector<16x32xf32>
    %c0_16 = arith.constant 0 : index
    %c0_17 = arith.constant 0 : index
    %36 = vector.load %arg6[%c0_16, %c0_17] : memref<1x32xf32, #tpu.memory_space<vmem>>, vector<1x32xf32>
    %37 = vector.broadcast %36 : vector<1x32xf32> to vector<16x32xf32>
    %38 = arith.mulf %35, %37 : vector<16x32xf32>
    %c0_18 = arith.constant 0 : index
    %c0_19 = arith.constant 0 : index
    %39 = vector.load %arg7[%c0_18, %c0_19] : memref<1x32xf32, #tpu.memory_space<vmem>>, vector<1x32xf32>
    %40 = vector.broadcast %39 : vector<1x32xf32> to vector<16x32xf32>
    %41 = arith.addf %38, %40 : vector<16x32xf32>
    %c0_20 = arith.constant 0 : index
    %c0_21 = arith.constant 0 : index
    %42 = vector.load %arg8[%c0_20, %c0_21] : memref<16x32xf32, #tpu.memory_space<vmem>>, vector<16x32xf32>
    tpu.vector_store %arg8[%c0_20, %c0_21], %41 {strides = array<i32>} : memref<16x32xf32, #tpu.memory_space<vmem>>, vector<16x32xf32>,
    return
  }
  func.func @transform_0(%arg0: i32) -> (i32, i32) {
    %c0_i32 = arith.constant 0 : i32
    %c0_i32_0 = arith.constant 0 : i32
    return %arg0, %c0_i32 : i32, i32
  }
  func.func @transform_1(%arg0: i32) -> (i32, i32) {
    %c0_i32 = arith.constant 0 : i32
    %c0_i32_0 = arith.constant 0 : i32
    %c0_i32_1 = arith.constant 0 : i32
    return %c0_i32, %c0_i32_0 : i32, i32
  }
  func.func @transform_2(%arg0: i32) -> (i32, i32) {
    %c0_i32 = arith.constant 0 : i32
    %c0_i32_0 = arith.constant 0 : i32
    %c0_i32_1 = arith.constant 0 : i32
    return %c0_i32, %c0_i32_0 : i32, i32
  }
  func.func @transform_3(%arg0: i32) -> (i32, i32) {
    %c0_i32 = arith.constant 0 : i32
    %c0_i32_0 = arith.constant 0 : i32
    %c0_i32_1 = arith.constant 0 : i32
    return %c0_i32, %c0_i32_0 : i32, i32
  }
  func.func @transform_4(%arg0: i32) -> (i32, i32) {
    %c0_i32 = arith.constant 0 : i32
    %c0_i32_0 = arith.constant 0 : i32
    %c0_i32_1 = arith.constant 0 : i32
    return %c0_i32, %c0_i32_0 : i32, i32
  }
  func.func @transform_5(%arg0: i32) -> (i32, i32) {
    %c0_i32 = arith.constant 0 : i32
    %c0_i32_0 = arith.constant 0 : i32
    %c0_i32_1 = arith.constant 0 : i32
    return %c0_i32, %c0_i32_0 : i32, i32
  }
  func.func @transform_6(%arg0: i32) -> (i32, i32) {
    %c0_i32 = arith.constant 0 : i32
    %c0_i32_0 = arith.constant 0 : i32
    %c0_i32_1 = arith.constant 0 : i32
    return %c0_i32, %c0_i32_0 : i32, i32
  }
  func.func @transform_7(%arg0: i32) -> (i32, i32) {
    %c0_i32 = arith.constant 0 : i32
    %c0_i32_0 = arith.constant 0 : i32
    return %arg0, %c0_i32 : i32, i32
  }
}

module attributes {stable_mosaic.version = 11 : i64} {
  func.func @_self_attn_kernel(%arg0: i32, %arg1: memref<1x8x96xf32, #tpu.memory_space<vmem>>, %arg2: memref<1x8x8xi32, #tpu.memory_space<vmem>>, %arg3: memref<1x8x32xf32, #tpu.memory_space<vmem>>) attributes {dimension_semantics = [#tpu.dimension_semantics<parallel>], iteration_bounds = array<i64: 2>, scalar_prefetch = 0 : i64, scratch_operands = 0 : i64, tpu.core_type = #tpu.core_type<tc>, window_params = [{transform_indices = @transform_0, window_bounds = array<i64: 1, 8, 96>}, {transform_indices = @transform_1, window_bounds = array<i64: 1, 8, 8>}, {transform_indices = @transform_2, window_bounds = array<i64: 1, 8, 32>}]} {
    %c0 = arith.constant 0 : index
    %c0_0 = arith.constant 0 : index
    %c0_1 = arith.constant 0 : index
    %0 = vector.load %arg1[%c0, %c0_0, %c0_1] : memref<1x8x96xf32, #tpu.memory_space<vmem>>, vector<1x8x96xf32>
    %1 = vector.shape_cast %0 : vector<1x8x96xf32> to vector<8x96xf32>
    %2 = vector.extract_strided_slice %1 {offsets = [0, 0], sizes = [8, 32], strides = [1, 1]} : vector<8x96xf32> to vector<8x32xf32>
    %3 = vector.extract_strided_slice %1 {offsets = [0, 32], sizes = [8, 32], strides = [1, 1]} : vector<8x96xf32> to vector<8x32xf32>
    %4 = vector.extract_strided_slice %1 {offsets = [0, 64], sizes = [8, 32], strides = [1, 1]} : vector<8x96xf32> to vector<8x32xf32>
    %c0_2 = arith.constant 0 : index
    %c0_3 = arith.constant 0 : index
    %c0_4 = arith.constant 0 : index
    %5 = vector.load %arg2[%c0_2, %c0_3, %c0_4] : memref<1x8x8xi32, #tpu.memory_space<vmem>>, vector<1x8x8xi32>
    %6 = vector.shape_cast %5 : vector<1x8x8xi32> to vector<8x8xi32>
    %c0_i32 = arith.constant 0 : i32
    %7 = vector.broadcast %c0_i32 : i32 to vector<8x8xi32>
    %8 = arith.cmpi sgt, %6, %7 : vector<8x8xi32>
    %9 = vector.extract_strided_slice %2 {offsets = [0, 0], sizes = [8, 8], strides = [1, 1]} : vector<8x32xf32> to vector<8x8xf32>
    %10 = arith.truncf %9 : vector<8x8xf32> to vector<8x8xbf16>
    %11 = vector.extract_strided_slice %3 {offsets = [0, 0], sizes = [8, 8], strides = [1, 1]} : vector<8x32xf32> to vector<8x8xf32>
    %12 = arith.truncf %11 : vector<8x8xf32> to vector<8x8xbf16>
    %13 = vector.extract_strided_slice %4 {offsets = [0, 0], sizes = [8, 8], strides = [1, 1]} : vector<8x32xf32> to vector<8x8xf32>
    %14 = arith.truncf %13 : vector<8x8xf32> to vector<8x8xbf16>
    %cst = arith.constant dense<0.000000e+00> : vector<8x8xf32>
    %15 = tpu.matmul %10, %12, %cst {dimension_numbers = #tpu.dot_dimension_numbers<[1], [1], [0], [0], [0, 0, 1, 0], [], []>} : vector<8x8xbf16>, vector<8x8xbf16>, vector<8x8xf32> -> vector<8x8xf32>
    %cst_5 = arith.constant 0.353553385 : f32
    %16 = vector.broadcast %cst_5 : f32 to vector<8x8xf32>
    %17 = arith.mulf %15, %16 : vector<8x8xf32>
    %cst_6 = arith.constant -1.000000e+09 : f32
    %18 = vector.broadcast %cst_6 : f32 to vector<8x8xf32>
    %19 = arith.select %8, %18, %17 : vector<8x8xi1>, vector<8x8xf32>
    %cst_7 = arith.constant dense<0xFF800000> : vector<8xf32>
    %20 = vector.multi_reduction <maximumf>, %19, %cst_7 [1] : vector<8x8xf32> to vector<8xf32>
    %21 = vector.shape_cast %20 : vector<8xf32> to vector<8x1xf32>
    %22 = vector.broadcast %21 : vector<8x1xf32> to vector<8x8xf32>
    %23 = arith.subf %19, %22 : vector<8x8xf32>
    %24 = math.exp %23 : vector<8x8xf32>
    %cst_8 = arith.constant dense<0.000000e+00> : vector<8xf32>
    %25 = vector.multi_reduction <add>, %24, %cst_8 [1] : vector<8x8xf32> to vector<8xf32>
    %26 = vector.shape_cast %25 : vector<8xf32> to vector<8x1xf32>
    %27 = tpu.reciprocal %26 {approx = true} : vector<8x1xf32> -> vector<8x1xf32>
    %28 = vector.broadcast %27 : vector<8x1xf32> to vector<8x8xf32>
    %29 = arith.mulf %24, %28 : vector<8x8xf32>
    %30 = arith.truncf %29 : vector<8x8xf32> to vector<8x8xbf16>
    %cst_9 = arith.constant dense<0.000000e+00> : vector<8x8xf32>
    %31 = tpu.matmul %30, %14, %cst_9 {dimension_numbers = #tpu.dot_dimension_numbers<[1], [0], [0], [1], [0, 0, 1, 1], [], []>} : vector<8x8xbf16>, vector<8x8xbf16>, vector<8x8xf32> -> vector<8x8xf32>
    %32 = vector.extract_strided_slice %2 {offsets = [0, 8], sizes = [8, 8], strides = [1, 1]} : vector<8x32xf32> to vector<8x8xf32>
    %33 = arith.truncf %32 : vector<8x8xf32> to vector<8x8xbf16>
    %34 = vector.extract_strided_slice %3 {offsets = [0, 8], sizes = [8, 8], strides = [1, 1]} : vector<8x32xf32> to vector<8x8xf32>
    %35 = arith.truncf %34 : vector<8x8xf32> to vector<8x8xbf16>
    %36 = vector.extract_strided_slice %4 {offsets = [0, 8], sizes = [8, 8], strides = [1, 1]} : vector<8x32xf32> to vector<8x8xf32>
    %37 = arith.truncf %36 : vector<8x8xf32> to vector<8x8xbf16>
    %cst_10 = arith.constant dense<0.000000e+00> : vector<8x8xf32>
    %38 = tpu.matmul %33, %35, %cst_10 {dimension_numbers = #tpu.dot_dimension_numbers<[1], [1], [0], [0], [0, 0, 1, 0], [], []>} : vector<8x8xbf16>, vector<8x8xbf16>, vector<8x8xf32> -> vector<8x8xf32>
    %cst_11 = arith.constant 0.353553385 : f32
    %39 = vector.broadcast %cst_11 : f32 to vector<8x8xf32>
    %40 = arith.mulf %38, %39 : vector<8x8xf32>
    %cst_12 = arith.constant -1.000000e+09 : f32
    %41 = vector.broadcast %cst_12 : f32 to vector<8x8xf32>
    %42 = arith.select %8, %41, %40 : vector<8x8xi1>, vector<8x8xf32>
    %cst_13 = arith.constant dense<0xFF800000> : vector<8xf32>
    %43 = vector.multi_reduction <maximumf>, %42, %cst_13 [1] : vector<8x8xf32> to vector<8xf32>
    %44 = vector.shape_cast %43 : vector<8xf32> to vector<8x1xf32>
    %45 = vector.broadcast %44 : vector<8x1xf32> to vector<8x8xf32>
    %46 = arith.subf %42, %45 : vector<8x8xf32>
    %47 = math.exp %46 : vector<8x8xf32>
    %cst_14 = arith.constant dense<0.000000e+00> : vector<8xf32>
    %48 = vector.multi_reduction <add>, %47, %cst_14 [1] : vector<8x8xf32> to vector<8xf32>
    %49 = vector.shape_cast %48 : vector<8xf32> to vector<8x1xf32>
    %50 = tpu.reciprocal %49 {approx = true} : vector<8x1xf32> -> vector<8x1xf32>
    %51 = vector.broadcast %50 : vector<8x1xf32> to vector<8x8xf32>
    %52 = arith.mulf %47, %51 : vector<8x8xf32>
    %53 = arith.truncf %52 : vector<8x8xf32> to vector<8x8xbf16>
    %cst_15 = arith.constant dense<0.000000e+00> : vector<8x8xf32>
    %54 = tpu.matmul %53, %37, %cst_15 {dimension_numbers = #tpu.dot_dimension_numbers<[1], [0], [0], [1], [0, 0, 1, 1], [], []>} : vector<8x8xbf16>, vector<8x8xbf16>, vector<8x8xf32> -> vector<8x8xf32>
    %55 = vector.extract_strided_slice %2 {offsets = [0, 16], sizes = [8, 8], strides = [1, 1]} : vector<8x32xf32> to vector<8x8xf32>
    %56 = arith.truncf %55 : vector<8x8xf32> to vector<8x8xbf16>
    %57 = vector.extract_strided_slice %3 {offsets = [0, 16], sizes = [8, 8], strides = [1, 1]} : vector<8x32xf32> to vector<8x8xf32>
    %58 = arith.truncf %57 : vector<8x8xf32> to vector<8x8xbf16>
    %59 = vector.extract_strided_slice %4 {offsets = [0, 16], sizes = [8, 8], strides = [1, 1]} : vector<8x32xf32> to vector<8x8xf32>
    %60 = arith.truncf %59 : vector<8x8xf32> to vector<8x8xbf16>
    %cst_16 = arith.constant dense<0.000000e+00> : vector<8x8xf32>
    %61 = tpu.matmul %56, %58, %cst_16 {dimension_numbers = #tpu.dot_dimension_numbers<[1], [1], [0], [0], [0, 0, 1, 0], [], []>} : vector<8x8xbf16>, vector<8x8xbf16>, vector<8x8xf32> -> vector<8x8xf32>
    %cst_17 = arith.constant 0.353553385 : f32
    %62 = vector.broadcast %cst_17 : f32 to vector<8x8xf32>
    %63 = arith.mulf %61, %62 : vector<8x8xf32>
    %cst_18 = arith.constant -1.000000e+09 : f32
    %64 = vector.broadcast %cst_18 : f32 to vector<8x8xf32>
    %65 = arith.select %8, %64, %63 : vector<8x8xi1>, vector<8x8xf32>
    %cst_19 = arith.constant dense<0xFF800000> : vector<8xf32>
    %66 = vector.multi_reduction <maximumf>, %65, %cst_19 [1] : vector<8x8xf32> to vector<8xf32>
    %67 = vector.shape_cast %66 : vector<8xf32> to vector<8x1xf32>
    %68 = vector.broadcast %67 : vector<8x1xf32> to vector<8x8xf32>
    %69 = arith.subf %65, %68 : vector<8x8xf32>
    %70 = math.exp %69 : vector<8x8xf32>
    %cst_20 = arith.constant dense<0.000000e+00> : vector<8xf32>
    %71 = vector.multi_reduction <add>, %70, %cst_20 [1] : vector<8x8xf32> to vector<8xf32>
    %72 = vector.shape_cast %71 : vector<8xf32> to vector<8x1xf32>
    %73 = tpu.reciprocal %72 {approx = true} : vector<8x1xf32> -> vector<8x1xf32>
    %74 = vector.broadcast %73 : vector<8x1xf32> to vector<8x8xf32>
    %75 = arith.mulf %70, %74 : vector<8x8xf32>
    %76 = arith.truncf %75 : vector<8x8xf32> to vector<8x8xbf16>
    %cst_21 = arith.constant dense<0.000000e+00> : vector<8x8xf32>
    %77 = tpu.matmul %76, %60, %cst_21 {dimension_numbers = #tpu.dot_dimension_numbers<[1], [0], [0], [1], [0, 0, 1, 1], [], []>} : vector<8x8xbf16>, vector<8x8xbf16>, vector<8x8xf32> -> vector<8x8xf32>
    %78 = vector.extract_strided_slice %2 {offsets = [0, 24], sizes = [8, 8], strides = [1, 1]} : vector<8x32xf32> to vector<8x8xf32>
    %79 = arith.truncf %78 : vector<8x8xf32> to vector<8x8xbf16>
    %80 = vector.extract_strided_slice %3 {offsets = [0, 24], sizes = [8, 8], strides = [1, 1]} : vector<8x32xf32> to vector<8x8xf32>
    %81 = arith.truncf %80 : vector<8x8xf32> to vector<8x8xbf16>
    %82 = vector.extract_strided_slice %4 {offsets = [0, 24], sizes = [8, 8], strides = [1, 1]} : vector<8x32xf32> to vector<8x8xf32>
    %83 = arith.truncf %82 : vector<8x8xf32> to vector<8x8xbf16>
    %cst_22 = arith.constant dense<0.000000e+00> : vector<8x8xf32>
    %84 = tpu.matmul %79, %81, %cst_22 {dimension_numbers = #tpu.dot_dimension_numbers<[1], [1], [0], [0], [0, 0, 1, 0], [], []>} : vector<8x8xbf16>, vector<8x8xbf16>, vector<8x8xf32> -> vector<8x8xf32>
    %cst_23 = arith.constant 0.353553385 : f32
    %85 = vector.broadcast %cst_23 : f32 to vector<8x8xf32>
    %86 = arith.mulf %84, %85 : vector<8x8xf32>
    %cst_24 = arith.constant -1.000000e+09 : f32
    %87 = vector.broadcast %cst_24 : f32 to vector<8x8xf32>
    %88 = arith.select %8, %87, %86 : vector<8x8xi1>, vector<8x8xf32>
    %cst_25 = arith.constant dense<0xFF800000> : vector<8xf32>
    %89 = vector.multi_reduction <maximumf>, %88, %cst_25 [1] : vector<8x8xf32> to vector<8xf32>
    %90 = vector.shape_cast %89 : vector<8xf32> to vector<8x1xf32>
    %91 = vector.broadcast %90 : vector<8x1xf32> to vector<8x8xf32>
    %92 = arith.subf %88, %91 : vector<8x8xf32>
    %93 = math.exp %92 : vector<8x8xf32>
    %cst_26 = arith.constant dense<0.000000e+00> : vector<8xf32>
    %94 = vector.multi_reduction <add>, %93, %cst_26 [1] : vector<8x8xf32> to vector<8xf32>
    %95 = vector.shape_cast %94 : vector<8xf32> to vector<8x1xf32>
    %96 = tpu.reciprocal %95 {approx = true} : vector<8x1xf32> -> vector<8x1xf32>
    %97 = vector.broadcast %96 : vector<8x1xf32> to vector<8x8xf32>
    %98 = arith.mulf %93, %97 : vector<8x8xf32>
    %99 = arith.truncf %98 : vector<8x8xf32> to vector<8x8xbf16>
    %cst_27 = arith.constant dense<0.000000e+00> : vector<8x8xf32>
    %100 = tpu.matmul %99, %83, %cst_27 {dimension_numbers = #tpu.dot_dimension_numbers<[1], [0], [0], [1], [0, 0, 1, 1], [], []>} : vector<8x8xbf16>, vector<8x8xbf16>, vector<8x8xf32> -> vector<8x8xf32>
    %101 = tpu.concatenate %31, %54, %77, %100 in 1 : vector<8x8xf32>, vector<8x8xf32>, vector<8x8xf32>, vector<8x8xf32> -> vector<8x32xf32>
    %c0_28 = arith.constant 0 : index
    %c0_29 = arith.constant 0 : index
    %c0_30 = arith.constant 0 : index
    %102 = vector.load %arg3[%c0_28, %c0_29, %c0_30] : memref<1x8x32xf32, #tpu.memory_space<vmem>>, vector<1x8x32xf32>
    %103 = vector.shape_cast %102 : vector<1x8x32xf32> to vector<8x32xf32>
    %104 = vector.shape_cast %101 : vector<8x32xf32> to vector<1x8x32xf32>
    tpu.vector_store %arg3[%c0_28, %c0_29, %c0_30], %104 {strides = array<i32>} : memref<1x8x32xf32, #tpu.memory_space<vmem>>, vector<1x8x32xf32>,
    return
  }
  func.func @transform_0(%arg0: i32) -> (i32, i32, i32) {
    %c0_i32 = arith.constant 0 : i32
    %c0_i32_0 = arith.constant 0 : i32
    %c0_i32_1 = arith.constant 0 : i32
    return %arg0, %c0_i32, %c0_i32_0 : i32, i32, i32
  }
  func.func @transform_1(%arg0: i32) -> (i32, i32, i32) {
    %c0_i32 = arith.constant 0 : i32
    %c0_i32_0 = arith.constant 0 : i32
    %c0_i32_1 = arith.constant 0 : i32
    return %arg0, %c0_i32, %c0_i32_0 : i32, i32, i32
  }
  func.func @transform_2(%arg0: i32) -> (i32, i32, i32) {
    %c0_i32 = arith.constant 0 : i32
    %c0_i32_0 = arith.constant 0 : i32
    %c0_i32_1 = arith.constant 0 : i32
    return %arg0, %c0_i32, %c0_i32_0 : i32, i32, i32
  }
}

module attributes {stable_mosaic.version = 11 : i64} {
  func.func @_matmul_bias_kernel(%arg0: i32, %arg1: i32, %arg2: i32, %arg3: memref<16x32xf32, #tpu.memory_space<vmem>>, %arg4: memref<32x64xf32, #tpu.memory_space<vmem>>, %arg5: memref<1x64xf32, #tpu.memory_space<vmem>>, %arg6: memref<16x64xf32, #tpu.memory_space<vmem>>, %arg7: memref<16x64xf32, #tpu.memory_space<vmem>>) attributes {dimension_semantics = [#tpu.dimension_semantics<parallel>, #tpu.dimension_semantics<parallel>, #tpu.dimension_semantics<arbitrary>], iteration_bounds = array<i64: 1, 1, 1>, scalar_prefetch = 0 : i64, scratch_operands = 1 : i64, tpu.core_type = #tpu.core_type<tc>, window_params = [{transform_indices = @transform_0, window_bounds = array<i64: 16, 32>}, {transform_indices = @transform_1, window_bounds = array<i64: 32, 64>}, {transform_indices = @transform_2, window_bounds = array<i64: 1, 64>}, {transform_indices = @transform_3, window_bounds = array<i64: 16, 64>}]} {
    %c0_i32 = arith.constant 0 : i32
    %0 = arith.cmpi eq, %arg2, %c0_i32 : i32
    %1 = arith.extui %0 : i1 to i32
    %c0_i32_0 = arith.constant 0 : i32
    %2 = arith.cmpi ne, %1, %c0_i32_0 : i32
    scf.if %2 {
      %cst_10 = arith.constant 0.000000e+00 : f32
      %14 = vector.broadcast %cst_10 : f32 to vector<16x64xf32>
      %c0_11 = arith.constant 0 : index
      %c0_12 = arith.constant 0 : index
      %15 = vector.load %arg7[%c0_11, %c0_12] : memref<16x64xf32, #tpu.memory_space<vmem>>, vector<16x64xf32>
      tpu.vector_store %arg7[%c0_11, %c0_12], %14 {strides = array<i32>} : memref<16x64xf32, #tpu.memory_space<vmem>>, vector<16x64xf32>,
    } else {
    }
    %c0 = arith.constant 0 : index
    %c0_1 = arith.constant 0 : index
    %3 = vector.load %arg7[%c0, %c0_1] : memref<16x64xf32, #tpu.memory_space<vmem>>, vector<16x64xf32>
    %c0_2 = arith.constant 0 : index
    %c0_3 = arith.constant 0 : index
    %4 = vector.load %arg3[%c0_2, %c0_3] : memref<16x32xf32, #tpu.memory_space<vmem>>, vector<16x32xf32>
    %5 = arith.truncf %4 : vector<16x32xf32> to vector<16x32xbf16>
    %c0_4 = arith.constant 0 : index
    %c0_5 = arith.constant 0 : index
    %6 = vector.load %arg4[%c0_4, %c0_5] : memref<32x64xf32, #tpu.memory_space<vmem>>, vector<32x64xf32>
    %7 = arith.truncf %6 : vector<32x64xf32> to vector<32x64xbf16>
    %cst = arith.constant dense<0.000000e+00> : vector<16x64xf32>
    %8 = tpu.matmul %5, %7, %cst {dimension_numbers = #tpu.dot_dimension_numbers<[1], [0], [0], [1], [0, 0, 1, 1], [], []>} : vector<16x32xbf16>, vector<32x64xbf16>, vector<16x64xf32> -> vector<16x64xf32>
    %9 = arith.addf %3, %8 : vector<16x64xf32>
    %c0_6 = arith.constant 0 : index
    %c0_7 = arith.constant 0 : index
    %10 = vector.load %arg7[%c0_6, %c0_7] : memref<16x64xf32, #tpu.memory_space<vmem>>, vector<16x64xf32>
    tpu.vector_store %arg7[%c0_6, %c0_7], %9 {strides = array<i32>} : memref<16x64xf32, #tpu.memory_space<vmem>>, vector<16x64xf32>,
    %c0_i32_8 = arith.constant 0 : i32
    %11 = arith.cmpi eq, %arg2, %c0_i32_8 : i32
    %12 = arith.extui %11 : i1 to i32
    %c0_i32_9 = arith.constant 0 : i32
    %13 = arith.cmpi ne, %12, %c0_i32_9 : i32
    scf.if %13 {
      %c0_10 = arith.constant 0 : index
      %c0_11 = arith.constant 0 : index
      %14 = vector.load %arg7[%c0_10, %c0_11] : memref<16x64xf32, #tpu.memory_space<vmem>>, vector<16x64xf32>
      %c0_12 = arith.constant 0 : index
      %c0_13 = arith.constant 0 : index
      %15 = vector.load %arg5[%c0_12, %c0_13] : memref<1x64xf32, #tpu.memory_space<vmem>>, vector<1x64xf32>
      %16 = vector.broadcast %15 : vector<1x64xf32> to vector<16x64xf32>
      %17 = arith.addf %14, %16 : vector<16x64xf32>
      %c0_14 = arith.constant 0 : index
      %c0_15 = arith.constant 0 : index
      %18 = vector.load %arg6[%c0_14, %c0_15] : memref<16x64xf32, #tpu.memory_space<vmem>>, vector<16x64xf32>
      tpu.vector_store %arg6[%c0_14, %c0_15], %17 {strides = array<i32>} : memref<16x64xf32, #tpu.memory_space<vmem>>, vector<16x64xf32>,
    } else {
    }
    return
  }
  func.func @transform_0(%arg0: i32, %arg1: i32, %arg2: i32) -> (i32, i32) {
    %c0_i32 = arith.constant 0 : i32
    return %arg0, %arg2 : i32, i32
  }
  func.func @transform_1(%arg0: i32, %arg1: i32, %arg2: i32) -> (i32, i32) {
    %c0_i32 = arith.constant 0 : i32
    return %arg2, %arg1 : i32, i32
  }
  func.func @transform_2(%arg0: i32, %arg1: i32, %arg2: i32) -> (i32, i32) {
    %c0_i32 = arith.constant 0 : i32
    %c0_i32_0 = arith.constant 0 : i32
    return %c0_i32, %arg1 : i32, i32
  }
  func.func @transform_3(%arg0: i32, %arg1: i32, %arg2: i32) -> (i32, i32) {
    %c0_i32 = arith.constant 0 : i32
    return %arg0, %arg1 : i32, i32
  }
}

module attributes {stable_mosaic.version = 11 : i64} {
  func.func @_matmul_bias_kernel(%arg0: i32, %arg1: i32, %arg2: i32, %arg3: memref<16x32xf32, #tpu.memory_space<vmem>>, %arg4: memref<32x32xf32, #tpu.memory_space<vmem>>, %arg5: memref<1x32xf32, #tpu.memory_space<vmem>>, %arg6: memref<16x32xf32, #tpu.memory_space<vmem>>, %arg7: memref<16x32xf32, #tpu.memory_space<vmem>>) attributes {dimension_semantics = [#tpu.dimension_semantics<parallel>, #tpu.dimension_semantics<parallel>, #tpu.dimension_semantics<arbitrary>], iteration_bounds = array<i64: 1, 1, 1>, scalar_prefetch = 0 : i64, scratch_operands = 1 : i64, tpu.core_type = #tpu.core_type<tc>, window_params = [{transform_indices = @transform_0, window_bounds = array<i64: 16, 32>}, {transform_indices = @transform_1, window_bounds = array<i64: 32, 32>}, {transform_indices = @transform_2, window_bounds = array<i64: 1, 32>}, {transform_indices = @transform_3, window_bounds = array<i64: 16, 32>}]} {
    %c0_i32 = arith.constant 0 : i32
    %0 = arith.cmpi eq, %arg2, %c0_i32 : i32
    %1 = arith.extui %0 : i1 to i32
    %c0_i32_0 = arith.constant 0 : i32
    %2 = arith.cmpi ne, %1, %c0_i32_0 : i32
    scf.if %2 {
      %cst_10 = arith.constant 0.000000e+00 : f32
      %14 = vector.broadcast %cst_10 : f32 to vector<16x32xf32>
      %c0_11 = arith.constant 0 : index
      %c0_12 = arith.constant 0 : index
      %15 = vector.load %arg7[%c0_11, %c0_12] : memref<16x32xf32, #tpu.memory_space<vmem>>, vector<16x32xf32>
      tpu.vector_store %arg7[%c0_11, %c0_12], %14 {strides = array<i32>} : memref<16x32xf32, #tpu.memory_space<vmem>>, vector<16x32xf32>,
    } else {
    }
    %c0 = arith.constant 0 : index
    %c0_1 = arith.constant 0 : index
    %3 = vector.load %arg7[%c0, %c0_1] : memref<16x32xf32, #tpu.memory_space<vmem>>, vector<16x32xf32>
    %c0_2 = arith.constant 0 : index
    %c0_3 = arith.constant 0 : index
    %4 = vector.load %arg3[%c0_2, %c0_3] : memref<16x32xf32, #tpu.memory_space<vmem>>, vector<16x32xf32>
    %5 = arith.truncf %4 : vector<16x32xf32> to vector<16x32xbf16>
    %c0_4 = arith.constant 0 : index
    %c0_5 = arith.constant 0 : index
    %6 = vector.load %arg4[%c0_4, %c0_5] : memref<32x32xf32, #tpu.memory_space<vmem>>, vector<32x32xf32>
    %7 = arith.truncf %6 : vector<32x32xf32> to vector<32x32xbf16>
    %cst = arith.constant dense<0.000000e+00> : vector<16x32xf32>
    %8 = tpu.matmul %5, %7, %cst {dimension_numbers = #tpu.dot_dimension_numbers<[1], [0], [0], [1], [0, 0, 1, 1], [], []>} : vector<16x32xbf16>, vector<32x32xbf16>, vector<16x32xf32> -> vector<16x32xf32>
    %9 = arith.addf %3, %8 : vector<16x32xf32>
    %c0_6 = arith.constant 0 : index
    %c0_7 = arith.constant 0 : index
    %10 = vector.load %arg7[%c0_6, %c0_7] : memref<16x32xf32, #tpu.memory_space<vmem>>, vector<16x32xf32>
    tpu.vector_store %arg7[%c0_6, %c0_7], %9 {strides = array<i32>} : memref<16x32xf32, #tpu.memory_space<vmem>>, vector<16x32xf32>,
    %c0_i32_8 = arith.constant 0 : i32
    %11 = arith.cmpi eq, %arg2, %c0_i32_8 : i32
    %12 = arith.extui %11 : i1 to i32
    %c0_i32_9 = arith.constant 0 : i32
    %13 = arith.cmpi ne, %12, %c0_i32_9 : i32
    scf.if %13 {
      %c0_10 = arith.constant 0 : index
      %c0_11 = arith.constant 0 : index
      %14 = vector.load %arg7[%c0_10, %c0_11] : memref<16x32xf32, #tpu.memory_space<vmem>>, vector<16x32xf32>
      %c0_12 = arith.constant 0 : index
      %c0_13 = arith.constant 0 : index
      %15 = vector.load %arg5[%c0_12, %c0_13] : memref<1x32xf32, #tpu.memory_space<vmem>>, vector<1x32xf32>
      %16 = vector.broadcast %15 : vector<1x32xf32> to vector<16x32xf32>
      %17 = arith.addf %14, %16 : vector<16x32xf32>
      %c0_14 = arith.constant 0 : index
      %c0_15 = arith.constant 0 : index
      %18 = vector.load %arg6[%c0_14, %c0_15] : memref<16x32xf32, #tpu.memory_space<vmem>>, vector<16x32xf32>
      tpu.vector_store %arg6[%c0_14, %c0_15], %17 {strides = array<i32>} : memref<16x32xf32, #tpu.memory_space<vmem>>, vector<16x32xf32>,
    } else {
    }
    return
  }
  func.func @transform_0(%arg0: i32, %arg1: i32, %arg2: i32) -> (i32, i32) {
    %c0_i32 = arith.constant 0 : i32
    return %arg0, %arg2 : i32, i32
  }
  func.func @transform_1(%arg0: i32, %arg1: i32, %arg2: i32) -> (i32, i32) {
    %c0_i32 = arith.constant 0 : i32
    return %arg2, %arg1 : i32, i32
  }
  func.func @transform_2(%arg0: i32, %arg1: i32, %arg2: i32) -> (i32, i32) {
    %c0_i32 = arith.constant 0 : i32
    %c0_i32_0 = arith.constant 0 : i32
    return %c0_i32, %arg1 : i32, i32
  }
  func.func @transform_3(%arg0: i32, %arg1: i32, %arg2: i32) -> (i32, i32) {
    %c0_i32 = arith.constant 0 : i32
    return %arg0, %arg1 : i32, i32
  }
}

module attributes {stable_mosaic.version = 11 : i64} {
  func.func @_cross_attn_kernel(%arg0: i32, %arg1: memref<1x8x32xf32, #tpu.memory_space<vmem>>, %arg2: memref<1x8x64xf32, #tpu.memory_space<vmem>>, %arg3: memref<1x8x8xi32, #tpu.memory_space<vmem>>, %arg4: memref<1x8x32xf32, #tpu.memory_space<vmem>>) attributes {dimension_semantics = [#tpu.dimension_semantics<parallel>], iteration_bounds = array<i64: 2>, scalar_prefetch = 0 : i64, scratch_operands = 0 : i64, tpu.core_type = #tpu.core_type<tc>, window_params = [{transform_indices = @transform_0, window_bounds = array<i64: 1, 8, 32>}, {transform_indices = @transform_1, window_bounds = array<i64: 1, 8, 64>}, {transform_indices = @transform_2, window_bounds = array<i64: 1, 8, 8>}, {transform_indices = @transform_3, window_bounds = array<i64: 1, 8, 32>}]} {
    %c0 = arith.constant 0 : index
    %c0_0 = arith.constant 0 : index
    %c0_1 = arith.constant 0 : index
    %0 = vector.load %arg2[%c0, %c0_0, %c0_1] : memref<1x8x64xf32, #tpu.memory_space<vmem>>, vector<1x8x64xf32>
    %1 = vector.shape_cast %0 : vector<1x8x64xf32> to vector<8x64xf32>
    %2 = vector.extract_strided_slice %1 {offsets = [0, 0], sizes = [8, 32], strides = [1, 1]} : vector<8x64xf32> to vector<8x32xf32>
    %3 = vector.extract_strided_slice %1 {offsets = [0, 32], sizes = [8, 32], strides = [1, 1]} : vector<8x64xf32> to vector<8x32xf32>
    %c0_2 = arith.constant 0 : index
    %c0_3 = arith.constant 0 : index
    %c0_4 = arith.constant 0 : index
    %4 = vector.load %arg1[%c0_2, %c0_3, %c0_4] : memref<1x8x32xf32, #tpu.memory_space<vmem>>, vector<1x8x32xf32>
    %5 = vector.shape_cast %4 : vector<1x8x32xf32> to vector<8x32xf32>
    %c0_5 = arith.constant 0 : index
    %c0_6 = arith.constant 0 : index
    %c0_7 = arith.constant 0 : index
    %6 = vector.load %arg3[%c0_5, %c0_6, %c0_7] : memref<1x8x8xi32, #tpu.memory_space<vmem>>, vector<1x8x8xi32>
    %7 = vector.shape_cast %6 : vector<1x8x8xi32> to vector<8x8xi32>
    %c0_i32 = arith.constant 0 : i32
    %8 = vector.broadcast %c0_i32 : i32 to vector<8x8xi32>
    %9 = arith.cmpi sgt, %7, %8 : vector<8x8xi32>
    %10 = vector.extract_strided_slice %5 {offsets = [0, 0], sizes = [8, 8], strides = [1, 1]} : vector<8x32xf32> to vector<8x8xf32>
    %11 = arith.truncf %10 : vector<8x8xf32> to vector<8x8xbf16>
    %12 = vector.extract_strided_slice %2 {offsets = [0, 0], sizes = [8, 8], strides = [1, 1]} : vector<8x32xf32> to vector<8x8xf32>
    %13 = arith.truncf %12 : vector<8x8xf32> to vector<8x8xbf16>
    %14 = vector.extract_strided_slice %3 {offsets = [0, 0], sizes = [8, 8], strides = [1, 1]} : vector<8x32xf32> to vector<8x8xf32>
    %15 = arith.truncf %14 : vector<8x8xf32> to vector<8x8xbf16>
    %cst = arith.constant dense<0.000000e+00> : vector<8x8xf32>
    %16 = tpu.matmul %11, %13, %cst {dimension_numbers = #tpu.dot_dimension_numbers<[1], [1], [0], [0], [0, 0, 1, 0], [], []>} : vector<8x8xbf16>, vector<8x8xbf16>, vector<8x8xf32> -> vector<8x8xf32>
    %cst_8 = arith.constant 0.353553385 : f32
    %17 = vector.broadcast %cst_8 : f32 to vector<8x8xf32>
    %18 = arith.mulf %16, %17 : vector<8x8xf32>
    %cst_9 = arith.constant -1.000000e+09 : f32
    %19 = vector.broadcast %cst_9 : f32 to vector<8x8xf32>
    %20 = arith.select %9, %19, %18 : vector<8x8xi1>, vector<8x8xf32>
    %cst_10 = arith.constant dense<0xFF800000> : vector<8xf32>
    %21 = vector.multi_reduction <maximumf>, %20, %cst_10 [1] : vector<8x8xf32> to vector<8xf32>
    %22 = vector.shape_cast %21 : vector<8xf32> to vector<8x1xf32>
    %23 = vector.broadcast %22 : vector<8x1xf32> to vector<8x8xf32>
    %24 = arith.subf %20, %23 : vector<8x8xf32>
    %25 = math.exp %24 : vector<8x8xf32>
    %cst_11 = arith.constant dense<0.000000e+00> : vector<8xf32>
    %26 = vector.multi_reduction <add>, %25, %cst_11 [1] : vector<8x8xf32> to vector<8xf32>
    %27 = vector.shape_cast %26 : vector<8xf32> to vector<8x1xf32>
    %28 = tpu.reciprocal %27 {approx = true} : vector<8x1xf32> -> vector<8x1xf32>
    %29 = vector.broadcast %28 : vector<8x1xf32> to vector<8x8xf32>
    %30 = arith.mulf %25, %29 : vector<8x8xf32>
    %31 = arith.truncf %30 : vector<8x8xf32> to vector<8x8xbf16>
    %cst_12 = arith.constant dense<0.000000e+00> : vector<8x8xf32>
    %32 = tpu.matmul %31, %15, %cst_12 {dimension_numbers = #tpu.dot_dimension_numbers<[1], [0], [0], [1], [0, 0, 1, 1], [], []>} : vector<8x8xbf16>, vector<8x8xbf16>, vector<8x8xf32> -> vector<8x8xf32>
    %33 = vector.extract_strided_slice %5 {offsets = [0, 8], sizes = [8, 8], strides = [1, 1]} : vector<8x32xf32> to vector<8x8xf32>
    %34 = arith.truncf %33 : vector<8x8xf32> to vector<8x8xbf16>
    %35 = vector.extract_strided_slice %2 {offsets = [0, 8], sizes = [8, 8], strides = [1, 1]} : vector<8x32xf32> to vector<8x8xf32>
    %36 = arith.truncf %35 : vector<8x8xf32> to vector<8x8xbf16>
    %37 = vector.extract_strided_slice %3 {offsets = [0, 8], sizes = [8, 8], strides = [1, 1]} : vector<8x32xf32> to vector<8x8xf32>
    %38 = arith.truncf %37 : vector<8x8xf32> to vector<8x8xbf16>
    %cst_13 = arith.constant dense<0.000000e+00> : vector<8x8xf32>
    %39 = tpu.matmul %34, %36, %cst_13 {dimension_numbers = #tpu.dot_dimension_numbers<[1], [1], [0], [0], [0, 0, 1, 0], [], []>} : vector<8x8xbf16>, vector<8x8xbf16>, vector<8x8xf32> -> vector<8x8xf32>
    %cst_14 = arith.constant 0.353553385 : f32
    %40 = vector.broadcast %cst_14 : f32 to vector<8x8xf32>
    %41 = arith.mulf %39, %40 : vector<8x8xf32>
    %cst_15 = arith.constant -1.000000e+09 : f32
    %42 = vector.broadcast %cst_15 : f32 to vector<8x8xf32>
    %43 = arith.select %9, %42, %41 : vector<8x8xi1>, vector<8x8xf32>
    %cst_16 = arith.constant dense<0xFF800000> : vector<8xf32>
    %44 = vector.multi_reduction <maximumf>, %43, %cst_16 [1] : vector<8x8xf32> to vector<8xf32>
    %45 = vector.shape_cast %44 : vector<8xf32> to vector<8x1xf32>
    %46 = vector.broadcast %45 : vector<8x1xf32> to vector<8x8xf32>
    %47 = arith.subf %43, %46 : vector<8x8xf32>
    %48 = math.exp %47 : vector<8x8xf32>
    %cst_17 = arith.constant dense<0.000000e+00> : vector<8xf32>
    %49 = vector.multi_reduction <add>, %48, %cst_17 [1] : vector<8x8xf32> to vector<8xf32>
    %50 = vector.shape_cast %49 : vector<8xf32> to vector<8x1xf32>
    %51 = tpu.reciprocal %50 {approx = true} : vector<8x1xf32> -> vector<8x1xf32>
    %52 = vector.broadcast %51 : vector<8x1xf32> to vector<8x8xf32>
    %53 = arith.mulf %48, %52 : vector<8x8xf32>
    %54 = arith.truncf %53 : vector<8x8xf32> to vector<8x8xbf16>
    %cst_18 = arith.constant dense<0.000000e+00> : vector<8x8xf32>
    %55 = tpu.matmul %54, %38, %cst_18 {dimension_numbers = #tpu.dot_dimension_numbers<[1], [0], [0], [1], [0, 0, 1, 1], [], []>} : vector<8x8xbf16>, vector<8x8xbf16>, vector<8x8xf32> -> vector<8x8xf32>
    %56 = vector.extract_strided_slice %5 {offsets = [0, 16], sizes = [8, 8], strides = [1, 1]} : vector<8x32xf32> to vector<8x8xf32>
    %57 = arith.truncf %56 : vector<8x8xf32> to vector<8x8xbf16>
    %58 = vector.extract_strided_slice %2 {offsets = [0, 16], sizes = [8, 8], strides = [1, 1]} : vector<8x32xf32> to vector<8x8xf32>
    %59 = arith.truncf %58 : vector<8x8xf32> to vector<8x8xbf16>
    %60 = vector.extract_strided_slice %3 {offsets = [0, 16], sizes = [8, 8], strides = [1, 1]} : vector<8x32xf32> to vector<8x8xf32>
    %61 = arith.truncf %60 : vector<8x8xf32> to vector<8x8xbf16>
    %cst_19 = arith.constant dense<0.000000e+00> : vector<8x8xf32>
    %62 = tpu.matmul %57, %59, %cst_19 {dimension_numbers = #tpu.dot_dimension_numbers<[1], [1], [0], [0], [0, 0, 1, 0], [], []>} : vector<8x8xbf16>, vector<8x8xbf16>, vector<8x8xf32> -> vector<8x8xf32>
    %cst_20 = arith.constant 0.353553385 : f32
    %63 = vector.broadcast %cst_20 : f32 to vector<8x8xf32>
    %64 = arith.mulf %62, %63 : vector<8x8xf32>
    %cst_21 = arith.constant -1.000000e+09 : f32
    %65 = vector.broadcast %cst_21 : f32 to vector<8x8xf32>
    %66 = arith.select %9, %65, %64 : vector<8x8xi1>, vector<8x8xf32>
    %cst_22 = arith.constant dense<0xFF800000> : vector<8xf32>
    %67 = vector.multi_reduction <maximumf>, %66, %cst_22 [1] : vector<8x8xf32> to vector<8xf32>
    %68 = vector.shape_cast %67 : vector<8xf32> to vector<8x1xf32>
    %69 = vector.broadcast %68 : vector<8x1xf32> to vector<8x8xf32>
    %70 = arith.subf %66, %69 : vector<8x8xf32>
    %71 = math.exp %70 : vector<8x8xf32>
    %cst_23 = arith.constant dense<0.000000e+00> : vector<8xf32>
    %72 = vector.multi_reduction <add>, %71, %cst_23 [1] : vector<8x8xf32> to vector<8xf32>
    %73 = vector.shape_cast %72 : vector<8xf32> to vector<8x1xf32>
    %74 = tpu.reciprocal %73 {approx = true} : vector<8x1xf32> -> vector<8x1xf32>
    %75 = vector.broadcast %74 : vector<8x1xf32> to vector<8x8xf32>
    %76 = arith.mulf %71, %75 : vector<8x8xf32>
    %77 = arith.truncf %76 : vector<8x8xf32> to vector<8x8xbf16>
    %cst_24 = arith.constant dense<0.000000e+00> : vector<8x8xf32>
    %78 = tpu.matmul %77, %61, %cst_24 {dimension_numbers = #tpu.dot_dimension_numbers<[1], [0], [0], [1], [0, 0, 1, 1], [], []>} : vector<8x8xbf16>, vector<8x8xbf16>, vector<8x8xf32> -> vector<8x8xf32>
    %79 = vector.extract_strided_slice %5 {offsets = [0, 24], sizes = [8, 8], strides = [1, 1]} : vector<8x32xf32> to vector<8x8xf32>
    %80 = arith.truncf %79 : vector<8x8xf32> to vector<8x8xbf16>
    %81 = vector.extract_strided_slice %2 {offsets = [0, 24], sizes = [8, 8], strides = [1, 1]} : vector<8x32xf32> to vector<8x8xf32>
    %82 = arith.truncf %81 : vector<8x8xf32> to vector<8x8xbf16>
    %83 = vector.extract_strided_slice %3 {offsets = [0, 24], sizes = [8, 8], strides = [1, 1]} : vector<8x32xf32> to vector<8x8xf32>
    %84 = arith.truncf %83 : vector<8x8xf32> to vector<8x8xbf16>
    %cst_25 = arith.constant dense<0.000000e+00> : vector<8x8xf32>
    %85 = tpu.matmul %80, %82, %cst_25 {dimension_numbers = #tpu.dot_dimension_numbers<[1], [1], [0], [0], [0, 0, 1, 0], [], []>} : vector<8x8xbf16>, vector<8x8xbf16>, vector<8x8xf32> -> vector<8x8xf32>
    %cst_26 = arith.constant 0.353553385 : f32
    %86 = vector.broadcast %cst_26 : f32 to vector<8x8xf32>
    %87 = arith.mulf %85, %86 : vector<8x8xf32>
    %cst_27 = arith.constant -1.000000e+09 : f32
    %88 = vector.broadcast %cst_27 : f32 to vector<8x8xf32>
    %89 = arith.select %9, %88, %87 : vector<8x8xi1>, vector<8x8xf32>
    %cst_28 = arith.constant dense<0xFF800000> : vector<8xf32>
    %90 = vector.multi_reduction <maximumf>, %89, %cst_28 [1] : vector<8x8xf32> to vector<8xf32>
    %91 = vector.shape_cast %90 : vector<8xf32> to vector<8x1xf32>
    %92 = vector.broadcast %91 : vector<8x1xf32> to vector<8x8xf32>
    %93 = arith.subf %89, %92 : vector<8x8xf32>
    %94 = math.exp %93 : vector<8x8xf32>
    %cst_29 = arith.constant dense<0.000000e+00> : vector<8xf32>
    %95 = vector.multi_reduction <add>, %94, %cst_29 [1] : vector<8x8xf32> to vector<8xf32>
    %96 = vector.shape_cast %95 : vector<8xf32> to vector<8x1xf32>
    %97 = tpu.reciprocal %96 {approx = true} : vector<8x1xf32> -> vector<8x1xf32>
    %98 = vector.broadcast %97 : vector<8x1xf32> to vector<8x8xf32>
    %99 = arith.mulf %94, %98 : vector<8x8xf32>
    %100 = arith.truncf %99 : vector<8x8xf32> to vector<8x8xbf16>
    %cst_30 = arith.constant dense<0.000000e+00> : vector<8x8xf32>
    %101 = tpu.matmul %100, %84, %cst_30 {dimension_numbers = #tpu.dot_dimension_numbers<[1], [0], [0], [1], [0, 0, 1, 1], [], []>} : vector<8x8xbf16>, vector<8x8xbf16>, vector<8x8xf32> -> vector<8x8xf32>
    %102 = tpu.concatenate %32, %55, %78, %101 in 1 : vector<8x8xf32>, vector<8x8xf32>, vector<8x8xf32>, vector<8x8xf32> -> vector<8x32xf32>
    %c0_31 = arith.constant 0 : index
    %c0_32 = arith.constant 0 : index
    %c0_33 = arith.constant 0 : index
    %103 = vector.load %arg4[%c0_31, %c0_32, %c0_33] : memref<1x8x32xf32, #tpu.memory_space<vmem>>, vector<1x8x32xf32>
    %104 = vector.shape_cast %103 : vector<1x8x32xf32> to vector<8x32xf32>
    %105 = vector.shape_cast %102 : vector<8x32xf32> to vector<1x8x32xf32>
    tpu.vector_store %arg4[%c0_31, %c0_32, %c0_33], %105 {strides = array<i32>} : memref<1x8x32xf32, #tpu.memory_space<vmem>>, vector<1x8x32xf32>,
    return
  }
  func.func @transform_0(%arg0: i32) -> (i32, i32, i32) {
    %c0_i32 = arith.constant 0 : i32
    %c0_i32_0 = arith.constant 0 : i32
    %c0_i32_1 = arith.constant 0 : i32
    return %arg0, %c0_i32, %c0_i32_0 : i32, i32, i32
  }
  func.func @transform_1(%arg0: i32) -> (i32, i32, i32) {
    %c0_i32 = arith.constant 0 : i32
    %c0_i32_0 = arith.constant 0 : i32
    %c0_i32_1 = arith.constant 0 : i32
    return %arg0, %c0_i32, %c0_i32_0 : i32, i32, i32
  }
  func.func @transform_2(%arg0: i32) -> (i32, i32, i32) {
    %c0_i32 = arith.constant 0 : i32
    %c0_i32_0 = arith.constant 0 : i32
    %c0_i32_1 = arith.constant 0 : i32
    return %arg0, %c0_i32, %c0_i32_0 : i32, i32, i32
  }
  func.func @transform_3(%arg0: i32) -> (i32, i32, i32) {
    %c0_i32 = arith.constant 0 : i32
    %c0_i32_0 = arith.constant 0 : i32
    %c0_i32_1 = arith.constant 0 : i32
    return %arg0, %c0_i32, %c0_i32_0 : i32, i32, i32
  }
}

module attributes {stable_mosaic.version = 11 : i64} {
  func.func @_matmul_kernel(%arg0: i32, %arg1: i32, %arg2: i32, %arg3: memref<16x32xf32, #tpu.memory_space<vmem>>, %arg4: memref<32x128xf32, #tpu.memory_space<vmem>>, %arg5: memref<16x128xf32, #tpu.memory_space<vmem>>, %arg6: memref<16x128xf32, #tpu.memory_space<vmem>>) attributes {dimension_semantics = [#tpu.dimension_semantics<parallel>, #tpu.dimension_semantics<parallel>, #tpu.dimension_semantics<arbitrary>], iteration_bounds = array<i64: 1, 1, 1>, scalar_prefetch = 0 : i64, scratch_operands = 1 : i64, tpu.core_type = #tpu.core_type<tc>, window_params = [{transform_indices = @transform_0, window_bounds = array<i64: 16, 32>}, {transform_indices = @transform_1, window_bounds = array<i64: 32, 128>}, {transform_indices = @transform_2, window_bounds = array<i64: 16, 128>}]} {
    %c0_i32 = arith.constant 0 : i32
    %0 = arith.cmpi eq, %arg2, %c0_i32 : i32
    %1 = arith.extui %0 : i1 to i32
    %c0_i32_0 = arith.constant 0 : i32
    %2 = arith.cmpi ne, %1, %c0_i32_0 : i32
    scf.if %2 {
      %cst_10 = arith.constant 0.000000e+00 : f32
      %14 = vector.broadcast %cst_10 : f32 to vector<16x128xf32>
      %c0_11 = arith.constant 0 : index
      %c0_12 = arith.constant 0 : index
      %15 = vector.load %arg6[%c0_11, %c0_12] : memref<16x128xf32, #tpu.memory_space<vmem>>, vector<16x128xf32>
      tpu.vector_store %arg6[%c0_11, %c0_12], %14 {strides = array<i32>} : memref<16x128xf32, #tpu.memory_space<vmem>>, vector<16x128xf32>,
    } else {
    }
    %c0 = arith.constant 0 : index
    %c0_1 = arith.constant 0 : index
    %3 = vector.load %arg6[%c0, %c0_1] : memref<16x128xf32, #tpu.memory_space<vmem>>, vector<16x128xf32>
    %c0_2 = arith.constant 0 : index
    %c0_3 = arith.constant 0 : index
    %4 = vector.load %arg3[%c0_2, %c0_3] : memref<16x32xf32, #tpu.memory_space<vmem>>, vector<16x32xf32>
    %5 = arith.truncf %4 : vector<16x32xf32> to vector<16x32xbf16>
    %c0_4 = arith.constant 0 : index
    %c0_5 = arith.constant 0 : index
    %6 = vector.load %arg4[%c0_4, %c0_5] : memref<32x128xf32, #tpu.memory_space<vmem>>, vector<32x128xf32>
    %7 = arith.truncf %6 : vector<32x128xf32> to vector<32x128xbf16>
    %cst = arith.constant dense<0.000000e+00> : vector<16x128xf32>
    %8 = tpu.matmul %5, %7, %cst {dimension_numbers = #tpu.dot_dimension_numbers<[1], [0], [0], [1], [0, 0, 1, 1], [], []>} : vector<16x32xbf16>, vector<32x128xbf16>, vector<16x128xf32> -> vector<16x128xf32>
    %9 = arith.addf %3, %8 : vector<16x128xf32>
    %c0_6 = arith.constant 0 : index
    %c0_7 = arith.constant 0 : index
    %10 = vector.load %arg6[%c0_6, %c0_7] : memref<16x128xf32, #tpu.memory_space<vmem>>, vector<16x128xf32>
    tpu.vector_store %arg6[%c0_6, %c0_7], %9 {strides = array<i32>} : memref<16x128xf32, #tpu.memory_space<vmem>>, vector<16x128xf32>,
    %c0_i32_8 = arith.constant 0 : i32
    %11 = arith.cmpi eq, %arg2, %c0_i32_8 : i32
    %12 = arith.extui %11 : i1 to i32
    %c0_i32_9 = arith.constant 0 : i32
    %13 = arith.cmpi ne, %12, %c0_i32_9 : i32
    scf.if %13 {
      %c0_10 = arith.constant 0 : index
      %c0_11 = arith.constant 0 : index
      %14 = vector.load %arg6[%c0_10, %c0_11] : memref<16x128xf32, #tpu.memory_space<vmem>>, vector<16x128xf32>
      %c0_12 = arith.constant 0 : index
      %c0_13 = arith.constant 0 : index
      %15 = vector.load %arg5[%c0_12, %c0_13] : memref<16x128xf32, #tpu.memory_space<vmem>>, vector<16x128xf32>
      tpu.vector_store %arg5[%c0_12, %c0_13], %14 {strides = array<i32>} : memref<16x128xf32, #tpu.memory_space<vmem>>, vector<16x128xf32>,
    } else {
    }
    return
  }
  func.func @transform_0(%arg0: i32, %arg1: i32, %arg2: i32) -> (i32, i32) {
    %c0_i32 = arith.constant 0 : i32
    return %arg0, %arg2 : i32, i32
  }
  func.func @transform_1(%arg0: i32, %arg1: i32, %arg2: i32) -> (i32, i32) {
    %c0_i32 = arith.constant 0 : i32
    return %arg2, %arg1 : i32, i32
  }
  func.func @transform_2(%arg0: i32, %arg1: i32, %arg2: i32) -> (i32, i32) {
    %c0_i32 = arith.constant 0 : i32
    return %arg0, %arg1 : i32, i32
  }
}

</mosaic_0001>

<llo_original>
// kernel: transformer_forward.27
$region0: #{transformer_forward.27}
  #allocation0 [shape = 'u32[]', space=smem, size = 0x4, offset = 0x4, fixed_abs, tag = 'smem constant byte address 0x4 - core index']
  #allocation1 [shape = 'u32[144,128]{1,0:T(1,128)}', space=vmem, size = 0x12000, scoped, tag = 'internal scratch']
  %s0 = inlined_call_operand.vmem [shape: f32[16,32], index: 0, kind: input, shape index: {}]
  %s1 = inlined_call_operand.vmem [shape: f32[32,32], index: 1, kind: input, shape index: {}]
  %s2 = inlined_call_operand.vmem [shape: f32[1,32], index: 2, kind: input, shape index: {}]
  %s3 = inlined_call_operand.vmem [shape: f32[16,32], index: 3, kind: input, shape index: {}]
  %s4 = inlined_call_operand.vmem [shape: f32[1,32], index: 4, kind: input, shape index: {}]
  %s5 = inlined_call_operand.vmem [shape: f32[1,32], index: 5, kind: input, shape index: {}]
  %s6 = inlined_call_operand.vmem [shape: f32[16,32], index: 6, kind: output, shape index: {}]
  %s7 = sld [smem:[#allocation0]]
  $region34: #{transformer_forward.27} parent=0
    _
  %s9 = ssub.s32 1, %s7
  %s10 = scalar_select 0, %s9, %s7
  // Predicated region
  $region2: #{transformer_forward.27} parent=0 // pred_check
    _
  $region3: #{transformer_forward.27} parent=0 // pred_check_branch
    %12 = sbr.rel (0) target = $region5
  $region4: #{transformer_forward.27} parent=0 // pred_region
    _
  $region5: #{transformer_forward.27} parent=0 // pred_fallthru
    _
  // Predicated region
  $region6: #{transformer_forward.27} parent=0 // pred_check
    _
  $region7: #{transformer_forward.27} parent=0 // pred_check_branch
    %14 = sbr.rel (0) target = $region9
  $region8: #{transformer_forward.27} parent=0 // pred_region
    _
  $region9: #{transformer_forward.27} parent=0 // pred_fallthru
    _
  // Predicated region
  $region10: #{transformer_forward.27} parent=0 // pred_check
    _
  $region11: #{transformer_forward.27} parent=0 // pred_check_branch
    %16 = sbr.rel (0) target = $region13
  $region12: #{transformer_forward.27} parent=0 // pred_region
    _
  $region13: #{transformer_forward.27} parent=0 // pred_fallthru
    _
  // Predicated region
  $region14: #{transformer_forward.27} parent=0 // pred_check
    _
  $region15: #{transformer_forward.27} parent=0 // pred_check_branch
    %18 = sbr.rel (0) target = $region17
  $region16: #{transformer_forward.27} parent=0 // pred_region
    _
  $region17: #{transformer_forward.27} parent=0 // pred_fallthru
    _
  // Predicated region
  $region18: #{transformer_forward.27} parent=0 // pred_check
    _
  $region19: #{transformer_forward.27} parent=0 // pred_check_branch
    %20 = sbr.rel (0) target = $region21
  $region20: #{transformer_forward.27} parent=0 // pred_region
    _
  $region21: #{transformer_forward.27} parent=0 // pred_fallthru
    _
  // Predicated region
  $region22: #{transformer_forward.27} parent=0 // pred_check
    _
  $region23: #{transformer_forward.27} parent=0 // pred_check_branch
    %22 = sbr.rel (0) target = $region25
  $region24: #{transformer_forward.27} parent=0 // pred_region
    _
  $region25: #{transformer_forward.27} parent=0 // pred_fallthru
    _
  %v24 = vld [vmem:[%s0] sm:$0xff]
  %v25 = vld [vmem:[%s0 + $0x8] sm:$0xff]
  %v26 = vpack.c.bf16 %v25, %v24
  %v27 = vld [vmem:[%s1] sm:$0xff]
  %v28 = vld [vmem:[%s1 + $0x8] sm:$0xff]
  %v29 = vld [vmem:[%s1 + $0x10] sm:$0xff]
  %v30 = vld [vmem:[%s1 + $0x18] sm:$0xff]
  %v31 = vpack.c.bf16 %v28, %v27
  %v32 = vpack.c.bf16 %v30, %v29
  %v33 = vld [vmem:[%s2] sm:$0x1]
  %v35 = vlaneseq
  %v36 = vshrl.u32 %v35, 7
  %v37 = vsub.s32 0, %v36
  %v38 = vrot.slane %v33, %v37
  %vm40 = vcmask 261120
  %v42 = vsel %vm40, %v26, 0
  %44 = vmatprep.subr.bf16.mxu0 0
  %45 = vmatpush1.bf16.msra.mxu0 0
  %46 = vmatprep.subr.bf16.mxu0 0
  %47 = vmatpush1.bf16.msra.mxu0 0
  %48 = vmatprep.subr.bf16.mxu0 0
  %49 = vmatpush1.bf16.msra.mxu0 0
  %50 = vmatprep.subr.bf16.mxu0 0
  %51 = vmatpush1.bf16.msra.mxu0 0
  %52 = vmatprep.subr.bf16.mxu0 0
  %53 = vmatpush1.bf16.msra.mxu0 0
  %54 = vmatprep.subr.bf16.mxu0 0
  %55 = vmatpush1.bf16.msra.mxu0 0
  %56 = vmatprep.subr.bf16.mxu0 0
  %57 = vmatpush1.bf16.msra.mxu0 %v32
  %58 = vmatprep.subr.bf16.mxu0 0
  %59 = vmatpush1.bf16.msra.mxu0 %v31
  %60 = vmatprep.subr.bf16.mxu0 0
  %61 = vmatpush2.bf16.msra.mxu0 0
  %62 = vmatprep.subr.bf16.mxu0 0
  %63 = vmatpush2.bf16.msra.mxu0 0
  %64 = vmatprep.subr.bf16.mxu0 0
  %65 = vmatpush2.bf16.msra.mxu0 0
  %66 = vmatprep.subr.bf16.mxu0 0
  %67 = vmatpush2.bf16.msra.mxu0 0
  %68 = vmatprep.subr.bf16.mxu0 0
  %69 = vmatpush2.bf16.msra.mxu0 0
  %70 = vmatprep.subr.bf16.mxu0 0
  %71 = vmatpush2.bf16.msra.mxu0 0
  %72 = vmatprep.subr.bf16.mxu0 0
  %73 = vmatpush2.bf16.msra.mxu0 0
  %74 = vmatprep.subr.bf16.mxu0 0
  %75 = vmatpush2.bf16.msra.mxu0 0
  %76 = vmatprep.mubr.bf16.mxu0 0
  %77 = vmatmul.mubr.bf16.gmra.mxu0 %v42
  %v78 = vpop.f32.mrf.mxu0
  %v79 = vadd.f32 %v38, %v78
  %v80 = vpop.f32.mrf.mxu0
  %v81 = vpop.f32.mrf.mxu0
  %v82 = vadd.f32 %v38, %v81
  %v83 = vpop.f32.mrf.mxu0
  %84 = vdwg.mxu0
  %v85 = vld [vmem:[%s3] sm:$0xff]
  %v86 = vld [vmem:[%s3 + $0x8] sm:$0xff]
  %v87 = vadd.f32 %v79, %v85
  %v88 = vadd.f32 %v82, %v86
  %v89 = vsel %vm40, %v87, 0.0
  %90 = vadd.xlane.f32.xlu0 %v89
  %v91 = vpop.xlane.xlu0 %90
  %v92 = vsel %vm40, %v88, 0.0
  %93 = vadd.xlane.f32.xlu0 %v92
  %v94 = vpop.xlane.xlu0 %93
  %v95 = vrcp.pop 32.0
  %v96 = vmul.f32 %v91, %v95
  %v97 = vmul.f32 %v94, %v95
  %v98 = vsub.f32 %v87, %v96
  %v99 = vsub.f32 %v88, %v97
  %v100 = vmul.f32 %v98, %v98
  %v101 = vmul.f32 %v99, %v99
  %v102 = vsel %vm40, %v100, 0.0
  %103 = vadd.xlane.f32.xlu0 %v102
  %v104 = vpop.xlane.xlu0 %103
  %v105 = vsel %vm40, %v101, 0.0
  %106 = vadd.xlane.f32.xlu0 %v105
  %v107 = vpop.xlane.xlu0 %106
  %v108 = vmul.f32 %v104, %v95
  %v109 = vmul.f32 %v107, %v95
  %v110 = vadd.f32 %v108, 1e-05
  %v111 = vadd.f32 %v109, 1e-05
  %v112 = vrsqrt.pop %v110
  %v113 = vrsqrt.pop %v111
  %v114 = vmul.f32 %v98, %v112
  %v115 = vmul.f32 %v99, %v113
  %v116 = vld [vmem:[%s4] sm:$0x1]
  %v118 = vlaneseq
  %v119 = vshrl.u32 %v118, 7
  %v120 = vsub.s32 0, %v119
  %v121 = vrot.slane %v116, %v120
  %v123 = vmul.f32 %v114, %v121
  %v124 = vmul.f32 %v115, %v121
  %v125 = vld [vmem:[%s5] sm:$0x1]
  %v127 = vlaneseq
  %v128 = vshrl.u32 %v127, 7
  %v129 = vsub.s32 0, %v128
  %v130 = vrot.slane %v125, %v129
  %v132 = vadd.f32 %v123, %v130
  %v133 = vadd.f32 %v124, %v130
  %134 = vst.msk [vmem:[%s6] sm:$0xff] %vm40, %v132
  %135 = vst.msk [vmem:[%s6 + $0x8] sm:$0xff] %vm40, %v133
  // Predicated region
  $region26: #{transformer_forward.27} parent=0 // pred_check
    _
  $region27: #{transformer_forward.27} parent=0 // pred_check_branch
    %137 = sbr.rel (0) target = $region29
  $region28: #{transformer_forward.27} parent=0 // pred_region
    _
  $region29: #{transformer_forward.27} parent=0 // pred_fallthru
    _
  // Predicated region
  $region30: #{transformer_forward.27} parent=0 // pred_check
    _
  $region31: #{transformer_forward.27} parent=0 // pred_check_branch
    %139 = sbr.rel (0) target = $region33
  $region32: #{transformer_forward.27} parent=0 // pred_region
    _
  $region33: #{transformer_forward.27} parent=0 // pred_fallthru
    _

// kernel: transformer_forward.25
$region0: #{transformer_forward.25}
  #allocation0 [shape = 'u32[]', space=smem, size = 0x4, offset = 0x4, fixed_abs, tag = 'smem constant byte address 0x4 - core index']
  #allocation1 [shape = 'u32[144,128]{1,0:T(1,128)}', space=vmem, size = 0x12000, scoped, tag = 'internal scratch']
  #allocation2 [shape = 'f32[16,96]{1,0:T(8,128)}', space=vmem, size = 0x2000, scoped, tag = 'scratch operand']
  %s0 = inlined_call_operand.vmem [shape: f32[16,32], index: 0, kind: input, shape index: {}]
  %s1 = inlined_call_operand.vmem [shape: f32[32,96], index: 1, kind: input, shape index: {}]
  %s2 = inlined_call_operand.vmem [shape: f32[1,96], index: 2, kind: input, shape index: {}]
  %s3 = inlined_call_operand.vmem [shape: f32[16,96], index: 3, kind: output, shape index: {}]
  %s4 = sld [smem:[#allocation0]]
  $region30: #{transformer_forward.25} parent=0
    _
  %s6 = ssub.s32 1, %s4
  %s7 = scalar_select 0, %s6, %s4
  // Predicated region
  $region2: #{transformer_forward.25} parent=0 // pred_check
    _
  $region3: #{transformer_forward.25} parent=0 // pred_check_branch
    %9 = sbr.rel (0) target = $region5
  $region4: #{transformer_forward.25} parent=0 // pred_region
    _
  $region5: #{transformer_forward.25} parent=0 // pred_fallthru
    _
  // Predicated region
  $region6: #{transformer_forward.25} parent=0 // pred_check
    _
  $region7: #{transformer_forward.25} parent=0 // pred_check_branch
    %11 = sbr.rel (0) target = $region9
  $region8: #{transformer_forward.25} parent=0 // pred_region
    _
  $region9: #{transformer_forward.25} parent=0 // pred_fallthru
    _
  // Predicated region
  $region10: #{transformer_forward.25} parent=0 // pred_check
    _
  $region11: #{transformer_forward.25} parent=0 // pred_check_branch
    %13 = sbr.rel (0) target = $region13
  $region12: #{transformer_forward.25} parent=0 // pred_region
    _
  $region13: #{transformer_forward.25} parent=0 // pred_fallthru
    _
  %p15 = scmp.eq.s32.totalorder 0, 0
  // Predicated region
  $region14: #{transformer_forward.25} parent=0 // pred_check
    %p16 = pneg %p15
  $region15: #{transformer_forward.25} parent=0 // pred_check_branch
    %18 = sbr.rel (%p16) target = $region17
  $region16: #{transformer_forward.25} parent=0 // pred_region
    %vm19 = vcmask 785408
    %20 = vst.msk [vmem:[#allocation2] sm:$0xff] %vm19, 0.0
    %21 = vst.msk [vmem:[#allocation2 + $0x8] sm:$0xff] %vm19, 0.0
  $region17: #{transformer_forward.25} parent=0 // pred_fallthru
    _
  %v22 = vld [vmem:[#allocation2] sm:$0xff]
  %v23 = vld [vmem:[#allocation2 + $0x8] sm:$0xff]
  %v24 = vld [vmem:[%s0] sm:$0xff]
  %v25 = vld [vmem:[%s0 + $0x8] sm:$0xff]
  %v26 = vpack.c.bf16 %v25, %v24
  %v27 = vld [vmem:[%s1] sm:$0xff]
  %v28 = vld [vmem:[%s1 + $0x8] sm:$0xff]
  %v29 = vld [vmem:[%s1 + $0x10] sm:$0xff]
  %v30 = vld [vmem:[%s1 + $0x18] sm:$0xff]
  %v31 = vpack.c.bf16 %v28, %v27
  %v32 = vpack.c.bf16 %v30, %v29
  %vm33 = vcmask 261120
  %v35 = vsel %vm33, %v26, 0
  %37 = vmatprep.subr.bf16.mxu0 0
  %38 = vmatpush1.bf16.msra.mxu0 0
  %39 = vmatprep.subr.bf16.mxu0 0
  %40 = vmatpush1.bf16.msra.mxu0 0
  %41 = vmatprep.subr.bf16.mxu0 0
  %42 = vmatpush1.bf16.msra.mxu0 0
  %43 = vmatprep.subr.bf16.mxu0 0
  %44 = vmatpush1.bf16.msra.mxu0 0
  %45 = vmatprep.subr.bf16.mxu0 0
  %46 = vmatpush1.bf16.msra.mxu0 0
  %47 = vmatprep.subr.bf16.mxu0 0
  %48 = vmatpush1.bf16.msra.mxu0 0
  %49 = vmatprep.subr.bf16.mxu0 0
  %50 = vmatpush1.bf16.msra.mxu0 %v32
  %51 = vmatprep.subr.bf16.mxu0 0
  %52 = vmatpush1.bf16.msra.mxu0 %v31
  %53 = vmatprep.subr.bf16.mxu0 0
  %54 = vmatpush2.bf16.msra.mxu0 0
  %55 = vmatprep.subr.bf16.mxu0 0
  %56 = vmatpush2.bf16.msra.mxu0 0
  %57 = vmatprep.subr.bf16.mxu0 0
  %58 = vmatpush2.bf16.msra.mxu0 0
  %59 = vmatprep.subr.bf16.mxu0 0
  %60 = vmatpush2.bf16.msra.mxu0 0
  %61 = vmatprep.subr.bf16.mxu0 0
  %62 = vmatpush2.bf16.msra.mxu0 0
  %63 = vmatprep.subr.bf16.mxu0 0
  %64 = vmatpush2.bf16.msra.mxu0 0
  %65 = vmatprep.subr.bf16.mxu0 0
  %66 = vmatpush2.bf16.msra.mxu0 0
  %67 = vmatprep.subr.bf16.mxu0 0
  %68 = vmatpush2.bf16.msra.mxu0 0
  %69 = vmatprep.mubr.bf16.mxu0 0
  %70 = vmatmul.mubr.bf16.gmra.mxu0 %v35
  %v71 = vpop.f32.mrf.mxu0
  %v72 = vadd.f32 0.0, %v71
  %v73 = vpop.f32.mrf.mxu0
  %v74 = vpop.f32.mrf.mxu0
  %v75 = vadd.f32 0.0, %v74
  %v76 = vpop.f32.mrf.mxu0
  %77 = vdwg.mxu0
  %v78 = vadd.f32 %v22, %v72
  %v79 = vadd.f32 %v23, %v75
  %vm80 = vcmask 785408
  %81 = vst.msk [vmem:[#allocation2] sm:$0xff] %vm80, %v78
  %82 = vst.msk [vmem:[#allocation2 + $0x8] sm:$0xff] %vm80, %v79
  // Predicated region
  $region18: #{transformer_forward.25} parent=0 // pred_check
    %p83 = pneg %p15
  $region19: #{transformer_forward.25} parent=0 // pred_check_branch
    %85 = sbr.rel (%p83) target = $region21
  $region20: #{transformer_forward.25} parent=0 // pred_region
    %v86 = vld [vmem:[#allocation2] sm:$0xff]
    %v87 = vld [vmem:[#allocation2 + $0x8] sm:$0xff]
    %v88 = vld [vmem:[%s2] sm:$0x1]
    %v90 = vlaneseq
    %v91 = vshrl.u32 %v90, 7
    %v92 = vsub.s32 0, %v91
    %v93 = vrot.slane %v88, %v92
    %v95 = vadd.f32 %v86, %v93
    %v96 = vadd.f32 %v87, %v93
    %97 = vst.msk [vmem:[%s3] sm:$0xff] %vm80, %v95
    %98 = vst.msk [vmem:[%s3 + $0x8] sm:$0xff] %vm80, %v96
  $region21: #{transformer_forward.25} parent=0 // pred_fallthru
    _
  // Predicated region
  $region22: #{transformer_forward.25} parent=0 // pred_check
    _
  $region23: #{transformer_forward.25} parent=0 // pred_check_branch
    %100 = sbr.rel (0) target = $region25
  $region24: #{transformer_forward.25} parent=0 // pred_region
    _
  $region25: #{transformer_forward.25} parent=0 // pred_fallthru
    _
  // Predicated region
  $region26: #{transformer_forward.25} parent=0 // pred_check
    _
  $region27: #{transformer_forward.25} parent=0 // pred_check_branch
    %102 = sbr.rel (0) target = $region29
  $region28: #{transformer_forward.25} parent=0 // pred_region
    _
  $region29: #{transformer_forward.25} parent=0 // pred_fallthru
    _

// kernel: transformer_forward.28
$region0: #{transformer_forward.28}
  #allocation0 [shape = 'u32[]', space=smem, size = 0x4, offset = 0x4, fixed_abs, tag = 'smem constant byte address 0x4 - core index']
  #allocation1 [shape = 'u32[144,128]{1,0:T(1,128)}', space=vmem, size = 0x12000, scoped, tag = 'internal scratch']
  %s0 = inlined_call_operand.vmem [shape: f32[16,32], index: 0, kind: input, shape index: {}]
  %s1 = inlined_call_operand.vmem [shape: f32[32,64], index: 1, kind: input, shape index: {}]
  %s2 = inlined_call_operand.vmem [shape: f32[1,64], index: 2, kind: input, shape index: {}]
  %s3 = inlined_call_operand.vmem [shape: f32[64,32], index: 3, kind: input, shape index: {}]
  %s4 = inlined_call_operand.vmem [shape: f32[1,32], index: 4, kind: input, shape index: {}]
  %s5 = inlined_call_operand.vmem [shape: f32[1,32], index: 5, kind: input, shape index: {}]
  %s6 = inlined_call_operand.vmem [shape: f32[1,32], index: 6, kind: input, shape index: {}]
  %s7 = inlined_call_operand.vmem [shape: f32[16,32], index: 7, kind: output, shape index: {}]
  %s8 = sld [smem:[#allocation0]]
  $region38: #{transformer_forward.28} parent=0
    _
  %s10 = ssub.s32 1, %s8
  %s11 = scalar_select 0, %s10, %s8
  // Predicated region
  $region2: #{transformer_forward.28} parent=0 // pred_check
    _
  $region3: #{transformer_forward.28} parent=0 // pred_check_branch
    %13 = sbr.rel (0) target = $region5
  $region4: #{transformer_forward.28} parent=0 // pred_region
    _
  $region5: #{transformer_forward.28} parent=0 // pred_fallthru
    _
  // Predicated region
  $region6: #{transformer_forward.28} parent=0 // pred_check
    _
  $region7: #{transformer_forward.28} parent=0 // pred_check_branch
    %15 = sbr.rel (0) target = $region9
  $region8: #{transformer_forward.28} parent=0 // pred_region
    _
  $region9: #{transformer_forward.28} parent=0 // pred_fallthru
    _
  // Predicated region
  $region10: #{transformer_forward.28} parent=0 // pred_check
    _
  $region11: #{transformer_forward.28} parent=0 // pred_check_branch
    %17 = sbr.rel (0) target = $region13
  $region12: #{transformer_forward.28} parent=0 // pred_region
    _
  $region13: #{transformer_forward.28} parent=0 // pred_fallthru
    _
  // Predicated region
  $region14: #{transformer_forward.28} parent=0 // pred_check
    _
  $region15: #{transformer_forward.28} parent=0 // pred_check_branch
    %19 = sbr.rel (0) target = $region17
  $region16: #{transformer_forward.28} parent=0 // pred_region
    _
  $region17: #{transformer_forward.28} parent=0 // pred_fallthru
    _
  // Predicated region
  $region18: #{transformer_forward.28} parent=0 // pred_check
    _
  $region19: #{transformer_forward.28} parent=0 // pred_check_branch
    %21 = sbr.rel (0) target = $region21
  $region20: #{transformer_forward.28} parent=0 // pred_region
    _
  $region21: #{transformer_forward.28} parent=0 // pred_fallthru
    _
  // Predicated region
  $region22: #{transformer_forward.28} parent=0 // pred_check
    _
  $region23: #{transformer_forward.28} parent=0 // pred_check_branch
    %23 = sbr.rel (0) target = $region25
  $region24: #{transformer_forward.28} parent=0 // pred_region
    _
  $region25: #{transformer_forward.28} parent=0 // pred_fallthru
    _
  // Predicated region
  $region26: #{transformer_forward.28} parent=0 // pred_check
    _
  $region27: #{transformer_forward.28} parent=0 // pred_check_branch
    %25 = sbr.rel (0) target = $region29
  $region28: #{transformer_forward.28} parent=0 // pred_region
    _
  $region29: #{transformer_forward.28} parent=0 // pred_fallthru
    _
  %v27 = vld [vmem:[%s0] sm:$0xff]
  %v28 = vld [vmem:[%s0 + $0x8] sm:$0xff]
  %v29 = vpack.c.bf16 %v28, %v27
  %v30 = vld [vmem:[%s1] sm:$0xff]
  %v31 = vld [vmem:[%s1 + $0x8] sm:$0xff]
  %v32 = vld [vmem:[%s1 + $0x10] sm:$0xff]
  %v33 = vld [vmem:[%s1 + $0x18] sm:$0xff]
  %v34 = vpack.c.bf16 %v31, %v30
  %v35 = vpack.c.bf16 %v33, %v32
  %v36 = vld [vmem:[%s2] sm:$0x1]
  %v38 = vlaneseq
  %v39 = vshrl.u32 %v38, 7
  %v40 = vsub.s32 0, %v39
  %v41 = vrot.slane %v36, %v40
  %vm43 = vcmask 261120
  %v45 = vsel %vm43, %v29, 0
  %47 = vmatprep.subr.bf16.mxu0 0
  %48 = vmatpush1.bf16.msra.mxu0 0
  %49 = vmatprep.subr.bf16.mxu0 0
  %50 = vmatpush1.bf16.msra.mxu0 0
  %51 = vmatprep.subr.bf16.mxu0 0
  %52 = vmatpush1.bf16.msra.mxu0 0
  %53 = vmatprep.subr.bf16.mxu0 0
  %54 = vmatpush1.bf16.msra.mxu0 0
  %55 = vmatprep.subr.bf16.mxu0 0
  %56 = vmatpush1.bf16.msra.mxu0 0
  %57 = vmatprep.subr.bf16.mxu0 0
  %58 = vmatpush1.bf16.msra.mxu0 0
  %59 = vmatprep.subr.bf16.mxu0 0
  %60 = vmatpush1.bf16.msra.mxu0 %v35
  %61 = vmatprep.subr.bf16.mxu0 0
  %62 = vmatpush1.bf16.msra.mxu0 %v34
  %63 = vmatprep.subr.bf16.mxu0 0
  %64 = vmatpush2.bf16.msra.mxu0 0
  %65 = vmatprep.subr.bf16.mxu0 0
  %66 = vmatpush2.bf16.msra.mxu0 0
  %67 = vmatprep.subr.bf16.mxu0 0
  %68 = vmatpush2.bf16.msra.mxu0 0
  %69 = vmatprep.subr.bf16.mxu0 0
  %70 = vmatpush2.bf16.msra.mxu0 0
  %71 = vmatprep.subr.bf16.mxu0 0
  %72 = vmatpush2.bf16.msra.mxu0 0
  %73 = vmatprep.subr.bf16.mxu0 0
  %74 = vmatpush2.bf16.msra.mxu0 0
  %75 = vmatprep.subr.bf16.mxu0 0
  %76 = vmatpush2.bf16.msra.mxu0 0
  %77 = vmatprep.subr.bf16.mxu0 0
  %78 = vmatpush2.bf16.msra.mxu0 0
  %79 = vmatprep.mubr.bf16.mxu0 0
  %80 = vmatmul.mubr.bf16.gmra.mxu0 %v45
  %v81 = vpop.f32.mrf.mxu0
  %v82 = vadd.f32 %v41, %v81
  %v83 = vpop.f32.mrf.mxu0
  %v84 = vpop.f32.mrf.mxu0
  %v85 = vadd.f32 %v41, %v84
  %v86 = vpop.f32.mrf.mxu0
  %87 = vdwg.mxu0
  %v88 = vmax.f32 %v82, 0.0
  %v89 = vmax.f32 %v85, 0.0
  %v90 = vpack.c.bf16 %v89, %v88
  %v91 = vld [vmem:[%s3] sm:$0xff]
  %v92 = vld [vmem:[%s3 + $0x8] sm:$0xff]
  %v93 = vld [vmem:[%s3 + $0x10] sm:$0xff]
  %v94 = vld [vmem:[%s3 + $0x18] sm:$0xff]
  %v95 = vld [vmem:[%s3 + $0x20] sm:$0xff]
  %v96 = vld [vmem:[%s3 + $0x28] sm:$0xff]
  %v97 = vld [vmem:[%s3 + $0x30] sm:$0xff]
  %v98 = vld [vmem:[%s3 + $0x38] sm:$0xff]
  %v99 = vpack.c.bf16 %v92, %v91
  %v100 = vpack.c.bf16 %v94, %v93
  %v101 = vpack.c.bf16 %v96, %v95
  %v102 = vpack.c.bf16 %v98, %v97
  %v103 = vld [vmem:[%s4] sm:$0x1]
  %v105 = vlaneseq
  %v106 = vshrl.u32 %v105, 7
  %v107 = vsub.s32 0, %v106
  %v108 = vrot.slane %v103, %v107
  %vm110 = vcmask 523264
  %v112 = vsel %vm110, %v90, 0
  %114 = vmatprep.subr.bf16.mxu0 0
  %115 = vmatpush1.bf16.msra.mxu0 0
  %116 = vmatprep.subr.bf16.mxu0 0
  %117 = vmatpush1.bf16.msra.mxu0 0
  %118 = vmatprep.subr.bf16.mxu0 0
  %119 = vmatpush1.bf16.msra.mxu0 0
  %120 = vmatprep.subr.bf16.mxu0 0
  %121 = vmatpush1.bf16.msra.mxu0 0
  %122 = vmatprep.subr.bf16.mxu0 0
  %123 = vmatpush1.bf16.msra.mxu0 %v102
  %124 = vmatprep.subr.bf16.mxu0 0
  %125 = vmatpush1.bf16.msra.mxu0 %v101
  %126 = vmatprep.subr.bf16.mxu0 0
  %127 = vmatpush1.bf16.msra.mxu0 %v100
  %128 = vmatprep.subr.bf16.mxu0 0
  %129 = vmatpush1.bf16.msra.mxu0 %v99
  %130 = vmatprep.subr.bf16.mxu0 0
  %131 = vmatpush2.bf16.msra.mxu0 0
  %132 = vmatprep.subr.bf16.mxu0 0
  %133 = vmatpush2.bf16.msra.mxu0 0
  %134 = vmatprep.subr.bf16.mxu0 0
  %135 = vmatpush2.bf16.msra.mxu0 0
  %136 = vmatprep.subr.bf16.mxu0 0
  %137 = vmatpush2.bf16.msra.mxu0 0
  %138 = vmatprep.subr.bf16.mxu0 0
  %139 = vmatpush2.bf16.msra.mxu0 0
  %140 = vmatprep.subr.bf16.mxu0 0
  %141 = vmatpush2.bf16.msra.mxu0 0
  %142 = vmatprep.subr.bf16.mxu0 0
  %143 = vmatpush2.bf16.msra.mxu0 0
  %144 = vmatprep.subr.bf16.mxu0 0
  %145 = vmatpush2.bf16.msra.mxu0 0
  %146 = vmatprep.mubr.bf16.mxu0 0
  %147 = vmatmul.mubr.bf16.gmra.mxu0 %v112
  %v148 = vpop.f32.mrf.mxu0
  %v149 = vadd.f32 %v108, %v148
  %v150 = vpop.f32.mrf.mxu0
  %v151 = vpop.f32.mrf.mxu0
  %v152 = vadd.f32 %v108, %v151
  %v153 = vpop.f32.mrf.mxu0
  %154 = vdwg.mxu0
  %v155 = vadd.f32 %v149, %v27
  %v156 = vadd.f32 %v152, %v28
  %v157 = vsel %vm43, %v155, 0.0
  %158 = vadd.xlane.f32.xlu0 %v157
  %v159 = vpop.xlane.xlu0 %158
  %v160 = vsel %vm43, %v156, 0.0
  %161 = vadd.xlane.f32.xlu0 %v160
  %v162 = vpop.xlane.xlu0 %161
  %v163 = vrcp.pop 32.0
  %v164 = vmul.f32 %v159, %v163
  %v165 = vmul.f32 %v162, %v163
  %v166 = vsub.f32 %v155, %v164
  %v167 = vsub.f32 %v156, %v165
  %v168 = vmul.f32 %v166, %v166
  %v169 = vmul.f32 %v167, %v167
  %v170 = vsel %vm43, %v168, 0.0
  %171 = vadd.xlane.f32.xlu0 %v170
  %v172 = vpop.xlane.xlu0 %171
  %v173 = vsel %vm43, %v169, 0.0
  %174 = vadd.xlane.f32.xlu0 %v173
  %v175 = vpop.xlane.xlu0 %174
  %v176 = vmul.f32 %v172, %v163
  %v177 = vmul.f32 %v175, %v163
  %v178 = vadd.f32 %v176, 1e-05
  %v179 = vadd.f32 %v177, 1e-05
  %v180 = vrsqrt.pop %v178
  %v181 = vrsqrt.pop %v179
  %v182 = vmul.f32 %v166, %v180
  %v183 = vmul.f32 %v167, %v181
  %v184 = vld [vmem:[%s5] sm:$0x1]
  %v186 = vlaneseq
  %v187 = vshrl.u32 %v186, 7
  %v188 = vsub.s32 0, %v187
  %v189 = vrot.slane %v184, %v188
  %v191 = vmul.f32 %v182, %v189
  %v192 = vmul.f32 %v183, %v189
  %v193 = vld [vmem:[%s6] sm:$0x1]
  %v195 = vlaneseq
  %v196 = vshrl.u32 %v195, 7
  %v197 = vsub.s32 0, %v196
  %v198 = vrot.slane %v193, %v197
  %v200 = vadd.f32 %v191, %v198
  %v201 = vadd.f32 %v192, %v198
  %202 = vst.msk [vmem:[%s7] sm:$0xff] %vm43, %v200
  %203 = vst.msk [vmem:[%s7 + $0x8] sm:$0xff] %vm43, %v201
  // Predicated region
  $region30: #{transformer_forward.28} parent=0 // pred_check
    _
  $region31: #{transformer_forward.28} parent=0 // pred_check_branch
    %205 = sbr.rel (0) target = $region33
  $region32: #{transformer_forward.28} parent=0 // pred_region
    _
  $region33: #{transformer_forward.28} parent=0 // pred_fallthru
    _
  // Predicated region
  $region34: #{transformer_forward.28} parent=0 // pred_check
    _
  $region35: #{transformer_forward.28} parent=0 // pred_check_branch
    %207 = sbr.rel (0) target = $region37
  $region36: #{transformer_forward.28} parent=0 // pred_region
    _
  $region37: #{transformer_forward.28} parent=0 // pred_fallthru
    _

// kernel: transformer_forward.26
$region0: #{transformer_forward.26}
  #allocation0 [shape = 'u32[]', space=smem, size = 0x4, offset = 0x4, fixed_abs, tag = 'smem constant byte address 0x4 - core index']
  #allocation1 [shape = 'u32[144,128]{1,0:T(1,128)}', space=vmem, size = 0x12000, scoped, tag = 'internal scratch']
  %s0 = inlined_call_operand.vmem [shape: f32[2,8,96], index: 0, kind: input, shape index: {}]
  %s1 = inlined_call_operand.vmem [shape: s32[2,8,8], index: 1, kind: input, shape index: {}]
  %s2 = inlined_call_operand.vmem [shape: f32[2,8,32], index: 2, kind: output, shape index: {}]
  %s3 = sld [smem:[#allocation0]]
  $region41: #{transformer_forward.26} parent=0
    _
  %s5 = ssub.s32 1, %s3
  %s6 = scalar_select 0, %s5, %s3
  loop: start=0, step=1, limit=4
  $region2: #{transformer_forward.26} parent=0 // loop_pre_header
    _
  $region3: #{transformer_forward.26} parent=0 // loop_header
    %s8 = sphi 0, %s12
    %p9 = scmp.ge.s32.totalorder %s8, 4
    %s18 = sphi 0, %s20
    %s21 = sphi 0, %s18
    %s22 = sphi 0, %s21
    %s38 = sphi 0, %s22
    %s44 = sphi 0, %s46
    %s47 = sphi 0, %s44
    %s48 = sphi 0, %s47
    %s64 = sphi 0, %s48
    %s70 = sphi 0, %s72
    %s73 = sphi 0, %s70
    %s74 = sphi 0, %s73
    %s90 = sphi 0, %s74
  $region4: #{transformer_forward.26} parent=0 // loop_header_branch
    %11 = sbr.rel (%p9) target = $region8
  $region5: #{transformer_forward.26} parent=0 // loop_body
    %s13 = ssub.s32 %s8, 1
    %s14 = ssub.s32 %s8, 2
    %s15 = sadd.s32 %s8, 1
    %s16 = ssub.s32 %s8, %s15
    %p17 = scmp.eq.s32.totalorder %s16, 0
    %s19 = sadd.s32 %s18, 1
    %s20 = scalar_select %p17, %s18, %s19
    %p23 = pneg %p17
    %p24 = scmp.eq.s32.totalorder %s8, 1
    %p25 = por %p23, %p24
    %p26 = scmp.ne.s32.totalorder %s18, %s21
    %p27 = scmp.eq.s32.totalorder %s8, 0
    %p28 = por %p26, %p27
    %p29 = scmp.ne.s32.totalorder %s18, %s21
    %p30 = scmp.eq.s32.totalorder %s13, 1
    %p31 = por %p29, %p30
    %p32 = scmp.ne.s32.totalorder %s21, %s22
    %p33 = scmp.eq.s32.totalorder %s13, 0
    %p34 = por %p32, %p33
    %p35 = scmp.ne.s32.totalorder %s21, %s22
    %p36 = scmp.eq.s32.totalorder %s14, 1
    %p37 = por %p35, %p36
    %p39 = scmp.ne.s32.totalorder %s22, %s38
    %p40 = scmp.eq.s32.totalorder %s14, 0
    %p41 = por %p39, %p40
    %s42 = ssub.s32 %s8, %s15
    %p43 = scmp.eq.s32.totalorder %s42, 0
    %s45 = sadd.s32 %s44, 1
    %s46 = scalar_select %p43, %s44, %s45
    %p49 = pneg %p43
    %p50 = scmp.eq.s32.totalorder %s8, 1
    %p51 = por %p49, %p50
    %p52 = scmp.ne.s32.totalorder %s44, %s47
    %p53 = scmp.eq.s32.totalorder %s8, 0
    %p54 = por %p52, %p53
    %p55 = scmp.ne.s32.totalorder %s44, %s47
    %p56 = scmp.eq.s32.totalorder %s13, 1
    %p57 = por %p55, %p56
    %p58 = scmp.ne.s32.totalorder %s47, %s48
    %p59 = scmp.eq.s32.totalorder %s13, 0
    %p60 = por %p58, %p59
    %p61 = scmp.ne.s32.totalorder %s47, %s48
    %p62 = scmp.eq.s32.totalorder %s14, 1
    %p63 = por %p61, %p62
    %p65 = scmp.ne.s32.totalorder %s48, %s64
    %p66 = scmp.eq.s32.totalorder %s14, 0
    %p67 = por %p65, %p66
    %s68 = ssub.s32 %s8, %s15
    %p69 = scmp.eq.s32.totalorder %s68, 0
    %s71 = sadd.s32 %s70, 1
    %s72 = scalar_select %p69, %s70, %s71
    %p75 = pneg %p69
    %p76 = scmp.eq.s32.totalorder %s8, 1
    %p77 = por %p75, %p76
    %p78 = scmp.ne.s32.totalorder %s70, %s73
    %p79 = scmp.eq.s32.totalorder %s8, 0
    %p80 = por %p78, %p79
    %p81 = scmp.ne.s32.totalorder %s70, %s73
    %p82 = scmp.eq.s32.totalorder %s13, 1
    %p83 = por %p81, %p82
    %p84 = scmp.ne.s32.totalorder %s73, %s74
    %p85 = scmp.eq.s32.totalorder %s13, 0
    %p86 = por %p84, %p85
    %p87 = scmp.ne.s32.totalorder %s73, %s74
    %p88 = scmp.eq.s32.totalorder %s14, 1
    %p89 = por %p87, %p88
    %p91 = scmp.ne.s32.totalorder %s74, %s90
    %p92 = scmp.eq.s32.totalorder %s14, 0
    %p93 = por %p91, %p92
    %p94 = scmp.le.s32.totalorder 1, %s8
    %p95 = scmp.lt.s32.totalorder %s8, 3
    %p96 = pnand %p94, %p95
    %p97 = pneg %p96
    // Predicated region
    $region9: #{transformer_forward.26} parent=5 // pred_check
      _
    $region10: #{transformer_forward.26} parent=5 // pred_check_branch
      %99 = sbr.rel (%p96) target = $region12
    $region11: #{transformer_forward.26} parent=5 // pred_region
      %s100 = ssub.s32 %s8, 1
    $region12: #{transformer_forward.26} parent=5 // pred_fallthru
      _
    %p101 = scmp.lt.s32.totalorder %s8, 2
    // Predicated region
    $region13: #{transformer_forward.26} parent=5 // pred_check
      %p102 = pneg %p101
    $region14: #{transformer_forward.26} parent=5 // pred_check_branch
      %104 = sbr.rel (%p102) target = $region16
    $region15: #{transformer_forward.26} parent=5 // pred_region
      // Predicated region
      $region17: #{transformer_forward.26} parent=15 // pred_check
        %p105 = pneg %p28
      $region18: #{transformer_forward.26} parent=15 // pred_check_branch
        %107 = sbr.rel (%p105) target = $region20
      $region19: #{transformer_forward.26} parent=15 // pred_region
        %p108 = scmp.lt.s32.totalorder %s8, 1
        %s109 = scalar_select %p108, %s8, 1
        %s110 = smul.addr %s109, 8
        %s111 = scalar_lea.vmem %s0, %s110
      $region20: #{transformer_forward.26} parent=15 // pred_fallthru
        _
      // Predicated region
      $region21: #{transformer_forward.26} parent=15 // pred_check
        %p112 = pneg %p54
      $region22: #{transformer_forward.26} parent=15 // pred_check_branch
        %114 = sbr.rel (%p112) target = $region24
      $region23: #{transformer_forward.26} parent=15 // pred_region
        %p115 = scmp.lt.s32.totalorder %s8, 1
        %s116 = scalar_select %p115, %s8, 1
        %s117 = smul.addr %s116, 8
        %s118 = scalar_lea.vmem %s1, %s117
      $region24: #{transformer_forward.26} parent=15 // pred_fallthru
        _
    $region16: #{transformer_forward.26} parent=5 // pred_fallthru
      _
    %p119 = scmp.le.s32.totalorder 1, %s8
    %p120 = scmp.lt.s32.totalorder %s8, 3
    %p121 = pnand %p119, %p120
    %p122 = pneg %p121
    // Predicated region
    $region25: #{transformer_forward.26} parent=5 // pred_check
      _
    $region26: #{transformer_forward.26} parent=5 // pred_check_branch
      %124 = sbr.rel (%p121) target = $region28
    $region27: #{transformer_forward.26} parent=5 // pred_region
      %s125 = ssub.s32 %s8, 1
      %p126 = scmp.lt.s32.totalorder %s13, 1
      %s127 = scalar_select %p126, %s13, 1
      %s128 = smul.addr %s127, 8
      %s129 = scalar_lea.vmem %s0, %s128
      %p130 = pneg %p34
      %p131 = pneg %p31
      %p132 = scmp.lt.s32.totalorder %s13, 1
      %s133 = scalar_select %p132, %s13, 1
      %s134 = smul.addr %s133, 8
      %s135 = scalar_lea.vmem %s1, %s134
      %p136 = pneg %p60
      %p137 = pneg %p57
      %p138 = pneg %p86
      %p139 = pneg %p83
      %p140 = scmp.lt.s32.totalorder %s13, 1
      %s141 = scalar_select %p140, %s13, 1
      %s142 = smul.addr %s141, 8
      %s143 = scalar_lea.vmem %s2, %s142
      %p144 = scmp.lt.s32.totalorder %s13, 1
      %s145 = scalar_select %p144, %s13, 1
      %s146 = smul.addr %s145, 8
      %s147 = scalar_lea.vmem %s0, %s146
      %p148 = scmp.lt.s32.totalorder %s13, 1
      %s149 = scalar_select %p148, %s13, 1
      %s150 = smul.addr %s149, 8
      %s151 = scalar_lea.vmem %s1, %s150
      %p152 = scmp.lt.s32.totalorder %s13, 1
      %s153 = scalar_select %p152, %s13, 1
      %s154 = smul.addr %s153, 8
      %s155 = scalar_lea.vmem %s2, %s154
      %v157 = vld [vmem:[%s147] sm:$0xff]
      %v158 = vld [vmem:[%s151] sm:$0xff]
      %vm159 = vcmp.gt.s32.totalorder %v158, 0
      %v160 = vpack.c.bf16 %v157, %v157
      %162 = vrot.lane.b32.xlu0 %v160, 96
      %v163 = vpop.permute.xlu0 %162
      %vm164 = vcmask 64512
      %v166 = vsel %vm164, %v160, 0
      %v169 = vsel %vm164, %v163, 0
      %171 = vmatprep.subr.bf16.mxu0 0
      %172 = vmatpush1.bf16.xpose.msra.mxu0 0
      %173 = vmatprep.subr.bf16.mxu0 0
      %174 = vmatpush1.bf16.xpose.msra.mxu0 0
      %175 = vmatprep.subr.bf16.mxu0 0
      %176 = vmatpush1.bf16.xpose.msra.mxu0 0
      %177 = vmatprep.subr.bf16.mxu0 0
      %178 = vmatpush1.bf16.xpose.msra.mxu0 0
      %179 = vmatprep.subr.bf16.mxu0 0
      %180 = vmatpush1.bf16.xpose.msra.mxu0 0
      %181 = vmatprep.subr.bf16.mxu0 0
      %182 = vmatpush1.bf16.xpose.msra.mxu0 0
      %183 = vmatprep.subr.bf16.mxu0 0
      %184 = vmatpush1.bf16.xpose.msra.mxu0 0
      %185 = vmatprep.subr.bf16.mxu0 0
      %186 = vmatpush1.bf16.xpose.msra.mxu0 %v169
      %187 = vmatprep.subr.bf16.mxu0 0
      %188 = vmatpush2.bf16.xpose.msra.mxu0 0
      %189 = vmatprep.subr.bf16.mxu0 0
      %190 = vmatpush2.bf16.xpose.msra.mxu0 0
      %191 = vmatprep.subr.bf16.mxu0 0
      %192 = vmatpush2.bf16.xpose.msra.mxu0 0
      %193 = vmatprep.subr.bf16.mxu0 0
      %194 = vmatpush2.bf16.xpose.msra.mxu0 0
      %195 = vmatprep.subr.bf16.mxu0 0
      %196 = vmatpush2.bf16.xpose.msra.mxu0 0
      %197 = vmatprep.subr.bf16.mxu0 0
      %198 = vmatpush2.bf16.xpose.msra.mxu0 0
      %199 = vmatprep.subr.bf16.mxu0 0
      %200 = vmatpush2.bf16.xpose.msra.mxu0 0
      %201 = vmatprep.subr.bf16.mxu0 0
      %202 = vmatpush2.bf16.xpose.msra.mxu0 0
      %203 = vmatprep.mubr.bf16.mxu0 0
      %204 = vmatmul.mubr.bf16.gmra.mxu0 %v166
      %v205 = vpop.f32.mrf.mxu0
      %v206 = vadd.f32 0.0, %v205
      %v207 = vpop.f32.mrf.mxu0
      %v208 = vpop.f32.mrf.mxu0
      %v209 = vpop.f32.mrf.mxu0
      %210 = vdwg.mxu0
      %v211 = vmul.f32 %v206, 0.35355338
      %v212 = vsel %vm159, -1e+09, %v211
      %v213 = vsel %vm164, %v212, -inf
      %214 = vmax.xlane.f32.xlu0 %v213
      %v215 = vpop.xlane.xlu0 %214
      %v216 = vsub.f32 %v212, %v215
      %v217 = vmul.f32 %v216, 1.442695
      %v218 = vpow.pop %v217
      %v219 = vsel %vm164, %v218, 0.0
      %220 = vadd.xlane.f32.xlu0 %v219
      %v221 = vpop.xlane.xlu0 %220
      %v222 = vrcp.pop %v221
      %v223 = vmul.f32 %v218, %v222
      %v224 = vpack.c.bf16 %v223, %v223
      %225 = vrot.lane.b32.xlu0 %v160, 64
      %v226 = vpop.permute.xlu0 %225
      %v228 = vsel %vm164, %v224, 0
      %vm230 = vcmask 1043456
      %v232 = vsel %vm230, %v226, 0
      %234 = vmatprep.subr.bf16.mxu0 0
      %235 = vmatpush1.bf16.msra.mxu0 0
      %236 = vmatprep.subr.bf16.mxu0 0
      %237 = vmatpush1.bf16.msra.mxu0 0
      %238 = vmatprep.subr.bf16.mxu0 0
      %239 = vmatpush1.bf16.msra.mxu0 0
      %240 = vmatprep.subr.bf16.mxu0 0
      %241 = vmatpush1.bf16.msra.mxu0 0
      %242 = vmatprep.subr.bf16.mxu0 0
      %243 = vmatpush1.bf16.msra.mxu0 0
      %244 = vmatprep.subr.bf16.mxu0 0
      %245 = vmatpush1.bf16.msra.mxu0 0
      %246 = vmatprep.subr.bf16.mxu0 0
      %247 = vmatpush1.bf16.msra.mxu0 0
      %248 = vmatprep.subr.bf16.mxu0 0
      %249 = vmatpush1.bf16.msra.mxu0 %v232
      %250 = vmatprep.subr.bf16.mxu0 0
      %251 = vmatpush2.bf16.msra.mxu0 0
      %252 = vmatprep.subr.bf16.mxu0 0
      %253 = vmatpush2.bf16.msra.mxu0 0
      %254 = vmatprep.subr.bf16.mxu0 0
      %255 = vmatpush2.bf16.msra.mxu0 0
      %256 = vmatprep.subr.bf16.mxu0 0
      %257 = vmatpush2.bf16.msra.mxu0 0
      %258 = vmatprep.subr.bf16.mxu0 0
      %259 = vmatpush2.bf16.msra.mxu0 0
      %260 = vmatprep.subr.bf16.mxu0 0
      %261 = vmatpush2.bf16.msra.mxu0 0
      %262 = vmatprep.subr.bf16.mxu0 0
      %263 = vmatpush2.bf16.msra.mxu0 0
      %264 = vmatprep.subr.bf16.mxu0 0
      %265 = vmatpush2.bf16.msra.mxu0 0
      %266 = vmatprep.mubr.bf16.mxu0 0
      %267 = vmatmul.mubr.bf16.gmra.mxu0 %v228
      %v268 = vpop.f32.mrf.mxu0
      %v269 = vadd.f32 0.0, %v268
      %v270 = vpop.f32.mrf.mxu0
      %v271 = vpop.f32.mrf.mxu0
      %v272 = vpop.f32.mrf.mxu0
      %273 = vdwg.mxu0
      %274 = vrot.lane.b32.xlu0 %v160, 120
      %v275 = vpop.permute.xlu0 %274
      %276 = vrot.lane.b32.xlu0 %v160, 88
      %v277 = vpop.permute.xlu0 %276
      %v279 = vsel %vm164, %v275, 0
      %v282 = vsel %vm164, %v277, 0
      %284 = vmatprep.subr.bf16.mxu0 0
      %285 = vmatpush1.bf16.xpose.msra.mxu0 0
      %286 = vmatprep.subr.bf16.mxu0 0
      %287 = vmatpush1.bf16.xpose.msra.mxu0 0
      %288 = vmatprep.subr.bf16.mxu0 0
      %289 = vmatpush1.bf16.xpose.msra.mxu0 0
      %290 = vmatprep.subr.bf16.mxu0 0
      %291 = vmatpush1.bf16.xpose.msra.mxu0 0
      %292 = vmatprep.subr.bf16.mxu0 0
      %293 = vmatpush1.bf16.xpose.msra.mxu0 0
      %294 = vmatprep.subr.bf16.mxu0 0
      %295 = vmatpush1.bf16.xpose.msra.mxu0 0
      %296 = vmatprep.subr.bf16.mxu0 0
      %297 = vmatpush1.bf16.xpose.msra.mxu0 0
      %298 = vmatprep.subr.bf16.mxu0 0
      %299 = vmatpush1.bf16.xpose.msra.mxu0 %v282
      %300 = vmatprep.subr.bf16.mxu0 0
      %301 = vmatpush2.bf16.xpose.msra.mxu0 0
      %302 = vmatprep.subr.bf16.mxu0 0
      %303 = vmatpush2.bf16.xpose.msra.mxu0 0
      %304 = vmatprep.subr.bf16.mxu0 0
      %305 = vmatpush2.bf16.xpose.msra.mxu0 0
      %306 = vmatprep.subr.bf16.mxu0 0
      %307 = vmatpush2.bf16.xpose.msra.mxu0 0
      %308 = vmatprep.subr.bf16.mxu0 0
      %309 = vmatpush2.bf16.xpose.msra.mxu0 0
      %310 = vmatprep.subr.bf16.mxu0 0
      %311 = vmatpush2.bf16.xpose.msra.mxu0 0
      %312 = vmatprep.subr.bf16.mxu0 0
      %313 = vmatpush2.bf16.xpose.msra.mxu0 0
      %314 = vmatprep.subr.bf16.mxu0 0
      %315 = vmatpush2.bf16.xpose.msra.mxu0 0
      %316 = vmatprep.mubr.bf16.mxu0 0
      %317 = vmatmul.mubr.bf16.gmra.mxu0 %v279
      %v318 = vpop.f32.mrf.mxu0
      %v319 = vadd.f32 0.0, %v318
      %v320 = vpop.f32.mrf.mxu0
      %v321 = vpop.f32.mrf.mxu0
      %v322 = vpop.f32.mrf.mxu0
      %323 = vdwg.mxu0
      %v324 = vmul.f32 %v319, 0.35355338
      %v325 = vsel %vm159, -1e+09, %v324
      %v326 = vsel %vm164, %v325, -inf
      %327 = vmax.xlane.f32.xlu0 %v326
      %v328 = vpop.xlane.xlu0 %327
      %v329 = vsub.f32 %v325, %v328
      %v330 = vmul.f32 %v329, 1.442695
      %v331 = vpow.pop %v330
      %v332 = vsel %vm164, %v331, 0.0
      %333 = vadd.xlane.f32.xlu0 %v332
      %v334 = vpop.xlane.xlu0 %333
      %v335 = vrcp.pop %v334
      %v336 = vmul.f32 %v331, %v335
      %v337 = vpack.c.bf16 %v336, %v336
      %338 = vrot.lane.b32.xlu0 %v160, 56
      %v339 = vpop.permute.xlu0 %338
      %v341 = vsel %vm164, %v337, 0
      %v344 = vsel %vm230, %v339, 0
      %346 = vmatprep.subr.bf16.mxu0 0
      %347 = vmatpush1.bf16.msra.mxu0 0
      %348 = vmatprep.subr.bf16.mxu0 0
      %349 = vmatpush1.bf16.msra.mxu0 0
      %350 = vmatprep.subr.bf16.mxu0 0
      %351 = vmatpush1.bf16.msra.mxu0 0
      %352 = vmatprep.subr.bf16.mxu0 0
      %353 = vmatpush1.bf16.msra.mxu0 0
      %354 = vmatprep.subr.bf16.mxu0 0
      %355 = vmatpush1.bf16.msra.mxu0 0
      %356 = vmatprep.subr.bf16.mxu0 0
      %357 = vmatpush1.bf16.msra.mxu0 0
      %358 = vmatprep.subr.bf16.mxu0 0
      %359 = vmatpush1.bf16.msra.mxu0 0
      %360 = vmatprep.subr.bf16.mxu0 0
      %361 = vmatpush1.bf16.msra.mxu0 %v344
      %362 = vmatprep.subr.bf16.mxu0 0
      %363 = vmatpush2.bf16.msra.mxu0 0
      %364 = vmatprep.subr.bf16.mxu0 0
      %365 = vmatpush2.bf16.msra.mxu0 0
      %366 = vmatprep.subr.bf16.mxu0 0
      %367 = vmatpush2.bf16.msra.mxu0 0
      %368 = vmatprep.subr.bf16.mxu0 0
      %369 = vmatpush2.bf16.msra.mxu0 0
      %370 = vmatprep.subr.bf16.mxu0 0
      %371 = vmatpush2.bf16.msra.mxu0 0
      %372 = vmatprep.subr.bf16.mxu0 0
      %373 = vmatpush2.bf16.msra.mxu0 0
      %374 = vmatprep.subr.bf16.mxu0 0
      %375 = vmatpush2.bf16.msra.mxu0 0
      %376 = vmatprep.subr.bf16.mxu0 0
      %377 = vmatpush2.bf16.msra.mxu0 0
      %378 = vmatprep.mubr.bf16.mxu0 0
      %379 = vmatmul.mubr.bf16.gmra.mxu0 %v341
      %v380 = vpop.f32.mrf.mxu0
      %v381 = vadd.f32 0.0, %v380
      %v382 = vpop.f32.mrf.mxu0
      %v383 = vpop.f32.mrf.mxu0
      %v384 = vpop.f32.mrf.mxu0
      %385 = vdwg.mxu0
      %386 = vrot.lane.b32.xlu0 %v160, 112
      %v387 = vpop.permute.xlu0 %386
      %388 = vrot.lane.b32.xlu0 %v160, 80
      %v389 = vpop.permute.xlu0 %388
      %v391 = vsel %vm164, %v387, 0
      %v394 = vsel %vm164, %v389, 0
      %396 = vmatprep.subr.bf16.mxu0 0
      %397 = vmatpush1.bf16.xpose.msra.mxu0 0
      %398 = vmatprep.subr.bf16.mxu0 0
      %399 = vmatpush1.bf16.xpose.msra.mxu0 0
      %400 = vmatprep.subr.bf16.mxu0 0
      %401 = vmatpush1.bf16.xpose.msra.mxu0 0
      %402 = vmatprep.subr.bf16.mxu0 0
      %403 = vmatpush1.bf16.xpose.msra.mxu0 0
      %404 = vmatprep.subr.bf16.mxu0 0
      %405 = vmatpush1.bf16.xpose.msra.mxu0 0
      %406 = vmatprep.subr.bf16.mxu0 0
      %407 = vmatpush1.bf16.xpose.msra.mxu0 0
      %408 = vmatprep.subr.bf16.mxu0 0
      %409 = vmatpush1.bf16.xpose.msra.mxu0 0
      %410 = vmatprep.subr.bf16.mxu0 0
      %411 = vmatpush1.bf16.xpose.msra.mxu0 %v394
      %412 = vmatprep.subr.bf16.mxu0 0
      %413 = vmatpush2.bf16.xpose.msra.mxu0 0
      %414 = vmatprep.subr.bf16.mxu0 0
      %415 = vmatpush2.bf16.xpose.msra.mxu0 0
      %416 = vmatprep.subr.bf16.mxu0 0
      %417 = vmatpush2.bf16.xpose.msra.mxu0 0
      %418 = vmatprep.subr.bf16.mxu0 0
      %419 = vmatpush2.bf16.xpose.msra.mxu0 0
      %420 = vmatprep.subr.bf16.mxu0 0
      %421 = vmatpush2.bf16.xpose.msra.mxu0 0
      %422 = vmatprep.subr.bf16.mxu0 0
      %423 = vmatpush2.bf16.xpose.msra.mxu0 0
      %424 = vmatprep.subr.bf16.mxu0 0
      %425 = vmatpush2.bf16.xpose.msra.mxu0 0
      %426 = vmatprep.subr.bf16.mxu0 0
      %427 = vmatpush2.bf16.xpose.msra.mxu0 0
      %428 = vmatprep.mubr.bf16.mxu0 0
      %429 = vmatmul.mubr.bf16.gmra.mxu0 %v391
      %v430 = vpop.f32.mrf.mxu0
      %v431 = vadd.f32 0.0, %v430
      %v432 = vpop.f32.mrf.mxu0
      %v433 = vpop.f32.mrf.mxu0
      %v434 = vpop.f32.mrf.mxu0
      %435 = vdwg.mxu0
      %v436 = vmul.f32 %v431, 0.35355338
      %v437 = vsel %vm159, -1e+09, %v436
      %v438 = vsel %vm164, %v437, -inf
      %439 = vmax.xlane.f32.xlu0 %v438
      %v440 = vpop.xlane.xlu0 %439
      %v441 = vsub.f32 %v437, %v440
      %v442 = vmul.f32 %v441, 1.442695
      %v443 = vpow.pop %v442
      %v444 = vsel %vm164, %v443, 0.0
      %445 = vadd.xlane.f32.xlu0 %v444
      %v446 = vpop.xlane.xlu0 %445
      %v447 = vrcp.pop %v446
      %v448 = vmul.f32 %v443, %v447
      %v449 = vpack.c.bf16 %v448, %v448
      %450 = vrot.lane.b32.xlu0 %v160, 48
      %v451 = vpop.permute.xlu0 %450
      %v453 = vsel %vm164, %v449, 0
      %v456 = vsel %vm230, %v451, 0
      %458 = vmatprep.subr.bf16.mxu0 0
      %459 = vmatpush1.bf16.msra.mxu0 0
      %460 = vmatprep.subr.bf16.mxu0 0
      %461 = vmatpush1.bf16.msra.mxu0 0
      %462 = vmatprep.subr.bf16.mxu0 0
      %463 = vmatpush1.bf16.msra.mxu0 0
      %464 = vmatprep.subr.bf16.mxu0 0
      %465 = vmatpush1.bf16.msra.mxu0 0
      %466 = vmatprep.subr.bf16.mxu0 0
      %467 = vmatpush1.bf16.msra.mxu0 0
      %468 = vmatprep.subr.bf16.mxu0 0
      %469 = vmatpush1.bf16.msra.mxu0 0
      %470 = vmatprep.subr.bf16.mxu0 0
      %471 = vmatpush1.bf16.msra.mxu0 0
      %472 = vmatprep.subr.bf16.mxu0 0
      %473 = vmatpush1.bf16.msra.mxu0 %v456
      %474 = vmatprep.subr.bf16.mxu0 0
      %475 = vmatpush2.bf16.msra.mxu0 0
      %476 = vmatprep.subr.bf16.mxu0 0
      %477 = vmatpush2.bf16.msra.mxu0 0
      %478 = vmatprep.subr.bf16.mxu0 0
      %479 = vmatpush2.bf16.msra.mxu0 0
      %480 = vmatprep.subr.bf16.mxu0 0
      %481 = vmatpush2.bf16.msra.mxu0 0
      %482 = vmatprep.subr.bf16.mxu0 0
      %483 = vmatpush2.bf16.msra.mxu0 0
      %484 = vmatprep.subr.bf16.mxu0 0
      %485 = vmatpush2.bf16.msra.mxu0 0
      %486 = vmatprep.subr.bf16.mxu0 0
      %487 = vmatpush2.bf16.msra.mxu0 0
      %488 = vmatprep.subr.bf16.mxu0 0
      %489 = vmatpush2.bf16.msra.mxu0 0
      %490 = vmatprep.mubr.bf16.mxu0 0
      %491 = vmatmul.mubr.bf16.gmra.mxu0 %v453
      %v492 = vpop.f32.mrf.mxu0
      %v493 = vadd.f32 0.0, %v492
      %v494 = vpop.f32.mrf.mxu0
      %v495 = vpop.f32.mrf.mxu0
      %v496 = vpop.f32.mrf.mxu0
      %497 = vdwg.mxu0
      %498 = vrot.lane.b32.xlu0 %v160, 104
      %v499 = vpop.permute.xlu0 %498
      %500 = vrot.lane.b32.xlu0 %v160, 72
      %v501 = vpop.permute.xlu0 %500
      %v503 = vsel %vm164, %v499, 0
      %v506 = vsel %vm164, %v501, 0
      %508 = vmatprep.subr.bf16.mxu0 0
      %509 = vmatpush1.bf16.xpose.msra.mxu0 0
      %510 = vmatprep.subr.bf16.mxu0 0
      %511 = vmatpush1.bf16.xpose.msra.mxu0 0
      %512 = vmatprep.subr.bf16.mxu0 0
      %513 = vmatpush1.bf16.xpose.msra.mxu0 0
      %514 = vmatprep.subr.bf16.mxu0 0
      %515 = vmatpush1.bf16.xpose.msra.mxu0 0
      %516 = vmatprep.subr.bf16.mxu0 0
      %517 = vmatpush1.bf16.xpose.msra.mxu0 0
      %518 = vmatprep.subr.bf16.mxu0 0
      %519 = vmatpush1.bf16.xpose.msra.mxu0 0
      %520 = vmatprep.subr.bf16.mxu0 0
      %521 = vmatpush1.bf16.xpose.msra.mxu0 0
      %522 = vmatprep.subr.bf16.mxu0 0
      %523 = vmatpush1.bf16.xpose.msra.mxu0 %v506
      %524 = vmatprep.subr.bf16.mxu0 0
      %525 = vmatpush2.bf16.xpose.msra.mxu0 0
      %526 = vmatprep.subr.bf16.mxu0 0
      %527 = vmatpush2.bf16.xpose.msra.mxu0 0
      %528 = vmatprep.subr.bf16.mxu0 0
      %529 = vmatpush2.bf16.xpose.msra.mxu0 0
      %530 = vmatprep.subr.bf16.mxu0 0
      %531 = vmatpush2.bf16.xpose.msra.mxu0 0
      %532 = vmatprep.subr.bf16.mxu0 0
      %533 = vmatpush2.bf16.xpose.msra.mxu0 0
      %534 = vmatprep.subr.bf16.mxu0 0
      %535 = vmatpush2.bf16.xpose.msra.mxu0 0
      %536 = vmatprep.subr.bf16.mxu0 0
      %537 = vmatpush2.bf16.xpose.msra.mxu0 0
      %538 = vmatprep.subr.bf16.mxu0 0
      %539 = vmatpush2.bf16.xpose.msra.mxu0 0
      %540 = vmatprep.mubr.bf16.mxu0 0
      %541 = vmatmul.mubr.bf16.gmra.mxu0 %v503
      %v542 = vpop.f32.mrf.mxu0
      %v543 = vadd.f32 0.0, %v542
      %v544 = vpop.f32.mrf.mxu0
      %v545 = vpop.f32.mrf.mxu0
      %v546 = vpop.f32.mrf.mxu0
      %547 = vdwg.mxu0
      %v548 = vmul.f32 %v543, 0.35355338
      %v549 = vsel %vm159, -1e+09, %v548
      %v550 = vsel %vm164, %v549, -inf
      %551 = vmax.xlane.f32.xlu0 %v550
      %v552 = vpop.xlane.xlu0 %551
      %v553 = vsub.f32 %v549, %v552
      %v554 = vmul.f32 %v553, 1.442695
      %v555 = vpow.pop %v554
      %v556 = vsel %vm164, %v555, 0.0
      %557 = vadd.xlane.f32.xlu0 %v556
      %v558 = vpop.xlane.xlu0 %557
      %v559 = vrcp.pop %v558
      %v560 = vmul.f32 %v555, %v559
      %v561 = vpack.c.bf16 %v560, %v560
      %562 = vrot.lane.b32.xlu0 %v160, 40
      %v563 = vpop.permute.xlu0 %562
      %v565 = vsel %vm164, %v561, 0
      %v568 = vsel %vm230, %v563, 0
      %570 = vmatprep.subr.bf16.mxu0 0
      %571 = vmatpush1.bf16.msra.mxu0 0
      %572 = vmatprep.subr.bf16.mxu0 0
      %573 = vmatpush1.bf16.msra.mxu0 0
      %574 = vmatprep.subr.bf16.mxu0 0
      %575 = vmatpush1.bf16.msra.mxu0 0
      %576 = vmatprep.subr.bf16.mxu0 0
      %577 = vmatpush1.bf16.msra.mxu0 0
      %578 = vmatprep.subr.bf16.mxu0 0
      %579 = vmatpush1.bf16.msra.mxu0 0
      %580 = vmatprep.subr.bf16.mxu0 0
      %581 = vmatpush1.bf16.msra.mxu0 0
      %582 = vmatprep.subr.bf16.mxu0 0
      %583 = vmatpush1.bf16.msra.mxu0 0
      %584 = vmatprep.subr.bf16.mxu0 0
      %585 = vmatpush1.bf16.msra.mxu0 %v568
      %586 = vmatprep.subr.bf16.mxu0 0
      %587 = vmatpush2.bf16.msra.mxu0 0
      %588 = vmatprep.subr.bf16.mxu0 0
      %589 = vmatpush2.bf16.msra.mxu0 0
      %590 = vmatprep.subr.bf16.mxu0 0
      %591 = vmatpush2.bf16.msra.mxu0 0
      %592 = vmatprep.subr.bf16.mxu0 0
      %593 = vmatpush2.bf16.msra.mxu0 0
      %594 = vmatprep.subr.bf16.mxu0 0
      %595 = vmatpush2.bf16.msra.mxu0 0
      %596 = vmatprep.subr.bf16.mxu0 0
      %597 = vmatpush2.bf16.msra.mxu0 0
      %598 = vmatprep.subr.bf16.mxu0 0
      %599 = vmatpush2.bf16.msra.mxu0 0
      %600 = vmatprep.subr.bf16.mxu0 0
      %601 = vmatpush2.bf16.msra.mxu0 0
      %602 = vmatprep.mubr.bf16.mxu0 0
      %603 = vmatmul.mubr.bf16.gmra.mxu0 %v565
      %v604 = vpop.f32.mrf.mxu0
      %v605 = vadd.f32 0.0, %v604
      %v606 = vpop.f32.mrf.mxu0
      %v607 = vpop.f32.mrf.mxu0
      %v608 = vpop.f32.mrf.mxu0
      %609 = vdwg.mxu0
      %611 = vrot.lane.b32.xlu0 %v381, 8
      %v612 = vpop.permute.xlu0 %611
      %615 = vrot.lane.b32.xlu0 %v493, 16
      %v616 = vpop.permute.xlu0 %615
      %619 = vrot.lane.b32.xlu0 %v605, 24
      %v620 = vpop.permute.xlu0 %619
      %v622 = vsel %vm164, %v269, %v612
      %vm623 = vcmask 130048
      %v624 = vsel %vm623, %v622, %v616
      %vm625 = vcmask 195584
      %v626 = vsel %vm625, %v624, %v620
      %vm627 = vcmask 261120
      %628 = vst.msk [vmem:[%s155] sm:$0xff] %vm627, %v626
      %p629 = scmp.lt.s32.totalorder %s13, 1
      %s630 = scalar_select %p629, %s13, 1
      %s631 = smul.addr %s630, 8
      %s632 = scalar_lea.vmem %s2, %s631
      // Predicated region
      $region29: #{transformer_forward.26} parent=27 // pred_check
        %p633 = pneg %p83
      $region30: #{transformer_forward.26} parent=27 // pred_check_branch
        %635 = sbr.rel (%p633) target = $region32
      $region31: #{transformer_forward.26} parent=27 // pred_region
        _
      $region32: #{transformer_forward.26} parent=27 // pred_fallthru
        _
    $region28: #{transformer_forward.26} parent=5 // pred_fallthru
      _
    %p636 = scmp.le.s32.totalorder 2, %s8
    // Predicated region
    $region33: #{transformer_forward.26} parent=5 // pred_check
      %p637 = pneg %p636
    $region34: #{transformer_forward.26} parent=5 // pred_check_branch
      %639 = sbr.rel (%p637) target = $region36
    $region35: #{transformer_forward.26} parent=5 // pred_region
      %s640 = ssub.s32 %s8, 2
      // Predicated region
      $region37: #{transformer_forward.26} parent=35 // pred_check
        %p641 = pneg %p89
      $region38: #{transformer_forward.26} parent=35 // pred_check_branch
        %643 = sbr.rel (%p641) target = $region40
      $region39: #{transformer_forward.26} parent=35 // pred_region
        %p644 = scmp.lt.s32.totalorder %s14, 1
        %s645 = scalar_select %p644, %s14, 1
        %s646 = smul.addr %s645, 8
        %s647 = scalar_lea.vmem %s2, %s646
      $region40: #{transformer_forward.26} parent=35 // pred_fallthru
        _
    $region36: #{transformer_forward.26} parent=5 // pred_fallthru
      _
  $region6: #{transformer_forward.26} parent=0 // loop_footer
    %s12 = sadd.s32 1, %s8
  $region7: #{transformer_forward.26} parent=0 // loop_footer_branch
    %7 = sbr.rel target = $region3
  $region8: #{transformer_forward.26} parent=0 // loop_exit
    _

// kernel: transformer_forward.37
$region0: #{transformer_forward.37}
  #allocation0 [shape = 'u32[]', space=smem, size = 0x4, offset = 0x4, fixed_abs, tag = 'smem constant byte address 0x4 - core index']
  #allocation1 [shape = 'u32[144,128]{1,0:T(1,128)}', space=vmem, size = 0x12000, scoped, tag = 'internal scratch']
  #allocation2 [shape = 'f32[16,64]{1,0:T(8,128)}', space=vmem, size = 0x2000, scoped, tag = 'scratch operand']
  %s0 = inlined_call_operand.vmem [shape: f32[16,32], index: 0, kind: input, shape index: {}]
  %s1 = inlined_call_operand.vmem [shape: f32[32,64], index: 1, kind: input, shape index: {}]
  %s2 = inlined_call_operand.vmem [shape: f32[1,64], index: 2, kind: input, shape index: {}]
  %s3 = inlined_call_operand.vmem [shape: f32[16,64], index: 3, kind: output, shape index: {}]
  %s4 = sld [smem:[#allocation0]]
  $region30: #{transformer_forward.37} parent=0
    _
  %s6 = ssub.s32 1, %s4
  %s7 = scalar_select 0, %s6, %s4
  // Predicated region
  $region2: #{transformer_forward.37} parent=0 // pred_check
    _
  $region3: #{transformer_forward.37} parent=0 // pred_check_branch
    %9 = sbr.rel (0) target = $region5
  $region4: #{transformer_forward.37} parent=0 // pred_region
    _
  $region5: #{transformer_forward.37} parent=0 // pred_fallthru
    _
  // Predicated region
  $region6: #{transformer_forward.37} parent=0 // pred_check
    _
  $region7: #{transformer_forward.37} parent=0 // pred_check_branch
    %11 = sbr.rel (0) target = $region9
  $region8: #{transformer_forward.37} parent=0 // pred_region
    _
  $region9: #{transformer_forward.37} parent=0 // pred_fallthru
    _
  // Predicated region
  $region10: #{transformer_forward.37} parent=0 // pred_check
    _
  $region11: #{transformer_forward.37} parent=0 // pred_check_branch
    %13 = sbr.rel (0) target = $region13
  $region12: #{transformer_forward.37} parent=0 // pred_region
    _
  $region13: #{transformer_forward.37} parent=0 // pred_fallthru
    _
  %p15 = scmp.eq.s32.totalorder 0, 0
  // Predicated region
  $region14: #{transformer_forward.37} parent=0 // pred_check
    %p16 = pneg %p15
  $region15: #{transformer_forward.37} parent=0 // pred_check_branch
    %18 = sbr.rel (%p16) target = $region17
  $region16: #{transformer_forward.37} parent=0 // pred_region
    %vm19 = vcmask 523264
    %20 = vst.msk [vmem:[#allocation2] sm:$0xff] %vm19, 0.0
    %21 = vst.msk [vmem:[#allocation2 + $0x8] sm:$0xff] %vm19, 0.0
  $region17: #{transformer_forward.37} parent=0 // pred_fallthru
    _
  %v22 = vld [vmem:[#allocation2] sm:$0xff]
  %v23 = vld [vmem:[#allocation2 + $0x8] sm:$0xff]
  %v24 = vld [vmem:[%s0] sm:$0xff]
  %v25 = vld [vmem:[%s0 + $0x8] sm:$0xff]
  %v26 = vpack.c.bf16 %v25, %v24
  %v27 = vld [vmem:[%s1] sm:$0xff]
  %v28 = vld [vmem:[%s1 + $0x8] sm:$0xff]
  %v29 = vld [vmem:[%s1 + $0x10] sm:$0xff]
  %v30 = vld [vmem:[%s1 + $0x18] sm:$0xff]
  %v31 = vpack.c.bf16 %v28, %v27
  %v32 = vpack.c.bf16 %v30, %v29
  %vm33 = vcmask 261120
  %v35 = vsel %vm33, %v26, 0
  %37 = vmatprep.subr.bf16.mxu0 0
  %38 = vmatpush1.bf16.msra.mxu0 0
  %39 = vmatprep.subr.bf16.mxu0 0
  %40 = vmatpush1.bf16.msra.mxu0 0
  %41 = vmatprep.subr.bf16.mxu0 0
  %42 = vmatpush1.bf16.msra.mxu0 0
  %43 = vmatprep.subr.bf16.mxu0 0
  %44 = vmatpush1.bf16.msra.mxu0 0
  %45 = vmatprep.subr.bf16.mxu0 0
  %46 = vmatpush1.bf16.msra.mxu0 0
  %47 = vmatprep.subr.bf16.mxu0 0
  %48 = vmatpush1.bf16.msra.mxu0 0
  %49 = vmatprep.subr.bf16.mxu0 0
  %50 = vmatpush1.bf16.msra.mxu0 %v32
  %51 = vmatprep.subr.bf16.mxu0 0
  %52 = vmatpush1.bf16.msra.mxu0 %v31
  %53 = vmatprep.subr.bf16.mxu0 0
  %54 = vmatpush2.bf16.msra.mxu0 0
  %55 = vmatprep.subr.bf16.mxu0 0
  %56 = vmatpush2.bf16.msra.mxu0 0
  %57 = vmatprep.subr.bf16.mxu0 0
  %58 = vmatpush2.bf16.msra.mxu0 0
  %59 = vmatprep.subr.bf16.mxu0 0
  %60 = vmatpush2.bf16.msra.mxu0 0
  %61 = vmatprep.subr.bf16.mxu0 0
  %62 = vmatpush2.bf16.msra.mxu0 0
  %63 = vmatprep.subr.bf16.mxu0 0
  %64 = vmatpush2.bf16.msra.mxu0 0
  %65 = vmatprep.subr.bf16.mxu0 0
  %66 = vmatpush2.bf16.msra.mxu0 0
  %67 = vmatprep.subr.bf16.mxu0 0
  %68 = vmatpush2.bf16.msra.mxu0 0
  %69 = vmatprep.mubr.bf16.mxu0 0
  %70 = vmatmul.mubr.bf16.gmra.mxu0 %v35
  %v71 = vpop.f32.mrf.mxu0
  %v72 = vadd.f32 0.0, %v71
  %v73 = vpop.f32.mrf.mxu0
  %v74 = vpop.f32.mrf.mxu0
  %v75 = vadd.f32 0.0, %v74
  %v76 = vpop.f32.mrf.mxu0
  %77 = vdwg.mxu0
  %v78 = vadd.f32 %v22, %v72
  %v79 = vadd.f32 %v23, %v75
  %vm80 = vcmask 523264
  %81 = vst.msk [vmem:[#allocation2] sm:$0xff] %vm80, %v78
  %82 = vst.msk [vmem:[#allocation2 + $0x8] sm:$0xff] %vm80, %v79
  // Predicated region
  $region18: #{transformer_forward.37} parent=0 // pred_check
    %p83 = pneg %p15
  $region19: #{transformer_forward.37} parent=0 // pred_check_branch
    %85 = sbr.rel (%p83) target = $region21
  $region20: #{transformer_forward.37} parent=0 // pred_region
    %v86 = vld [vmem:[#allocation2] sm:$0xff]
    %v87 = vld [vmem:[#allocation2 + $0x8] sm:$0xff]
    %v88 = vld [vmem:[%s2] sm:$0x1]
    %v90 = vlaneseq
    %v91 = vshrl.u32 %v90, 7
    %v92 = vsub.s32 0, %v91
    %v93 = vrot.slane %v88, %v92
    %v95 = vadd.f32 %v86, %v93
    %v96 = vadd.f32 %v87, %v93
    %97 = vst.msk [vmem:[%s3] sm:$0xff] %vm80, %v95
    %98 = vst.msk [vmem:[%s3 + $0x8] sm:$0xff] %vm80, %v96
  $region21: #{transformer_forward.37} parent=0 // pred_fallthru
    _
  // Predicated region
  $region22: #{transformer_forward.37} parent=0 // pred_check
    _
  $region23: #{transformer_forward.37} parent=0 // pred_check_branch
    %100 = sbr.rel (0) target = $region25
  $region24: #{transformer_forward.37} parent=0 // pred_region
    _
  $region25: #{transformer_forward.37} parent=0 // pred_fallthru
    _
  // Predicated region
  $region26: #{transformer_forward.37} parent=0 // pred_check
    _
  $region27: #{transformer_forward.37} parent=0 // pred_check_branch
    %102 = sbr.rel (0) target = $region29
  $region28: #{transformer_forward.37} parent=0 // pred_region
    _
  $region29: #{transformer_forward.37} parent=0 // pred_fallthru
    _

// kernel: transformer_forward.36
$region0: #{transformer_forward.36}
  #allocation0 [shape = 'u32[]', space=smem, size = 0x4, offset = 0x4, fixed_abs, tag = 'smem constant byte address 0x4 - core index']
  #allocation1 [shape = 'u32[144,128]{1,0:T(1,128)}', space=vmem, size = 0x12000, scoped, tag = 'internal scratch']
  #allocation2 [shape = 'f32[16,32]{1,0:T(8,128)}', space=vmem, size = 0x2000, scoped, tag = 'scratch operand']
  %s0 = inlined_call_operand.vmem [shape: f32[16,32], index: 0, kind: input, shape index: {}]
  %s1 = inlined_call_operand.vmem [shape: f32[32,32], index: 1, kind: input, shape index: {}]
  %s2 = inlined_call_operand.vmem [shape: f32[1,32], index: 2, kind: input, shape index: {}]
  %s3 = inlined_call_operand.vmem [shape: f32[16,32], index: 3, kind: output, shape index: {}]
  %s4 = sld [smem:[#allocation0]]
  $region30: #{transformer_forward.36} parent=0
    _
  %s6 = ssub.s32 1, %s4
  %s7 = scalar_select 0, %s6, %s4
  // Predicated region
  $region2: #{transformer_forward.36} parent=0 // pred_check
    _
  $region3: #{transformer_forward.36} parent=0 // pred_check_branch
    %9 = sbr.rel (0) target = $region5
  $region4: #{transformer_forward.36} parent=0 // pred_region
    _
  $region5: #{transformer_forward.36} parent=0 // pred_fallthru
    _
  // Predicated region
  $region6: #{transformer_forward.36} parent=0 // pred_check
    _
  $region7: #{transformer_forward.36} parent=0 // pred_check_branch
    %11 = sbr.rel (0) target = $region9
  $region8: #{transformer_forward.36} parent=0 // pred_region
    _
  $region9: #{transformer_forward.36} parent=0 // pred_fallthru
    _
  // Predicated region
  $region10: #{transformer_forward.36} parent=0 // pred_check
    _
  $region11: #{transformer_forward.36} parent=0 // pred_check_branch
    %13 = sbr.rel (0) target = $region13
  $region12: #{transformer_forward.36} parent=0 // pred_region
    _
  $region13: #{transformer_forward.36} parent=0 // pred_fallthru
    _
  %p15 = scmp.eq.s32.totalorder 0, 0
  // Predicated region
  $region14: #{transformer_forward.36} parent=0 // pred_check
    %p16 = pneg %p15
  $region15: #{transformer_forward.36} parent=0 // pred_check_branch
    %18 = sbr.rel (%p16) target = $region17
  $region16: #{transformer_forward.36} parent=0 // pred_region
    %vm19 = vcmask 261120
    %20 = vst.msk [vmem:[#allocation2] sm:$0xff] %vm19, 0.0
    %21 = vst.msk [vmem:[#allocation2 + $0x8] sm:$0xff] %vm19, 0.0
  $region17: #{transformer_forward.36} parent=0 // pred_fallthru
    _
  %v22 = vld [vmem:[#allocation2] sm:$0xff]
  %v23 = vld [vmem:[#allocation2 + $0x8] sm:$0xff]
  %v24 = vld [vmem:[%s0] sm:$0xff]
  %v25 = vld [vmem:[%s0 + $0x8] sm:$0xff]
  %v26 = vpack.c.bf16 %v25, %v24
  %v27 = vld [vmem:[%s1] sm:$0xff]
  %v28 = vld [vmem:[%s1 + $0x8] sm:$0xff]
  %v29 = vld [vmem:[%s1 + $0x10] sm:$0xff]
  %v30 = vld [vmem:[%s1 + $0x18] sm:$0xff]
  %v31 = vpack.c.bf16 %v28, %v27
  %v32 = vpack.c.bf16 %v30, %v29
  %vm33 = vcmask 261120
  %v35 = vsel %vm33, %v26, 0
  %37 = vmatprep.subr.bf16.mxu0 0
  %38 = vmatpush1.bf16.msra.mxu0 0
  %39 = vmatprep.subr.bf16.mxu0 0
  %40 = vmatpush1.bf16.msra.mxu0 0
  %41 = vmatprep.subr.bf16.mxu0 0
  %42 = vmatpush1.bf16.msra.mxu0 0
  %43 = vmatprep.subr.bf16.mxu0 0
  %44 = vmatpush1.bf16.msra.mxu0 0
  %45 = vmatprep.subr.bf16.mxu0 0
  %46 = vmatpush1.bf16.msra.mxu0 0
  %47 = vmatprep.subr.bf16.mxu0 0
  %48 = vmatpush1.bf16.msra.mxu0 0
  %49 = vmatprep.subr.bf16.mxu0 0
  %50 = vmatpush1.bf16.msra.mxu0 %v32
  %51 = vmatprep.subr.bf16.mxu0 0
  %52 = vmatpush1.bf16.msra.mxu0 %v31
  %53 = vmatprep.subr.bf16.mxu0 0
  %54 = vmatpush2.bf16.msra.mxu0 0
  %55 = vmatprep.subr.bf16.mxu0 0
  %56 = vmatpush2.bf16.msra.mxu0 0
  %57 = vmatprep.subr.bf16.mxu0 0
  %58 = vmatpush2.bf16.msra.mxu0 0
  %59 = vmatprep.subr.bf16.mxu0 0
  %60 = vmatpush2.bf16.msra.mxu0 0
  %61 = vmatprep.subr.bf16.mxu0 0
  %62 = vmatpush2.bf16.msra.mxu0 0
  %63 = vmatprep.subr.bf16.mxu0 0
  %64 = vmatpush2.bf16.msra.mxu0 0
  %65 = vmatprep.subr.bf16.mxu0 0
  %66 = vmatpush2.bf16.msra.mxu0 0
  %67 = vmatprep.subr.bf16.mxu0 0
  %68 = vmatpush2.bf16.msra.mxu0 0
  %69 = vmatprep.mubr.bf16.mxu0 0
  %70 = vmatmul.mubr.bf16.gmra.mxu0 %v35
  %v71 = vpop.f32.mrf.mxu0
  %v72 = vadd.f32 0.0, %v71
  %v73 = vpop.f32.mrf.mxu0
  %v74 = vpop.f32.mrf.mxu0
  %v75 = vadd.f32 0.0, %v74
  %v76 = vpop.f32.mrf.mxu0
  %77 = vdwg.mxu0
  %v78 = vadd.f32 %v22, %v72
  %v79 = vadd.f32 %v23, %v75
  %80 = vst.msk [vmem:[#allocation2] sm:$0xff] %vm33, %v78
  %81 = vst.msk [vmem:[#allocation2 + $0x8] sm:$0xff] %vm33, %v79
  // Predicated region
  $region18: #{transformer_forward.36} parent=0 // pred_check
    %p82 = pneg %p15
  $region19: #{transformer_forward.36} parent=0 // pred_check_branch
    %84 = sbr.rel (%p82) target = $region21
  $region20: #{transformer_forward.36} parent=0 // pred_region
    %v85 = vld [vmem:[#allocation2] sm:$0xff]
    %v86 = vld [vmem:[#allocation2 + $0x8] sm:$0xff]
    %v87 = vld [vmem:[%s2] sm:$0x1]
    %v89 = vlaneseq
    %v90 = vshrl.u32 %v89, 7
    %v91 = vsub.s32 0, %v90
    %v92 = vrot.slane %v87, %v91
    %v94 = vadd.f32 %v85, %v92
    %v95 = vadd.f32 %v86, %v92
    %96 = vst.msk [vmem:[%s3] sm:$0xff] %vm33, %v94
    %97 = vst.msk [vmem:[%s3 + $0x8] sm:$0xff] %vm33, %v95
  $region21: #{transformer_forward.36} parent=0 // pred_fallthru
    _
  // Predicated region
  $region22: #{transformer_forward.36} parent=0 // pred_check
    _
  $region23: #{transformer_forward.36} parent=0 // pred_check_branch
    %99 = sbr.rel (0) target = $region25
  $region24: #{transformer_forward.36} parent=0 // pred_region
    _
  $region25: #{transformer_forward.36} parent=0 // pred_fallthru
    _
  // Predicated region
  $region26: #{transformer_forward.36} parent=0 // pred_check
    _
  $region27: #{transformer_forward.36} parent=0 // pred_check_branch
    %101 = sbr.rel (0) target = $region29
  $region28: #{transformer_forward.36} parent=0 // pred_region
    _
  $region29: #{transformer_forward.36} parent=0 // pred_fallthru
    _

// kernel: transformer_forward.49
$region0: #{transformer_forward.49}
  #allocation0 [shape = 'u32[]', space=smem, size = 0x4, offset = 0x4, fixed_abs, tag = 'smem constant byte address 0x4 - core index']
  #allocation1 [shape = 'u32[144,128]{1,0:T(1,128)}', space=vmem, size = 0x12000, scoped, tag = 'internal scratch']
  #allocation2 [shape = 'f32[16,128]{1,0:T(8,128)}', space=vmem, size = 0x2000, scoped, tag = 'scratch operand']
  %s0 = inlined_call_operand.vmem [shape: f32[16,32], index: 0, kind: input, shape index: {}]
  %s1 = inlined_call_operand.vmem [shape: f32[32,128], index: 1, kind: input, shape index: {}]
  %s2 = inlined_call_operand.hbm [shape: f32[16,128], index: 2, kind: output, shape index: {}]
  %s3 = sld [smem:[#allocation0]]
  $region26: #{transformer_forward.49} parent=0
    _
  %s5 = ssub.s32 1, %s3
  %s6 = scalar_select 0, %s5, %s3
  $region1: #{transformer_forward.49} parent=0
    #allocation3 [shape = 'u8[8192]{0}', space=vmem, size = 0x2000, scoped, tag = 'output window, operand 0, single buffered']
    #allocation4 [shape = 's32[1]{0}', space=sflag, size = 0x4, scoped, tag = 'scoped memory for transformer_forward.49']
    %7 = vsyncpa [#allocation4], 0
    // Predicated region
    $region2: #{transformer_forward.49} parent=1 // pred_check
      _
    $region3: #{transformer_forward.49} parent=1 // pred_check_branch
      %9 = sbr.rel (0) target = $region5
    $region4: #{transformer_forward.49} parent=1 // pred_region
      _
    $region5: #{transformer_forward.49} parent=1 // pred_fallthru
      _
    // Predicated region
    $region6: #{transformer_forward.49} parent=1 // pred_check
      _
    $region7: #{transformer_forward.49} parent=1 // pred_check_branch
      %11 = sbr.rel (0) target = $region9
    $region8: #{transformer_forward.49} parent=1 // pred_region
      _
    $region9: #{transformer_forward.49} parent=1 // pred_fallthru
      _
    %p13 = scmp.eq.s32.totalorder 0, 0
    // Predicated region
    $region10: #{transformer_forward.49} parent=1 // pred_check
      %p14 = pneg %p13
    $region11: #{transformer_forward.49} parent=1 // pred_check_branch
      %16 = sbr.rel (%p14) target = $region13
    $region12: #{transformer_forward.49} parent=1 // pred_region
      %17 = vst [vmem:[#allocation2] sm:$0xff] 0.0
      %18 = vst [vmem:[#allocation2 + $0x8] sm:$0xff] 0.0
    $region13: #{transformer_forward.49} parent=1 // pred_fallthru
      _
    %v19 = vld [vmem:[#allocation2] sm:$0xff]
    %v20 = vld [vmem:[#allocation2 + $0x8] sm:$0xff]
    %v21 = vld [vmem:[%s0] sm:$0xff]
    %v22 = vld [vmem:[%s0 + $0x8] sm:$0xff]
    %v23 = vpack.c.bf16 %v22, %v21
    %v24 = vld [vmem:[%s1] sm:$0xff]
    %v25 = vld [vmem:[%s1 + $0x8] sm:$0xff]
    %v26 = vld [vmem:[%s1 + $0x10] sm:$0xff]
    %v27 = vld [vmem:[%s1 + $0x18] sm:$0xff]
    %v28 = vpack.c.bf16 %v25, %v24
    %v29 = vpack.c.bf16 %v27, %v26
    %vm30 = vcmask 261120
    %v32 = vsel %vm30, %v23, 0
    %34 = vmatprep.subr.bf16.mxu0 0
    %35 = vmatpush1.bf16.msra.mxu0 0
    %36 = vmatprep.subr.bf16.mxu0 0
    %37 = vmatpush1.bf16.msra.mxu0 0
    %38 = vmatprep.subr.bf16.mxu0 0
    %39 = vmatpush1.bf16.msra.mxu0 0
    %40 = vmatprep.subr.bf16.mxu0 0
    %41 = vmatpush1.bf16.msra.mxu0 0
    %42 = vmatprep.subr.bf16.mxu0 0
    %43 = vmatpush1.bf16.msra.mxu0 0
    %44 = vmatprep.subr.bf16.mxu0 0
    %45 = vmatpush1.bf16.msra.mxu0 0
    %46 = vmatprep.subr.bf16.mxu0 0
    %47 = vmatpush1.bf16.msra.mxu0 %v29
    %48 = vmatprep.subr.bf16.mxu0 0
    %49 = vmatpush1.bf16.msra.mxu0 %v28
    %50 = vmatprep.subr.bf16.mxu0 0
    %51 = vmatpush2.bf16.msra.mxu0 0
    %52 = vmatprep.subr.bf16.mxu0 0
    %53 = vmatpush2.bf16.msra.mxu0 0
    %54 = vmatprep.subr.bf16.mxu0 0
    %55 = vmatpush2.bf16.msra.mxu0 0
    %56 = vmatprep.subr.bf16.mxu0 0
    %57 = vmatpush2.bf16.msra.mxu0 0
    %58 = vmatprep.subr.bf16.mxu0 0
    %59 = vmatpush2.bf16.msra.mxu0 0
    %60 = vmatprep.subr.bf16.mxu0 0
    %61 = vmatpush2.bf16.msra.mxu0 0
    %62 = vmatprep.subr.bf16.mxu0 0
    %63 = vmatpush2.bf16.msra.mxu0 0
    %64 = vmatprep.subr.bf16.mxu0 0
    %65 = vmatpush2.bf16.msra.mxu0 0
    %66 = vmatprep.mubr.bf16.mxu0 0
    %67 = vmatmul.mubr.bf16.gmra.mxu0 %v32
    %v68 = vpop.f32.mrf.mxu0
    %v69 = vadd.f32 0.0, %v68
    %v70 = vpop.f32.mrf.mxu0
    %v71 = vpop.f32.mrf.mxu0
    %v72 = vadd.f32 0.0, %v71
    %v73 = vpop.f32.mrf.mxu0
    %74 = vdwg.mxu0
    %v75 = vadd.f32 %v19, %v69
    %v76 = vadd.f32 %v20, %v72
    %77 = vst [vmem:[#allocation2] sm:$0xff] %v75
    %78 = vst [vmem:[#allocation2 + $0x8] sm:$0xff] %v76
    // Predicated region
    $region14: #{transformer_forward.49} parent=1 // pred_check
      %p79 = pneg %p13
    $region15: #{transformer_forward.49} parent=1 // pred_check_branch
      %81 = sbr.rel (%p79) target = $region17
    $region16: #{transformer_forward.49} parent=1 // pred_region
      %v82 = vld [vmem:[#allocation2] sm:$0xff]
      %v83 = vld [vmem:[#allocation2 + $0x8] sm:$0xff]
      %84 = vst [vmem:[#allocation3] sm:$0xff] %v82
      %85 = vst [vmem:[#allocation3 + $0x8] sm:$0xff] %v83
    $region17: #{transformer_forward.49} parent=1 // pred_fallthru
      _
    // Predicated region
    $region18: #{transformer_forward.49} parent=1 // pred_check
      _
    $region19: #{transformer_forward.49} parent=1 // pred_check_branch
      %87 = sbr.rel (0) target = $region21
    $region20: #{transformer_forward.49} parent=1 // pred_region
      %s89 = ssub.s32 256, 256
      %90 = vsyncadd [#allocation4], %s89
      %s91 = sshll.u32 [#allocation3], 4
      %s92 = int_to_ptr.vmem [resolvable:$true] %s91
      %97 = dma.vmem_to_hbm [thread:$0]  %s92, 256, %s2, [#allocation4], 128, 128, 8
    $region21: #{transformer_forward.49} parent=1 // pred_fallthru
      _
    // Predicated region
    $region22: #{transformer_forward.49} parent=1 // pred_check
      _
    $region23: #{transformer_forward.49} parent=1 // pred_check_branch
      %99 = sbr.rel (0) target = $region25
    $region24: #{transformer_forward.49} parent=1 // pred_region
      %100 = dma.done [#allocation4], 256
    $region25: #{transformer_forward.49} parent=1 // pred_fallthru
      _
    %101 = vsyncpa [#allocation4], 1

// kernel: transformer_forward.38
$region0: #{transformer_forward.38}
  #allocation0 [shape = 'u32[]', space=smem, size = 0x4, offset = 0x4, fixed_abs, tag = 'smem constant byte address 0x4 - core index']
  #allocation1 [shape = 'u32[144,128]{1,0:T(1,128)}', space=vmem, size = 0x12000, scoped, tag = 'internal scratch']
  %s0 = inlined_call_operand.vmem [shape: f32[2,8,32], index: 0, kind: input, shape index: {}]
  %s1 = inlined_call_operand.vmem [shape: f32[2,8,64], index: 1, kind: input, shape index: {}]
  %s2 = inlined_call_operand.vmem [shape: s32[2,8,8], index: 2, kind: input, shape index: {}]
  %s3 = inlined_call_operand.vmem [shape: f32[2,8,32], index: 3, kind: output, shape index: {}]
  %s4 = sld [smem:[#allocation0]]
  $region45: #{transformer_forward.38} parent=0
    _
  %s6 = ssub.s32 1, %s4
  %s7 = scalar_select 0, %s6, %s4
  loop: start=0, step=1, limit=4
  $region2: #{transformer_forward.38} parent=0 // loop_pre_header
    _
  $region3: #{transformer_forward.38} parent=0 // loop_header
    %s9 = sphi 0, %s13
    %p10 = scmp.ge.s32.totalorder %s9, 4
    %s19 = sphi 0, %s21
    %s22 = sphi 0, %s19
    %s23 = sphi 0, %s22
    %s39 = sphi 0, %s23
    %s45 = sphi 0, %s47
    %s48 = sphi 0, %s45
    %s49 = sphi 0, %s48
    %s65 = sphi 0, %s49
    %s71 = sphi 0, %s73
    %s74 = sphi 0, %s71
    %s75 = sphi 0, %s74
    %s91 = sphi 0, %s75
    %s97 = sphi 0, %s99
    %s100 = sphi 0, %s97
    %s101 = sphi 0, %s100
    %s117 = sphi 0, %s101
  $region4: #{transformer_forward.38} parent=0 // loop_header_branch
    %12 = sbr.rel (%p10) target = $region8
  $region5: #{transformer_forward.38} parent=0 // loop_body
    %s14 = ssub.s32 %s9, 1
    %s15 = ssub.s32 %s9, 2
    %s16 = sadd.s32 %s9, 1
    %s17 = ssub.s32 %s9, %s16
    %p18 = scmp.eq.s32.totalorder %s17, 0
    %s20 = sadd.s32 %s19, 1
    %s21 = scalar_select %p18, %s19, %s20
    %p24 = pneg %p18
    %p25 = scmp.eq.s32.totalorder %s9, 1
    %p26 = por %p24, %p25
    %p27 = scmp.ne.s32.totalorder %s19, %s22
    %p28 = scmp.eq.s32.totalorder %s9, 0
    %p29 = por %p27, %p28
    %p30 = scmp.ne.s32.totalorder %s19, %s22
    %p31 = scmp.eq.s32.totalorder %s14, 1
    %p32 = por %p30, %p31
    %p33 = scmp.ne.s32.totalorder %s22, %s23
    %p34 = scmp.eq.s32.totalorder %s14, 0
    %p35 = por %p33, %p34
    %p36 = scmp.ne.s32.totalorder %s22, %s23
    %p37 = scmp.eq.s32.totalorder %s15, 1
    %p38 = por %p36, %p37
    %p40 = scmp.ne.s32.totalorder %s23, %s39
    %p41 = scmp.eq.s32.totalorder %s15, 0
    %p42 = por %p40, %p41
    %s43 = ssub.s32 %s9, %s16
    %p44 = scmp.eq.s32.totalorder %s43, 0
    %s46 = sadd.s32 %s45, 1
    %s47 = scalar_select %p44, %s45, %s46
    %p50 = pneg %p44
    %p51 = scmp.eq.s32.totalorder %s9, 1
    %p52 = por %p50, %p51
    %p53 = scmp.ne.s32.totalorder %s45, %s48
    %p54 = scmp.eq.s32.totalorder %s9, 0
    %p55 = por %p53, %p54
    %p56 = scmp.ne.s32.totalorder %s45, %s48
    %p57 = scmp.eq.s32.totalorder %s14, 1
    %p58 = por %p56, %p57
    %p59 = scmp.ne.s32.totalorder %s48, %s49
    %p60 = scmp.eq.s32.totalorder %s14, 0
    %p61 = por %p59, %p60
    %p62 = scmp.ne.s32.totalorder %s48, %s49
    %p63 = scmp.eq.s32.totalorder %s15, 1
    %p64 = por %p62, %p63
    %p66 = scmp.ne.s32.totalorder %s49, %s65
    %p67 = scmp.eq.s32.totalorder %s15, 0
    %p68 = por %p66, %p67
    %s69 = ssub.s32 %s9, %s16
    %p70 = scmp.eq.s32.totalorder %s69, 0
    %s72 = sadd.s32 %s71, 1
    %s73 = scalar_select %p70, %s71, %s72
    %p76 = pneg %p70
    %p77 = scmp.eq.s32.totalorder %s9, 1
    %p78 = por %p76, %p77
    %p79 = scmp.ne.s32.totalorder %s71, %s74
    %p80 = scmp.eq.s32.totalorder %s9, 0
    %p81 = por %p79, %p80
    %p82 = scmp.ne.s32.totalorder %s71, %s74
    %p83 = scmp.eq.s32.totalorder %s14, 1
    %p84 = por %p82, %p83
    %p85 = scmp.ne.s32.totalorder %s74, %s75
    %p86 = scmp.eq.s32.totalorder %s14, 0
    %p87 = por %p85, %p86
    %p88 = scmp.ne.s32.totalorder %s74, %s75
    %p89 = scmp.eq.s32.totalorder %s15, 1
    %p90 = por %p88, %p89
    %p92 = scmp.ne.s32.totalorder %s75, %s91
    %p93 = scmp.eq.s32.totalorder %s15, 0
    %p94 = por %p92, %p93
    %s95 = ssub.s32 %s9, %s16
    %p96 = scmp.eq.s32.totalorder %s95, 0
    %s98 = sadd.s32 %s97, 1
    %s99 = scalar_select %p96, %s97, %s98
    %p102 = pneg %p96
    %p103 = scmp.eq.s32.totalorder %s9, 1
    %p104 = por %p102, %p103
    %p105 = scmp.ne.s32.totalorder %s97, %s100
    %p106 = scmp.eq.s32.totalorder %s9, 0
    %p107 = por %p105, %p106
    %p108 = scmp.ne.s32.totalorder %s97, %s100
    %p109 = scmp.eq.s32.totalorder %s14, 1
    %p110 = por %p108, %p109
    %p111 = scmp.ne.s32.totalorder %s100, %s101
    %p112 = scmp.eq.s32.totalorder %s14, 0
    %p113 = por %p111, %p112
    %p114 = scmp.ne.s32.totalorder %s100, %s101
    %p115 = scmp.eq.s32.totalorder %s15, 1
    %p116 = por %p114, %p115
    %p118 = scmp.ne.s32.totalorder %s101, %s117
    %p119 = scmp.eq.s32.totalorder %s15, 0
    %p120 = por %p118, %p119
    %p121 = scmp.le.s32.totalorder 1, %s9
    %p122 = scmp.lt.s32.totalorder %s9, 3
    %p123 = pnand %p121, %p122
    %p124 = pneg %p123
    // Predicated region
    $region9: #{transformer_forward.38} parent=5 // pred_check
      _
    $region10: #{transformer_forward.38} parent=5 // pred_check_branch
      %126 = sbr.rel (%p123) target = $region12
    $region11: #{transformer_forward.38} parent=5 // pred_region
      %s127 = ssub.s32 %s9, 1
    $region12: #{transformer_forward.38} parent=5 // pred_fallthru
      _
    %p128 = scmp.lt.s32.totalorder %s9, 2
    // Predicated region
    $region13: #{transformer_forward.38} parent=5 // pred_check
      %p129 = pneg %p128
    $region14: #{transformer_forward.38} parent=5 // pred_check_branch
      %131 = sbr.rel (%p129) target = $region16
    $region15: #{transformer_forward.38} parent=5 // pred_region
      // Predicated region
      $region17: #{transformer_forward.38} parent=15 // pred_check
        %p132 = pneg %p29
      $region18: #{transformer_forward.38} parent=15 // pred_check_branch
        %134 = sbr.rel (%p132) target = $region20
      $region19: #{transformer_forward.38} parent=15 // pred_region
        %p135 = scmp.lt.s32.totalorder %s9, 1
        %s136 = scalar_select %p135, %s9, 1
        %s137 = smul.addr %s136, 8
        %s138 = scalar_lea.vmem %s0, %s137
      $region20: #{transformer_forward.38} parent=15 // pred_fallthru
        _
      // Predicated region
      $region21: #{transformer_forward.38} parent=15 // pred_check
        %p139 = pneg %p55
      $region22: #{transformer_forward.38} parent=15 // pred_check_branch
        %141 = sbr.rel (%p139) target = $region24
      $region23: #{transformer_forward.38} parent=15 // pred_region
        %p142 = scmp.lt.s32.totalorder %s9, 1
        %s143 = scalar_select %p142, %s9, 1
        %s144 = smul.addr %s143, 8
        %s145 = scalar_lea.vmem %s1, %s144
      $region24: #{transformer_forward.38} parent=15 // pred_fallthru
        _
      // Predicated region
      $region25: #{transformer_forward.38} parent=15 // pred_check
        %p146 = pneg %p81
      $region26: #{transformer_forward.38} parent=15 // pred_check_branch
        %148 = sbr.rel (%p146) target = $region28
      $region27: #{transformer_forward.38} parent=15 // pred_region
        %p149 = scmp.lt.s32.totalorder %s9, 1
        %s150 = scalar_select %p149, %s9, 1
        %s151 = smul.addr %s150, 8
        %s152 = scalar_lea.vmem %s2, %s151
      $region28: #{transformer_forward.38} parent=15 // pred_fallthru
        _
    $region16: #{transformer_forward.38} parent=5 // pred_fallthru
      _
    %p153 = scmp.le.s32.totalorder 1, %s9
    %p154 = scmp.lt.s32.totalorder %s9, 3
    %p155 = pnand %p153, %p154
    %p156 = pneg %p155
    // Predicated region
    $region29: #{transformer_forward.38} parent=5 // pred_check
      _
    $region30: #{transformer_forward.38} parent=5 // pred_check_branch
      %158 = sbr.rel (%p155) target = $region32
    $region31: #{transformer_forward.38} parent=5 // pred_region
      %s159 = ssub.s32 %s9, 1
      %p160 = scmp.lt.s32.totalorder %s14, 1
      %s161 = scalar_select %p160, %s14, 1
      %s162 = smul.addr %s161, 8
      %s163 = scalar_lea.vmem %s0, %s162
      %p164 = pneg %p35
      %p165 = pneg %p32
      %p166 = scmp.lt.s32.totalorder %s14, 1
      %s167 = scalar_select %p166, %s14, 1
      %s168 = smul.addr %s167, 8
      %s169 = scalar_lea.vmem %s1, %s168
      %p170 = pneg %p61
      %p171 = pneg %p58
      %p172 = scmp.lt.s32.totalorder %s14, 1
      %s173 = scalar_select %p172, %s14, 1
      %s174 = smul.addr %s173, 8
      %s175 = scalar_lea.vmem %s2, %s174
      %p176 = pneg %p87
      %p177 = pneg %p84
      %p178 = pneg %p113
      %p179 = pneg %p110
      %p180 = scmp.lt.s32.totalorder %s14, 1
      %s181 = scalar_select %p180, %s14, 1
      %s182 = smul.addr %s181, 8
      %s183 = scalar_lea.vmem %s3, %s182
      %p184 = scmp.lt.s32.totalorder %s14, 1
      %s185 = scalar_select %p184, %s14, 1
      %s186 = smul.addr %s185, 8
      %s187 = scalar_lea.vmem %s0, %s186
      %p188 = scmp.lt.s32.totalorder %s14, 1
      %s189 = scalar_select %p188, %s14, 1
      %s190 = smul.addr %s189, 8
      %s191 = scalar_lea.vmem %s1, %s190
      %p192 = scmp.lt.s32.totalorder %s14, 1
      %s193 = scalar_select %p192, %s14, 1
      %s194 = smul.addr %s193, 8
      %s195 = scalar_lea.vmem %s2, %s194
      %p196 = scmp.lt.s32.totalorder %s14, 1
      %s197 = scalar_select %p196, %s14, 1
      %s198 = smul.addr %s197, 8
      %s199 = scalar_lea.vmem %s3, %s198
      %v201 = vld [vmem:[%s191] sm:$0xff]
      %v202 = vld [vmem:[%s187] sm:$0xff]
      %v203 = vld [vmem:[%s195] sm:$0xff]
      %vm204 = vcmp.gt.s32.totalorder %v203, 0
      %v205 = vpack.c.bf16 %v202, %v202
      %v206 = vpack.c.bf16 %v201, %v201
      %vm207 = vcmask 64512
      %v209 = vsel %vm207, %v205, 0
      %v212 = vsel %vm207, %v206, 0
      %214 = vmatprep.subr.bf16.mxu0 0
      %215 = vmatpush1.bf16.xpose.msra.mxu0 0
      %216 = vmatprep.subr.bf16.mxu0 0
      %217 = vmatpush1.bf16.xpose.msra.mxu0 0
      %218 = vmatprep.subr.bf16.mxu0 0
      %219 = vmatpush1.bf16.xpose.msra.mxu0 0
      %220 = vmatprep.subr.bf16.mxu0 0
      %221 = vmatpush1.bf16.xpose.msra.mxu0 0
      %222 = vmatprep.subr.bf16.mxu0 0
      %223 = vmatpush1.bf16.xpose.msra.mxu0 0
      %224 = vmatprep.subr.bf16.mxu0 0
      %225 = vmatpush1.bf16.xpose.msra.mxu0 0
      %226 = vmatprep.subr.bf16.mxu0 0
      %227 = vmatpush1.bf16.xpose.msra.mxu0 0
      %228 = vmatprep.subr.bf16.mxu0 0
      %229 = vmatpush1.bf16.xpose.msra.mxu0 %v212
      %230 = vmatprep.subr.bf16.mxu0 0
      %231 = vmatpush2.bf16.xpose.msra.mxu0 0
      %232 = vmatprep.subr.bf16.mxu0 0
      %233 = vmatpush2.bf16.xpose.msra.mxu0 0
      %234 = vmatprep.subr.bf16.mxu0 0
      %235 = vmatpush2.bf16.xpose.msra.mxu0 0
      %236 = vmatprep.subr.bf16.mxu0 0
      %237 = vmatpush2.bf16.xpose.msra.mxu0 0
      %238 = vmatprep.subr.bf16.mxu0 0
      %239 = vmatpush2.bf16.xpose.msra.mxu0 0
      %240 = vmatprep.subr.bf16.mxu0 0
      %241 = vmatpush2.bf16.xpose.msra.mxu0 0
      %242 = vmatprep.subr.bf16.mxu0 0
      %243 = vmatpush2.bf16.xpose.msra.mxu0 0
      %244 = vmatprep.subr.bf16.mxu0 0
      %245 = vmatpush2.bf16.xpose.msra.mxu0 0
      %246 = vmatprep.mubr.bf16.mxu0 0
      %247 = vmatmul.mubr.bf16.gmra.mxu0 %v209
      %v248 = vpop.f32.mrf.mxu0
      %v249 = vadd.f32 0.0, %v248
      %v250 = vpop.f32.mrf.mxu0
      %v251 = vpop.f32.mrf.mxu0
      %v252 = vpop.f32.mrf.mxu0
      %253 = vdwg.mxu0
      %v254 = vmul.f32 %v249, 0.35355338
      %v255 = vsel %vm204, -1e+09, %v254
      %v256 = vsel %vm207, %v255, -inf
      %257 = vmax.xlane.f32.xlu0 %v256
      %v258 = vpop.xlane.xlu0 %257
      %v259 = vsub.f32 %v255, %v258
      %v260 = vmul.f32 %v259, 1.442695
      %v261 = vpow.pop %v260
      %v262 = vsel %vm207, %v261, 0.0
      %263 = vadd.xlane.f32.xlu0 %v262
      %v264 = vpop.xlane.xlu0 %263
      %v265 = vrcp.pop %v264
      %v266 = vmul.f32 %v261, %v265
      %v267 = vpack.c.bf16 %v266, %v266
      %269 = vrot.lane.b32.xlu0 %v206, 96
      %v270 = vpop.permute.xlu0 %269
      %v272 = vsel %vm207, %v267, 0
      %vm274 = vcmask 1043456
      %v276 = vsel %vm274, %v270, 0
      %278 = vmatprep.subr.bf16.mxu0 0
      %279 = vmatpush1.bf16.msra.mxu0 0
      %280 = vmatprep.subr.bf16.mxu0 0
      %281 = vmatpush1.bf16.msra.mxu0 0
      %282 = vmatprep.subr.bf16.mxu0 0
      %283 = vmatpush1.bf16.msra.mxu0 0
      %284 = vmatprep.subr.bf16.mxu0 0
      %285 = vmatpush1.bf16.msra.mxu0 0
      %286 = vmatprep.subr.bf16.mxu0 0
      %287 = vmatpush1.bf16.msra.mxu0 0
      %288 = vmatprep.subr.bf16.mxu0 0
      %289 = vmatpush1.bf16.msra.mxu0 0
      %290 = vmatprep.subr.bf16.mxu0 0
      %291 = vmatpush1.bf16.msra.mxu0 0
      %292 = vmatprep.subr.bf16.mxu0 0
      %293 = vmatpush1.bf16.msra.mxu0 %v276
      %294 = vmatprep.subr.bf16.mxu0 0
      %295 = vmatpush2.bf16.msra.mxu0 0
      %296 = vmatprep.subr.bf16.mxu0 0
      %297 = vmatpush2.bf16.msra.mxu0 0
      %298 = vmatprep.subr.bf16.mxu0 0
      %299 = vmatpush2.bf16.msra.mxu0 0
      %300 = vmatprep.subr.bf16.mxu0 0
      %301 = vmatpush2.bf16.msra.mxu0 0
      %302 = vmatprep.subr.bf16.mxu0 0
      %303 = vmatpush2.bf16.msra.mxu0 0
      %304 = vmatprep.subr.bf16.mxu0 0
      %305 = vmatpush2.bf16.msra.mxu0 0
      %306 = vmatprep.subr.bf16.mxu0 0
      %307 = vmatpush2.bf16.msra.mxu0 0
      %308 = vmatprep.subr.bf16.mxu0 0
      %309 = vmatpush2.bf16.msra.mxu0 0
      %310 = vmatprep.mubr.bf16.mxu0 0
      %311 = vmatmul.mubr.bf16.gmra.mxu0 %v272
      %v312 = vpop.f32.mrf.mxu0
      %v313 = vadd.f32 0.0, %v312
      %v314 = vpop.f32.mrf.mxu0
      %v315 = vpop.f32.mrf.mxu0
      %v316 = vpop.f32.mrf.mxu0
      %317 = vdwg.mxu0
      %319 = vrot.lane.b32.xlu0 %v205, 120
      %v320 = vpop.permute.xlu0 %319
      %321 = vrot.lane.b32.xlu0 %v206, 120
      %v322 = vpop.permute.xlu0 %321
      %v324 = vsel %vm207, %v320, 0
      %v327 = vsel %vm207, %v322, 0
      %329 = vmatprep.subr.bf16.mxu0 0
      %330 = vmatpush1.bf16.xpose.msra.mxu0 0
      %331 = vmatprep.subr.bf16.mxu0 0
      %332 = vmatpush1.bf16.xpose.msra.mxu0 0
      %333 = vmatprep.subr.bf16.mxu0 0
      %334 = vmatpush1.bf16.xpose.msra.mxu0 0
      %335 = vmatprep.subr.bf16.mxu0 0
      %336 = vmatpush1.bf16.xpose.msra.mxu0 0
      %337 = vmatprep.subr.bf16.mxu0 0
      %338 = vmatpush1.bf16.xpose.msra.mxu0 0
      %339 = vmatprep.subr.bf16.mxu0 0
      %340 = vmatpush1.bf16.xpose.msra.mxu0 0
      %341 = vmatprep.subr.bf16.mxu0 0
      %342 = vmatpush1.bf16.xpose.msra.mxu0 0
      %343 = vmatprep.subr.bf16.mxu0 0
      %344 = vmatpush1.bf16.xpose.msra.mxu0 %v327
      %345 = vmatprep.subr.bf16.mxu0 0
      %346 = vmatpush2.bf16.xpose.msra.mxu0 0
      %347 = vmatprep.subr.bf16.mxu0 0
      %348 = vmatpush2.bf16.xpose.msra.mxu0 0
      %349 = vmatprep.subr.bf16.mxu0 0
      %350 = vmatpush2.bf16.xpose.msra.mxu0 0
      %351 = vmatprep.subr.bf16.mxu0 0
      %352 = vmatpush2.bf16.xpose.msra.mxu0 0
      %353 = vmatprep.subr.bf16.mxu0 0
      %354 = vmatpush2.bf16.xpose.msra.mxu0 0
      %355 = vmatprep.subr.bf16.mxu0 0
      %356 = vmatpush2.bf16.xpose.msra.mxu0 0
      %357 = vmatprep.subr.bf16.mxu0 0
      %358 = vmatpush2.bf16.xpose.msra.mxu0 0
      %359 = vmatprep.subr.bf16.mxu0 0
      %360 = vmatpush2.bf16.xpose.msra.mxu0 0
      %361 = vmatprep.mubr.bf16.mxu0 0
      %362 = vmatmul.mubr.bf16.gmra.mxu0 %v324
      %v363 = vpop.f32.mrf.mxu0
      %v364 = vadd.f32 0.0, %v363
      %v365 = vpop.f32.mrf.mxu0
      %v366 = vpop.f32.mrf.mxu0
      %v367 = vpop.f32.mrf.mxu0
      %368 = vdwg.mxu0
      %v369 = vmul.f32 %v364, 0.35355338
      %v370 = vsel %vm204, -1e+09, %v369
      %v371 = vsel %vm207, %v370, -inf
      %372 = vmax.xlane.f32.xlu0 %v371
      %v373 = vpop.xlane.xlu0 %372
      %v374 = vsub.f32 %v370, %v373
      %v375 = vmul.f32 %v374, 1.442695
      %v376 = vpow.pop %v375
      %v377 = vsel %vm207, %v376, 0.0
      %378 = vadd.xlane.f32.xlu0 %v377
      %v379 = vpop.xlane.xlu0 %378
      %v380 = vrcp.pop %v379
      %v381 = vmul.f32 %v376, %v380
      %v382 = vpack.c.bf16 %v381, %v381
      %383 = vrot.lane.b32.xlu0 %v206, 88
      %v384 = vpop.permute.xlu0 %383
      %v386 = vsel %vm207, %v382, 0
      %v389 = vsel %vm274, %v384, 0
      %391 = vmatprep.subr.bf16.mxu0 0
      %392 = vmatpush1.bf16.msra.mxu0 0
      %393 = vmatprep.subr.bf16.mxu0 0
      %394 = vmatpush1.bf16.msra.mxu0 0
      %395 = vmatprep.subr.bf16.mxu0 0
      %396 = vmatpush1.bf16.msra.mxu0 0
      %397 = vmatprep.subr.bf16.mxu0 0
      %398 = vmatpush1.bf16.msra.mxu0 0
      %399 = vmatprep.subr.bf16.mxu0 0
      %400 = vmatpush1.bf16.msra.mxu0 0
      %401 = vmatprep.subr.bf16.mxu0 0
      %402 = vmatpush1.bf16.msra.mxu0 0
      %403 = vmatprep.subr.bf16.mxu0 0
      %404 = vmatpush1.bf16.msra.mxu0 0
      %405 = vmatprep.subr.bf16.mxu0 0
      %406 = vmatpush1.bf16.msra.mxu0 %v389
      %407 = vmatprep.subr.bf16.mxu0 0
      %408 = vmatpush2.bf16.msra.mxu0 0
      %409 = vmatprep.subr.bf16.mxu0 0
      %410 = vmatpush2.bf16.msra.mxu0 0
      %411 = vmatprep.subr.bf16.mxu0 0
      %412 = vmatpush2.bf16.msra.mxu0 0
      %413 = vmatprep.subr.bf16.mxu0 0
      %414 = vmatpush2.bf16.msra.mxu0 0
      %415 = vmatprep.subr.bf16.mxu0 0
      %416 = vmatpush2.bf16.msra.mxu0 0
      %417 = vmatprep.subr.bf16.mxu0 0
      %418 = vmatpush2.bf16.msra.mxu0 0
      %419 = vmatprep.subr.bf16.mxu0 0
      %420 = vmatpush2.bf16.msra.mxu0 0
      %421 = vmatprep.subr.bf16.mxu0 0
      %422 = vmatpush2.bf16.msra.mxu0 0
      %423 = vmatprep.mubr.bf16.mxu0 0
      %424 = vmatmul.mubr.bf16.gmra.mxu0 %v386
      %v425 = vpop.f32.mrf.mxu0
      %v426 = vadd.f32 0.0, %v425
      %v427 = vpop.f32.mrf.mxu0
      %v428 = vpop.f32.mrf.mxu0
      %v429 = vpop.f32.mrf.mxu0
      %430 = vdwg.mxu0
      %431 = vrot.lane.b32.xlu0 %v205, 112
      %v432 = vpop.permute.xlu0 %431
      %433 = vrot.lane.b32.xlu0 %v206, 112
      %v434 = vpop.permute.xlu0 %433
      %v436 = vsel %vm207, %v432, 0
      %v439 = vsel %vm207, %v434, 0
      %441 = vmatprep.subr.bf16.mxu0 0
      %442 = vmatpush1.bf16.xpose.msra.mxu0 0
      %443 = vmatprep.subr.bf16.mxu0 0
      %444 = vmatpush1.bf16.xpose.msra.mxu0 0
      %445 = vmatprep.subr.bf16.mxu0 0
      %446 = vmatpush1.bf16.xpose.msra.mxu0 0
      %447 = vmatprep.subr.bf16.mxu0 0
      %448 = vmatpush1.bf16.xpose.msra.mxu0 0
      %449 = vmatprep.subr.bf16.mxu0 0
      %450 = vmatpush1.bf16.xpose.msra.mxu0 0
      %451 = vmatprep.subr.bf16.mxu0 0
      %452 = vmatpush1.bf16.xpose.msra.mxu0 0
      %453 = vmatprep.subr.bf16.mxu0 0
      %454 = vmatpush1.bf16.xpose.msra.mxu0 0
      %455 = vmatprep.subr.bf16.mxu0 0
      %456 = vmatpush1.bf16.xpose.msra.mxu0 %v439
      %457 = vmatprep.subr.bf16.mxu0 0
      %458 = vmatpush2.bf16.xpose.msra.mxu0 0
      %459 = vmatprep.subr.bf16.mxu0 0
      %460 = vmatpush2.bf16.xpose.msra.mxu0 0
      %461 = vmatprep.subr.bf16.mxu0 0
      %462 = vmatpush2.bf16.xpose.msra.mxu0 0
      %463 = vmatprep.subr.bf16.mxu0 0
      %464 = vmatpush2.bf16.xpose.msra.mxu0 0
      %465 = vmatprep.subr.bf16.mxu0 0
      %466 = vmatpush2.bf16.xpose.msra.mxu0 0
      %467 = vmatprep.subr.bf16.mxu0 0
      %468 = vmatpush2.bf16.xpose.msra.mxu0 0
      %469 = vmatprep.subr.bf16.mxu0 0
      %470 = vmatpush2.bf16.xpose.msra.mxu0 0
      %471 = vmatprep.subr.bf16.mxu0 0
      %472 = vmatpush2.bf16.xpose.msra.mxu0 0
      %473 = vmatprep.mubr.bf16.mxu0 0
      %474 = vmatmul.mubr.bf16.gmra.mxu0 %v436
      %v475 = vpop.f32.mrf.mxu0
      %v476 = vadd.f32 0.0, %v475
      %v477 = vpop.f32.mrf.mxu0
      %v478 = vpop.f32.mrf.mxu0
      %v479 = vpop.f32.mrf.mxu0
      %480 = vdwg.mxu0
      %v481 = vmul.f32 %v476, 0.35355338
      %v482 = vsel %vm204, -1e+09, %v481
      %v483 = vsel %vm207, %v482, -inf
      %484 = vmax.xlane.f32.xlu0 %v483
      %v485 = vpop.xlane.xlu0 %484
      %v486 = vsub.f32 %v482, %v485
      %v487 = vmul.f32 %v486, 1.442695
      %v488 = vpow.pop %v487
      %v489 = vsel %vm207, %v488, 0.0
      %490 = vadd.xlane.f32.xlu0 %v489
      %v491 = vpop.xlane.xlu0 %490
      %v492 = vrcp.pop %v491
      %v493 = vmul.f32 %v488, %v492
      %v494 = vpack.c.bf16 %v493, %v493
      %495 = vrot.lane.b32.xlu0 %v206, 80
      %v496 = vpop.permute.xlu0 %495
      %v498 = vsel %vm207, %v494, 0
      %v501 = vsel %vm274, %v496, 0
      %503 = vmatprep.subr.bf16.mxu0 0
      %504 = vmatpush1.bf16.msra.mxu0 0
      %505 = vmatprep.subr.bf16.mxu0 0
      %506 = vmatpush1.bf16.msra.mxu0 0
      %507 = vmatprep.subr.bf16.mxu0 0
      %508 = vmatpush1.bf16.msra.mxu0 0
      %509 = vmatprep.subr.bf16.mxu0 0
      %510 = vmatpush1.bf16.msra.mxu0 0
      %511 = vmatprep.subr.bf16.mxu0 0
      %512 = vmatpush1.bf16.msra.mxu0 0
      %513 = vmatprep.subr.bf16.mxu0 0
      %514 = vmatpush1.bf16.msra.mxu0 0
      %515 = vmatprep.subr.bf16.mxu0 0
      %516 = vmatpush1.bf16.msra.mxu0 0
      %517 = vmatprep.subr.bf16.mxu0 0
      %518 = vmatpush1.bf16.msra.mxu0 %v501
      %519 = vmatprep.subr.bf16.mxu0 0
      %520 = vmatpush2.bf16.msra.mxu0 0
      %521 = vmatprep.subr.bf16.mxu0 0
      %522 = vmatpush2.bf16.msra.mxu0 0
      %523 = vmatprep.subr.bf16.mxu0 0
      %524 = vmatpush2.bf16.msra.mxu0 0
      %525 = vmatprep.subr.bf16.mxu0 0
      %526 = vmatpush2.bf16.msra.mxu0 0
      %527 = vmatprep.subr.bf16.mxu0 0
      %528 = vmatpush2.bf16.msra.mxu0 0
      %529 = vmatprep.subr.bf16.mxu0 0
      %530 = vmatpush2.bf16.msra.mxu0 0
      %531 = vmatprep.subr.bf16.mxu0 0
      %532 = vmatpush2.bf16.msra.mxu0 0
      %533 = vmatprep.subr.bf16.mxu0 0
      %534 = vmatpush2.bf16.msra.mxu0 0
      %535 = vmatprep.mubr.bf16.mxu0 0
      %536 = vmatmul.mubr.bf16.gmra.mxu0 %v498
      %v537 = vpop.f32.mrf.mxu0
      %v538 = vadd.f32 0.0, %v537
      %v539 = vpop.f32.mrf.mxu0
      %v540 = vpop.f32.mrf.mxu0
      %v541 = vpop.f32.mrf.mxu0
      %542 = vdwg.mxu0
      %543 = vrot.lane.b32.xlu0 %v205, 104
      %v544 = vpop.permute.xlu0 %543
      %545 = vrot.lane.b32.xlu0 %v206, 104
      %v546 = vpop.permute.xlu0 %545
      %v548 = vsel %vm207, %v544, 0
      %v551 = vsel %vm207, %v546, 0
      %553 = vmatprep.subr.bf16.mxu0 0
      %554 = vmatpush1.bf16.xpose.msra.mxu0 0
      %555 = vmatprep.subr.bf16.mxu0 0
      %556 = vmatpush1.bf16.xpose.msra.mxu0 0
      %557 = vmatprep.subr.bf16.mxu0 0
      %558 = vmatpush1.bf16.xpose.msra.mxu0 0
      %559 = vmatprep.subr.bf16.mxu0 0
      %560 = vmatpush1.bf16.xpose.msra.mxu0 0
      %561 = vmatprep.subr.bf16.mxu0 0
      %562 = vmatpush1.bf16.xpose.msra.mxu0 0
      %563 = vmatprep.subr.bf16.mxu0 0
      %564 = vmatpush1.bf16.xpose.msra.mxu0 0
      %565 = vmatprep.subr.bf16.mxu0 0
      %566 = vmatpush1.bf16.xpose.msra.mxu0 0
      %567 = vmatprep.subr.bf16.mxu0 0
      %568 = vmatpush1.bf16.xpose.msra.mxu0 %v551
      %569 = vmatprep.subr.bf16.mxu0 0
      %570 = vmatpush2.bf16.xpose.msra.mxu0 0
      %571 = vmatprep.subr.bf16.mxu0 0
      %572 = vmatpush2.bf16.xpose.msra.mxu0 0
      %573 = vmatprep.subr.bf16.mxu0 0
      %574 = vmatpush2.bf16.xpose.msra.mxu0 0
      %575 = vmatprep.subr.bf16.mxu0 0
      %576 = vmatpush2.bf16.xpose.msra.mxu0 0
      %577 = vmatprep.subr.bf16.mxu0 0
      %578 = vmatpush2.bf16.xpose.msra.mxu0 0
      %579 = vmatprep.subr.bf16.mxu0 0
      %580 = vmatpush2.bf16.xpose.msra.mxu0 0
      %581 = vmatprep.subr.bf16.mxu0 0
      %582 = vmatpush2.bf16.xpose.msra.mxu0 0
      %583 = vmatprep.subr.bf16.mxu0 0
      %584 = vmatpush2.bf16.xpose.msra.mxu0 0
      %585 = vmatprep.mubr.bf16.mxu0 0
      %586 = vmatmul.mubr.bf16.gmra.mxu0 %v548
      %v587 = vpop.f32.mrf.mxu0
      %v588 = vadd.f32 0.0, %v587
      %v589 = vpop.f32.mrf.mxu0
      %v590 = vpop.f32.mrf.mxu0
      %v591 = vpop.f32.mrf.mxu0
      %592 = vdwg.mxu0
      %v593 = vmul.f32 %v588, 0.35355338
      %v594 = vsel %vm204, -1e+09, %v593
      %v595 = vsel %vm207, %v594, -inf
      %596 = vmax.xlane.f32.xlu0 %v595
      %v597 = vpop.xlane.xlu0 %596
      %v598 = vsub.f32 %v594, %v597
      %v599 = vmul.f32 %v598, 1.442695
      %v600 = vpow.pop %v599
      %v601 = vsel %vm207, %v600, 0.0
      %602 = vadd.xlane.f32.xlu0 %v601
      %v603 = vpop.xlane.xlu0 %602
      %v604 = vrcp.pop %v603
      %v605 = vmul.f32 %v600, %v604
      %v606 = vpack.c.bf16 %v605, %v605
      %607 = vrot.lane.b32.xlu0 %v206, 72
      %v608 = vpop.permute.xlu0 %607
      %v610 = vsel %vm207, %v606, 0
      %v613 = vsel %vm274, %v608, 0
      %615 = vmatprep.subr.bf16.mxu0 0
      %616 = vmatpush1.bf16.msra.mxu0 0
      %617 = vmatprep.subr.bf16.mxu0 0
      %618 = vmatpush1.bf16.msra.mxu0 0
      %619 = vmatprep.subr.bf16.mxu0 0
      %620 = vmatpush1.bf16.msra.mxu0 0
      %621 = vmatprep.subr.bf16.mxu0 0
      %622 = vmatpush1.bf16.msra.mxu0 0
      %623 = vmatprep.subr.bf16.mxu0 0
      %624 = vmatpush1.bf16.msra.mxu0 0
      %625 = vmatprep.subr.bf16.mxu0 0
      %626 = vmatpush1.bf16.msra.mxu0 0
      %627 = vmatprep.subr.bf16.mxu0 0
      %628 = vmatpush1.bf16.msra.mxu0 0
      %629 = vmatprep.subr.bf16.mxu0 0
      %630 = vmatpush1.bf16.msra.mxu0 %v613
      %631 = vmatprep.subr.bf16.mxu0 0
      %632 = vmatpush2.bf16.msra.mxu0 0
      %633 = vmatprep.subr.bf16.mxu0 0
      %634 = vmatpush2.bf16.msra.mxu0 0
      %635 = vmatprep.subr.bf16.mxu0 0
      %636 = vmatpush2.bf16.msra.mxu0 0
      %637 = vmatprep.subr.bf16.mxu0 0
      %638 = vmatpush2.bf16.msra.mxu0 0
      %639 = vmatprep.subr.bf16.mxu0 0
      %640 = vmatpush2.bf16.msra.mxu0 0
      %641 = vmatprep.subr.bf16.mxu0 0
      %642 = vmatpush2.bf16.msra.mxu0 0
      %643 = vmatprep.subr.bf16.mxu0 0
      %644 = vmatpush2.bf16.msra.mxu0 0
      %645 = vmatprep.subr.bf16.mxu0 0
      %646 = vmatpush2.bf16.msra.mxu0 0
      %647 = vmatprep.mubr.bf16.mxu0 0
      %648 = vmatmul.mubr.bf16.gmra.mxu0 %v610
      %v649 = vpop.f32.mrf.mxu0
      %v650 = vadd.f32 0.0, %v649
      %v651 = vpop.f32.mrf.mxu0
      %v652 = vpop.f32.mrf.mxu0
      %v653 = vpop.f32.mrf.mxu0
      %654 = vdwg.mxu0
      %656 = vrot.lane.b32.xlu0 %v426, 8
      %v657 = vpop.permute.xlu0 %656
      %660 = vrot.lane.b32.xlu0 %v538, 16
      %v661 = vpop.permute.xlu0 %660
      %664 = vrot.lane.b32.xlu0 %v650, 24
      %v665 = vpop.permute.xlu0 %664
      %v667 = vsel %vm207, %v313, %v657
      %vm668 = vcmask 130048
      %v669 = vsel %vm668, %v667, %v661
      %vm670 = vcmask 195584
      %v671 = vsel %vm670, %v669, %v665
      %vm672 = vcmask 261120
      %673 = vst.msk [vmem:[%s199] sm:$0xff] %vm672, %v671
      %p674 = scmp.lt.s32.totalorder %s14, 1
      %s675 = scalar_select %p674, %s14, 1
      %s676 = smul.addr %s675, 8
      %s677 = scalar_lea.vmem %s3, %s676
      // Predicated region
      $region33: #{transformer_forward.38} parent=31 // pred_check
        %p678 = pneg %p110
      $region34: #{transformer_forward.38} parent=31 // pred_check_branch
        %680 = sbr.rel (%p678) target = $region36
      $region35: #{transformer_forward.38} parent=31 // pred_region
        _
      $region36: #{transformer_forward.38} parent=31 // pred_fallthru
        _
    $region32: #{transformer_forward.38} parent=5 // pred_fallthru
      _
    %p681 = scmp.le.s32.totalorder 2, %s9
    // Predicated region
    $region37: #{transformer_forward.38} parent=5 // pred_check
      %p682 = pneg %p681
    $region38: #{transformer_forward.38} parent=5 // pred_check_branch
      %684 = sbr.rel (%p682) target = $region40
    $region39: #{transformer_forward.38} parent=5 // pred_region
      %s685 = ssub.s32 %s9, 2
      // Predicated region
      $region41: #{transformer_forward.38} parent=39 // pred_check
        %p686 = pneg %p116
      $region42: #{transformer_forward.38} parent=39 // pred_check_branch
        %688 = sbr.rel (%p686) target = $region44
      $region43: #{transformer_forward.38} parent=39 // pred_region
        %p689 = scmp.lt.s32.totalorder %s15, 1
        %s690 = scalar_select %p689, %s15, 1
        %s691 = smul.addr %s690, 8
        %s692 = scalar_lea.vmem %s3, %s691
      $region44: #{transformer_forward.38} parent=39 // pred_fallthru
        _
    $region40: #{transformer_forward.38} parent=5 // pred_fallthru
      _
  $region6: #{transformer_forward.38} parent=0 // loop_footer
    %s13 = sadd.s32 1, %s9
  $region7: #{transformer_forward.38} parent=0 // loop_footer_branch
    %8 = sbr.rel target = $region3
  $region8: #{transformer_forward.38} parent=0 // loop_exit
    _

</llo_original>
